<compile_context>
chip_gen: v7x
topology: tpu7x:2x2x1
jax: 0.10.0
libtpu: 0.0.40
codegen_flags: <defaults>
</compile_context>

<pallas_src>
import math

import jax
import jax.numpy as jnp
from jax import lax
from jax.experimental import pallas as pl
from jax.experimental.pallas import tpu as pltpu


# ------------------------------- the kernel ---------------------------------

def make_itransformer_kernel(n_heads, bb, n_vars):
    H = n_heads

    def kernel(x_ref, we_ref, vg_ref, wp_ref,
               wqkvo_ref, wf1_ref, wf2_ref, vl_ref, vf_ref,
               out_ref, acts_ref):
        l = pl.program_id(1)                     # encoder-layer grid axis
        R, D = acts_ref.shape                    # R = bb * n_vars
        E = D // H

        def mm(a, w):                            # MXU matmul, f32 accumulation
            return jnp.dot(a.astype(w.dtype), w,
                           preferred_element_type=jnp.float32)

        def ln(x, g, b, eps=1e-5):               # LayerNorm (f32, VPU/EUP)
            mu = jnp.mean(x, axis=-1, keepdims=True)
            xc = x - mu
            var = jnp.mean(xc * xc, axis=-1, keepdims=True)
            return xc * lax.rsqrt(var + eps) * g + b

        def softmax(s):
            s = s - jnp.max(s, axis=-1, keepdims=True)
            e = jnp.exp(s)
            return e * pl.reciprocal(jnp.sum(e, axis=-1, keepdims=True),
                                     approx=True)

        # ---- DataEmbedding_inverted: only on the first layer step ----
        @pl.when(l == 0)
        def _():
            acts_ref[...] = mm(x_ref[...], we_ref[...]) + vg_ref[0:1]

        acts = acts_ref[...]                     # (R, D) residual stream, f32

        # ---- this layer's weights (streamed by the l grid axis) ----
        Wq = wqkvo_ref[0]
        Wk = wqkvo_ref[1]
        Wv = wqkvo_ref[2]
        Wo = wqkvo_ref[3]
        bq = vl_ref[0:1]; bk = vl_ref[1:2]; bv = vl_ref[2:3]; bo = vl_ref[3:4]
        g1 = vl_ref[4:5]; b1 = vl_ref[5:6]
        bf2 = vl_ref[6:7]
        g2 = vl_ref[7:8]; b2 = vl_ref[8:9]
        bf1 = vf_ref[...]

        # ---- multi-head self-attention over the variate axis ----
        q = mm(acts, Wq) + bq                    # Wq/bq pre-scaled by 1/sqrt(E)
        k = mm(acts, Wk) + bk
        v = mm(acts, Wv) + bv
        q3 = q.reshape(bb, n_vars, D)
        k3 = k.reshape(bb, n_vars, D)
        v3 = v.reshape(bb, n_vars, D)

        if E % 128 == 0:
            # Realistic head sizes: aligned lane slices are free views and the
            # per-head contraction does no redundant MXU work.  The head
            # "concat" is folded into the output projection (row-slices of Wo).
            proj = jnp.zeros((R, D), jnp.float32)
            for h in range(H):
                sl = slice(h * E, (h + 1) * E)
                s = jnp.einsum('bne,bme->bnm', q3[..., sl], k3[..., sl],
                               preferred_element_type=jnp.float32)
                p = softmax(s)
                oh = jnp.einsum('bnm,bme->bne', p, v3[..., sl],
                                preferred_element_type=jnp.float32)
                proj = proj + mm(oh.reshape(R, E), Wo[sl, :])
            attn = proj + bo
        else:
            # Small heads (E < 128): isolate head lanes with a VPU mask on the
            # contracted q lanes (k is shared and unmasked) and on v so each
            # head's output lands in its own lane range; the per-head outputs
            # sum instead of concatenating.  Score contraction uses the
            # flash-style contracted-last-dim pattern (no explicit transpose).
            col = lax.broadcasted_iota(jnp.int32, (1, 1, D), 2)
            ov = jnp.zeros((bb, n_vars, D), jnp.float32)
            for h in range(H):
                m = ((col >= h * E) & (col < (h + 1) * E)).astype(jnp.float32)
                s = jnp.einsum('bnd,bmd->bnm', q3 * m, k3,
                               preferred_element_type=jnp.float32)
                p = softmax(s)
                ov = ov + jnp.einsum('bnm,bmd->bnd', p, v3 * m,
                                     preferred_element_type=jnp.float32)
            attn = mm(ov.reshape(R, D), Wo) + bo

        # ---- EncoderLayer: residual + norm1, FFN (1x1 convs) + norm2 ----
        acts = ln(acts + attn, g1, b1)
        y = jnp.maximum(mm(acts, wf1_ref[...]) + bf1, 0.0)
        y = mm(y, wf2_ref[...]) + bf2
        acts = ln(acts + y, g2, b2)
        acts_ref[...] = acts

        # ---- Encoder final norm + projector: only on the last layer step ----
        @pl.when(l == pl.num_programs(1) - 1)
        def _():
            a = ln(acts, vg_ref[1:2], vg_ref[2:3])
            wp = wp_ref[...]
            Dp = wp.shape[0] - 1
            out = mm(a, wp[:Dp]) + wp[Dp:Dp + 1]
            out_ref[...] = out.astype(out_ref.dtype)   # single lane-dense store

    return kernel


# ------------------------------ wrapper (glue) -------------------------------

def _batch_grid_steps(batch, n_vars):
    # v7x has 2 TensorCores/chip: use a 2-wide "parallel" batch grid there.
    # Single-TC chips (v5e/v6e): fold the whole batch into one batch step.
    try:
        kind = (jax.devices()[0].device_kind or "").lower()
    except Exception:
        kind = ""
    cores = 2 if "v7" in kind else 1
    steps = max(1, min(batch, cores))
    # keep blocks sublane-aligned: B % steps == 0 and (B//steps)*N % 8 == 0
    while steps > 1 and (batch % steps or ((batch // steps) * n_vars) % 8):
        steps -= 1
    return steps


def itransformer_forward(x_enc, params, *, n_heads, mxu_dtype=jnp.float32):
    B, L, N = x_enc.shape
    D = params["We"].shape[1]
    P = params["Wp"].shape[1]
    F = params["layers"][0]["Wf1"].shape[1]
    nl = len(params["layers"])
    E = D // n_heads
    scale = 1.0 / math.sqrt(E)        # FullAttention scale=None -> 1/sqrt(E)

    # ---- pack parameters into a few contiguous slabs ----
    # Matmul weights in mxu_dtype (bf16 recommended on v6e/v7x); biases and
    # LayerNorm affine params stay f32 (elementwise math stays f32 everywhere).
    wdt = mxu_dtype
    we = params["We"].astype(wdt)                                      # (L, D)
    wqkvo = jnp.stack(
        [jnp.stack([lp["Wq"] * scale, lp["Wk"], lp["Wv"], lp["Wo"]], axis=0)
         for lp in params["layers"]], axis=0).astype(wdt)              # (nl,4,D,D)
    wf1 = jnp.stack([lp["Wf1"] for lp in params["layers"]], 0).astype(wdt)   # (nl,D,F)
    wf2 = jnp.stack([lp["Wf2"] for lp in params["layers"]], 0).astype(wdt)   # (nl,F,D)
    vl = jnp.stack(
        [jnp.concatenate([lp["bq"] * scale, lp["bk"], lp["bv"], lp["bo"],
                          lp["g1"], lp["b1"], lp["bf2"], lp["g2"], lp["b2"]],
                         axis=0)
         for lp in params["layers"]], axis=0).astype(jnp.float32)      # (nl,9,D)
    vf = jnp.stack([lp["bf1"] for lp in params["layers"]], 0
                   ).astype(jnp.float32)                               # (nl,1,F)
    vg = jnp.concatenate([params["be"], params["gF"], params["bF"]],
                         axis=0).astype(jnp.float32)                   # (3, D)
    wp = jnp.concatenate([params["Wp"], params["bp"]], axis=0
                         ).astype(jnp.float32)                         # (D+1, P)

    # x host-side: (B, L, N) -> (B*N, L)  (variate-major rows, lane-dense L);
    # the XLA-side transpose folds into the input layout for free.
    x2 = jnp.transpose(x_enc, (0, 2, 1)).reshape(B * N, L).astype(jnp.float32)

    steps = _batch_grid_steps(B, N)
    BB = B // steps
    R = BB * N

    in_specs = [
        pl.BlockSpec((R, L), lambda i, l: (i, 0)),                   # x rows
        pl.BlockSpec((L, D), lambda i, l: (0, 0)),                   # We
        pl.BlockSpec((3, D), lambda i, l: (0, 0)),                   # be/gF/bF
        pl.BlockSpec((D + 1, P), lambda i, l: (0, 0)),               # [Wp; bp]
        pl.BlockSpec((None, 4, D, D), lambda i, l: (l, 0, 0, 0)),    # Wq/Wk/Wv/Wo (per layer)
        pl.BlockSpec((None, D, F), lambda i, l: (l, 0, 0)),          # Wf1 (per layer)
        pl.BlockSpec((None, F, D), lambda i, l: (l, 0, 0)),          # Wf2 (per layer)
        pl.BlockSpec((None, 9, D), lambda i, l: (l, 0, 0)),          # biases/LN (per layer)
        pl.BlockSpec((None, 1, F), lambda i, l: (l, 0, 0)),          # bf1 (per layer)
    ]

    # Explicit VMEM budget: ~2 layers of streamed weights (double buffer) +
    # resident slabs + headroom, clamped to stay well inside v7x's 64 MiB/TC.
    def _nbytes(a):
        return int(a.size) * a.dtype.itemsize
    per_layer = sum(map(_nbytes, (wqkvo, wf1, wf2, vl, vf))) // max(nl, 1)
    resident = sum(map(_nbytes, (we, vg, wp))) + _nbytes(x2) + 4 * B * N * (P + D)
    vmem_limit = int(min(max(4 * per_layer + 2 * resident + (16 << 20), 32 << 20),
                         100 << 20))

    out = pl.pallas_call(
        make_itransformer_kernel(n_heads, BB, N),
        out_shape=jax.ShapeDtypeStruct((B * N, P), jnp.float32),
        grid=(steps, nl),
        in_specs=in_specs,
        out_specs=pl.BlockSpec((R, P), lambda i, l: (i, 0)),
        scratch_shapes=[pltpu.VMEM((R, D), jnp.float32)],            # residual stream
        compiler_params=pltpu.CompilerParams(
            dimension_semantics=("parallel", "arbitrary"),
            vmem_limit_bytes=vmem_limit),
    )(x2, we, vg, wp, wqkvo, wf1, wf2, vl, vf)

    dec_out = jnp.transpose(out.reshape(B, N, P), (0, 2, 1))   # (B, pred_len, N)
    attns = None                                               # output_attention=False
    return dec_out, attns


# ------------------------- deterministic param init --------------------------

def init_params(key, seq_len, pred_len, d_model, d_ff, num_layers):
    def dense(k, fan_in, fan_out):
        kw, kb = jax.random.split(k)
        bound = 1.0 / math.sqrt(fan_in)
        W = jax.random.uniform(kw, (fan_in, fan_out), jnp.float32, -bound, bound)
        b = jax.random.uniform(kb, (1, fan_out), jnp.float32, -bound, bound)
        return W, b

    keys = jax.random.split(key, 2 + num_layers)
    We, be = dense(keys[0], seq_len, d_model)
    layers = []
    for i in range(num_layers):
        lk = jax.random.split(keys[1 + i], 6)
        Wq, bq = dense(lk[0], d_model, d_model)
        Wk, bk = dense(lk[1], d_model, d_model)
        Wv, bv = dense(lk[2], d_model, d_model)
        Wo, bo = dense(lk[3], d_model, d_model)
        Wf1, bf1 = dense(lk[4], d_model, d_ff)
        Wf2, bf2 = dense(lk[5], d_ff, d_model)
        layers.append(dict(
            Wq=Wq, bq=bq, Wk=Wk, bk=bk, Wv=Wv, bv=bv, Wo=Wo, bo=bo,
            g1=jnp.ones((1, d_model), jnp.float32),
            b1=jnp.zeros((1, d_model), jnp.float32),
            Wf1=Wf1, bf1=bf1, Wf2=Wf2, bf2=bf2,
            g2=jnp.ones((1, d_model), jnp.float32),
            b2=jnp.zeros((1, d_model), jnp.float32)))
    Wp, bp = dense(keys[-1], d_model, pred_len)
    return dict(We=We, be=be, layers=layers,
                gF=jnp.ones((1, d_model), jnp.float32),
                bF=jnp.zeros((1, d_model), jnp.float32),
                Wp=Wp, bp=bp)


# --------------------------- pure-JAX reference ------------------------------

def reference_forward(x_enc, params, n_heads):
    B, L, N = x_enc.shape
    D = params["We"].shape[1]
    E = D // n_heads

    def ln(x, g, b, eps=1e-5):
        mu = jnp.mean(x, axis=-1, keepdims=True)
        var = jnp.mean((x - mu) ** 2, axis=-1, keepdims=True)
        return (x - mu) / jnp.sqrt(var + eps) * g + b

    h = jnp.einsum("bln,ld->bnd", x_enc, params["We"]) + params["be"]
    for lp in params["layers"]:
        q = (h @ lp["Wq"] + lp["bq"]).reshape(B, N, n_heads, E)
        k = (h @ lp["Wk"] + lp["bk"]).reshape(B, N, n_heads, E)
        v = (h @ lp["Wv"] + lp["bv"]).reshape(B, N, n_heads, E)
        s = jnp.einsum("bnhe,bmhe->bhnm", q, k) / math.sqrt(E)
        a = jax.nn.softmax(s, axis=-1)
        o = jnp.einsum("bhnm,bmhe->bnhe", a, v).reshape(B, N, D)
        o = o @ lp["Wo"] + lp["bo"]
        h = ln(h + o, lp["g1"], lp["b1"])
        y = jax.nn.relu(h @ lp["Wf1"] + lp["bf1"]) @ lp["Wf2"] + lp["bf2"]
        h = ln(h + y, lp["g2"], lp["b2"])
    h = ln(h, params["gF"], params["bF"])
    dec = h @ params["Wp"] + params["bp"]
    return jnp.transpose(dec, (0, 2, 1))


# ----------------------------------- main ------------------------------------

if __name__ == "__main__":
    # configs: seq_len=16, pred_len=8, d_model=32, n_heads=4, d_ff=64,
    #          enc_layers=2, attn_dropout=0.0, output_attention=False
    B, L, N = 2, 16, 8
    pred_len, d_model, n_heads, d_ff, enc_layers = 8, 32, 4, 64, 2

    key = jax.random.PRNGKey(0)
    k_x, k_p = jax.random.split(key)
    x_enc = jax.random.normal(k_x, (B, L, N), jnp.float32)
    params = init_params(k_p, L, pred_len, d_model, d_ff, enc_layers)

    # f32 weights: strict parity with the PyTorch/JAX reference.
    dec_out, attns = itransformer_forward(x_enc, params, n_heads=n_heads)
    dec_out = jax.block_until_ready(dec_out)

    ref = jax.block_until_ready(reference_forward(x_enc, params, n_heads))
    assert dec_out.shape == (B, pred_len, N), dec_out.shape
    assert jnp.allclose(dec_out, ref, rtol=2e-2, atol=2e-2), (
        float(jnp.max(jnp.abs(dec_out - ref))))

    # bf16 matmul-weight path (recommended on v6e/v7x at realistic sizes):
    # MXU operands bf16, accumulation / biases / LayerNorm / softmax stay f32.
    dec_bf16, _ = itransformer_forward(x_enc, params, n_heads=n_heads,
                                       mxu_dtype=jnp.bfloat16)
    dec_bf16 = jax.block_until_ready(dec_bf16)
    assert dec_bf16.shape == (B, pred_len, N)
    assert bool(jnp.isfinite(dec_bf16).all())
    assert float(jnp.max(jnp.abs(dec_bf16 - ref))) < 0.25

    print("KERNEL_OK")
</pallas_src>

<mosaic_0001>
module attributes {stable_mosaic.version = 11 : i64} {
  func.func @kernel(%arg0: i32, %arg1: i32, %arg2: memref<16x16xf32, #tpu.memory_space<vmem>>, %arg3: memref<16x32xf32, #tpu.memory_space<vmem>>, %arg4: memref<3x32xf32, #tpu.memory_space<vmem>>, %arg5: memref<33x8xf32, #tpu.memory_space<vmem>>, %arg6: memref<1x4x32x32xf32, #tpu.memory_space<vmem>>, %arg7: memref<1x32x64xf32, #tpu.memory_space<vmem>>, %arg8: memref<1x64x32xf32, #tpu.memory_space<vmem>>, %arg9: memref<1x9x32xf32, #tpu.memory_space<vmem>>, %arg10: memref<1x1x64xf32, #tpu.memory_space<vmem>>, %arg11: memref<16x8xf32, #tpu.memory_space<vmem>>, %arg12: memref<16x32xf32, #tpu.memory_space<vmem>>) attributes {dimension_semantics = [#tpu.dimension_semantics<parallel>, #tpu.dimension_semantics<arbitrary>], iteration_bounds = array<i64: 1, 2>, scalar_prefetch = 0 : i64, scratch_operands = 1 : i64, tpu.core_type = #tpu.core_type<tc>, window_params = [{transform_indices = @transform_0, window_bounds = array<i64: 16, 16>}, {pipeline_mode = #tpu.pipeline_mode<synchronous>, transform_indices = @transform_1, window_bounds = array<i64: 16, 32>}, {pipeline_mode = #tpu.pipeline_mode<synchronous>, transform_indices = @transform_2, window_bounds = array<i64: 3, 32>}, {pipeline_mode = #tpu.pipeline_mode<synchronous>, transform_indices = @transform_3, window_bounds = array<i64: 33, 8>}, {transform_indices = @transform_4, window_bounds = array<i64: 1, 4, 32, 32>}, {transform_indices = @transform_5, window_bounds = array<i64: 1, 32, 64>}, {transform_indices = @transform_6, window_bounds = array<i64: 1, 64, 32>}, {transform_indices = @transform_7, window_bounds = array<i64: 1, 9, 32>}, {transform_indices = @transform_8, window_bounds = array<i64: 1, 1, 64>}, {transform_indices = @transform_9, window_bounds = array<i64: 16, 8>}]} {
    %c0_i32 = arith.constant 0 : i32
    %0 = arith.cmpi eq, %arg1, %c0_i32 : i32
    %1 = arith.extui %0 : i1 to i32
    %c0_i32_0 = arith.constant 0 : i32
    %2 = arith.cmpi ne, %1, %c0_i32_0 : i32
    scf.if %2 {
      %c0_86 = arith.constant 0 : index
      %c0_87 = arith.constant 0 : index
      %204 = vector.load %arg2[%c0_86, %c0_87] : memref<16x16xf32, #tpu.memory_space<vmem>>, vector<16x16xf32>
      %c0_88 = arith.constant 0 : index
      %c0_89 = arith.constant 0 : index
      %205 = vector.load %arg3[%c0_88, %c0_89] : memref<16x32xf32, #tpu.memory_space<vmem>>, vector<16x32xf32>
      %cst_90 = arith.constant dense<0.000000e+00> : vector<16x32xf32>
      %206 = tpu.matmul %204, %205, %cst_90 {dimension_numbers = #tpu.dot_dimension_numbers<[1], [0], [0], [1], [0, 0, 1, 1], [], []>} : vector<16x16xf32>, vector<16x32xf32>, vector<16x32xf32> -> vector<16x32xf32>
      %c0_91 = arith.constant 0 : index
      %c0_92 = arith.constant 0 : index
      %207 = vector.load %arg4[%c0_91, %c0_92] : memref<3x32xf32, #tpu.memory_space<vmem>>, vector<1x32xf32>
      %208 = vector.broadcast %207 : vector<1x32xf32> to vector<16x32xf32>
      %209 = arith.addf %206, %208 : vector<16x32xf32>
      %c0_93 = arith.constant 0 : index
      %c0_94 = arith.constant 0 : index
      %210 = vector.load %arg12[%c0_93, %c0_94] : memref<16x32xf32, #tpu.memory_space<vmem>>, vector<16x32xf32>
      tpu.vector_store %arg12[%c0_93, %c0_94], %209 {strides = array<i32>} : memref<16x32xf32, #tpu.memory_space<vmem>>, vector<16x32xf32>,
    } else {
    }
    %c0 = arith.constant 0 : index
    %c0_1 = arith.constant 0 : index
    %3 = vector.load %arg12[%c0, %c0_1] : memref<16x32xf32, #tpu.memory_space<vmem>>, vector<16x32xf32>
    %c0_2 = arith.constant 0 : index
    %c0_3 = arith.constant 0 : index
    %c0_4 = arith.constant 0 : index
    %c0_5 = arith.constant 0 : index
    %4 = vector.load %arg6[%c0_2, %c0_3, %c0_4, %c0_5] : memref<1x4x32x32xf32, #tpu.memory_space<vmem>>, vector<1x1x32x32xf32>
    %5 = vector.shape_cast %4 : vector<1x1x32x32xf32> to vector<32x32xf32>
    %c0_6 = arith.constant 0 : index
    %c1 = arith.constant 1 : index
    %c0_7 = arith.constant 0 : index
    %c0_8 = arith.constant 0 : index
    %6 = vector.load %arg6[%c0_6, %c1, %c0_7, %c0_8] : memref<1x4x32x32xf32, #tpu.memory_space<vmem>>, vector<1x1x32x32xf32>
    %7 = vector.shape_cast %6 : vector<1x1x32x32xf32> to vector<32x32xf32>
    %c0_9 = arith.constant 0 : index
    %c2 = arith.constant 2 : index
    %c0_10 = arith.constant 0 : index
    %c0_11 = arith.constant 0 : index
    %8 = vector.load %arg6[%c0_9, %c2, %c0_10, %c0_11] : memref<1x4x32x32xf32, #tpu.memory_space<vmem>>, vector<1x1x32x32xf32>
    %9 = vector.shape_cast %8 : vector<1x1x32x32xf32> to vector<32x32xf32>
    %c0_12 = arith.constant 0 : index
    %c3 = arith.constant 3 : index
    %c0_13 = arith.constant 0 : index
    %c0_14 = arith.constant 0 : index
    %10 = vector.load %arg6[%c0_12, %c3, %c0_13, %c0_14] : memref<1x4x32x32xf32, #tpu.memory_space<vmem>>, vector<1x1x32x32xf32>
    %11 = vector.shape_cast %10 : vector<1x1x32x32xf32> to vector<32x32xf32>
    %c0_15 = arith.constant 0 : index
    %c0_16 = arith.constant 0 : index
    %c0_17 = arith.constant 0 : index
    %12 = vector.load %arg9[%c0_15, %c0_16, %c0_17] : memref<1x9x32xf32, #tpu.memory_space<vmem>>, vector<1x1x32xf32>
    %13 = vector.shape_cast %12 : vector<1x1x32xf32> to vector<1x32xf32>
    %c0_18 = arith.constant 0 : index
    %c1_19 = arith.constant 1 : index
    %c0_20 = arith.constant 0 : index
    %14 = vector.load %arg9[%c0_18, %c1_19, %c0_20] : memref<1x9x32xf32, #tpu.memory_space<vmem>>, vector<1x1x32xf32>
    %15 = vector.shape_cast %14 : vector<1x1x32xf32> to vector<1x32xf32>
    %c0_21 = arith.constant 0 : index
    %c2_22 = arith.constant 2 : index
    %c0_23 = arith.constant 0 : index
    %16 = vector.load %arg9[%c0_21, %c2_22, %c0_23] : memref<1x9x32xf32, #tpu.memory_space<vmem>>, vector<1x1x32xf32>
    %17 = vector.shape_cast %16 : vector<1x1x32xf32> to vector<1x32xf32>
    %c0_24 = arith.constant 0 : index
    %c3_25 = arith.constant 3 : index
    %c0_26 = arith.constant 0 : index
    %18 = vector.load %arg9[%c0_24, %c3_25, %c0_26] : memref<1x9x32xf32, #tpu.memory_space<vmem>>, vector<1x1x32xf32>
    %19 = vector.shape_cast %18 : vector<1x1x32xf32> to vector<1x32xf32>
    %c0_27 = arith.constant 0 : index
    %c4 = arith.constant 4 : index
    %c0_28 = arith.constant 0 : index
    %20 = vector.load %arg9[%c0_27, %c4, %c0_28] : memref<1x9x32xf32, #tpu.memory_space<vmem>>, vector<1x1x32xf32>
    %21 = vector.shape_cast %20 : vector<1x1x32xf32> to vector<1x32xf32>
    %c0_29 = arith.constant 0 : index
    %c5 = arith.constant 5 : index
    %c0_30 = arith.constant 0 : index
    %22 = vector.load %arg9[%c0_29, %c5, %c0_30] : memref<1x9x32xf32, #tpu.memory_space<vmem>>, vector<1x1x32xf32>
    %23 = vector.shape_cast %22 : vector<1x1x32xf32> to vector<1x32xf32>
    %c0_31 = arith.constant 0 : index
    %c6 = arith.constant 6 : index
    %c0_32 = arith.constant 0 : index
    %24 = vector.load %arg9[%c0_31, %c6, %c0_32] : memref<1x9x32xf32, #tpu.memory_space<vmem>>, vector<1x1x32xf32>
    %25 = vector.shape_cast %24 : vector<1x1x32xf32> to vector<1x32xf32>
    %c0_33 = arith.constant 0 : index
    %c7 = arith.constant 7 : index
    %c0_34 = arith.constant 0 : index
    %26 = vector.load %arg9[%c0_33, %c7, %c0_34] : memref<1x9x32xf32, #tpu.memory_space<vmem>>, vector<1x1x32xf32>
    %27 = vector.shape_cast %26 : vector<1x1x32xf32> to vector<1x32xf32>
    %c0_35 = arith.constant 0 : index
    %c8 = arith.constant 8 : index
    %c0_36 = arith.constant 0 : index
    %28 = vector.load %arg9[%c0_35, %c8, %c0_36] : memref<1x9x32xf32, #tpu.memory_space<vmem>>, vector<1x1x32xf32>
    %29 = vector.shape_cast %28 : vector<1x1x32xf32> to vector<1x32xf32>
    %c0_37 = arith.constant 0 : index
    %c0_38 = arith.constant 0 : index
    %c0_39 = arith.constant 0 : index
    %30 = vector.load %arg10[%c0_37, %c0_38, %c0_39] : memref<1x1x64xf32, #tpu.memory_space<vmem>>, vector<1x1x64xf32>
    %31 = vector.shape_cast %30 : vector<1x1x64xf32> to vector<1x64xf32>
    %cst = arith.constant dense<0.000000e+00> : vector<16x32xf32>
    %32 = tpu.matmul %3, %5, %cst {dimension_numbers = #tpu.dot_dimension_numbers<[1], [0], [0], [1], [0, 0, 1, 1], [], []>} : vector<16x32xf32>, vector<32x32xf32>, vector<16x32xf32> -> vector<16x32xf32>
    %33 = vector.broadcast %13 : vector<1x32xf32> to vector<16x32xf32>
    %34 = arith.addf %32, %33 : vector<16x32xf32>
    %cst_40 = arith.constant dense<0.000000e+00> : vector<16x32xf32>
    %35 = tpu.matmul %3, %7, %cst_40 {dimension_numbers = #tpu.dot_dimension_numbers<[1], [0], [0], [1], [0, 0, 1, 1], [], []>} : vector<16x32xf32>, vector<32x32xf32>, vector<16x32xf32> -> vector<16x32xf32>
    %36 = vector.broadcast %15 : vector<1x32xf32> to vector<16x32xf32>
    %37 = arith.addf %35, %36 : vector<16x32xf32>
    %cst_41 = arith.constant dense<0.000000e+00> : vector<16x32xf32>
    %38 = tpu.matmul %3, %9, %cst_41 {dimension_numbers = #tpu.dot_dimension_numbers<[1], [0], [0], [1], [0, 0, 1, 1], [], []>} : vector<16x32xf32>, vector<32x32xf32>, vector<16x32xf32> -> vector<16x32xf32>
    %39 = vector.broadcast %17 : vector<1x32xf32> to vector<16x32xf32>
    %40 = arith.addf %38, %39 : vector<16x32xf32>
    %41 = vector.shape_cast %34 : vector<16x32xf32> to vector<2x8x32xf32>
    %42 = vector.shape_cast %37 : vector<16x32xf32> to vector<2x8x32xf32>
    %43 = vector.shape_cast %40 : vector<16x32xf32> to vector<2x8x32xf32>
    %44 = tpu.iota {dimensions = array<i32: 2>} : vector<1x1x32xi32>
    %cst_42 = arith.constant 0.000000e+00 : f32
    %45 = vector.broadcast %cst_42 : f32 to vector<2x8x32xf32>
    %c0_i32_43 = arith.constant 0 : i32
    %46 = vector.broadcast %c0_i32_43 : i32 to vector<1x1x32xi32>
    %47 = arith.cmpi sge, %44, %46 : vector<1x1x32xi32>
    %c8_i32 = arith.constant 8 : i32
    %48 = vector.broadcast %c8_i32 : i32 to vector<1x1x32xi32>
    %49 = arith.cmpi slt, %44, %48 : vector<1x1x32xi32>
    %50 = arith.andi %47, %49 : vector<1x1x32xi1>
    %51 = arith.extui %50 : vector<1x1x32xi1> to vector<1x1x32xi32>
    %52 = arith.sitofp %51 : vector<1x1x32xi32> to vector<1x1x32xf32>
    %53 = vector.broadcast %52 : vector<1x1x32xf32> to vector<2x8x32xf32>
    %54 = arith.mulf %41, %53 : vector<2x8x32xf32>
    "tpu.trace_start"() <{level = 10 : i32, message = "bnd,bmd->bnm"}> : () -> ()
    %cst_44 = arith.constant dense<0.000000e+00> : vector<2x8x8xf32>
    %55 = tpu.matmul %54, %42, %cst_44 {dimension_numbers = #tpu.dot_dimension_numbers<[2], [2], [1], [1], [0, 0, 0, 1, 1, 1], [0], [0]>} : vector<2x8x32xf32>, vector<2x8x32xf32>, vector<2x8x8xf32> -> vector<2x8x8xf32>
    "tpu.trace_stop"() : () -> ()
    %cst_45 = arith.constant dense<0xFF800000> : vector<2x8xf32>
    %56 = vector.multi_reduction <maximumf>, %55, %cst_45 [2] : vector<2x8x8xf32> to vector<2x8xf32>
    %57 = vector.shape_cast %56 : vector<2x8xf32> to vector<2x8x1xf32>
    %58 = vector.broadcast %57 : vector<2x8x1xf32> to vector<2x8x8xf32>
    %59 = arith.subf %55, %58 : vector<2x8x8xf32>
    %60 = math.exp %59 : vector<2x8x8xf32>
    %cst_46 = arith.constant dense<0.000000e+00> : vector<2x8xf32>
    %61 = vector.multi_reduction <add>, %60, %cst_46 [2] : vector<2x8x8xf32> to vector<2x8xf32>
    %62 = vector.shape_cast %61 : vector<2x8xf32> to vector<2x8x1xf32>
    %63 = tpu.reciprocal %62 {approx = true} : vector<2x8x1xf32> -> vector<2x8x1xf32>
    %64 = vector.broadcast %63 : vector<2x8x1xf32> to vector<2x8x8xf32>
    %65 = arith.mulf %60, %64 : vector<2x8x8xf32>
    %66 = vector.broadcast %52 : vector<1x1x32xf32> to vector<2x8x32xf32>
    %67 = arith.mulf %43, %66 : vector<2x8x32xf32>
    "tpu.trace_start"() <{level = 10 : i32, message = "bnm,bmd->bnd"}> : () -> ()
    %cst_47 = arith.constant dense<0.000000e+00> : vector<2x8x32xf32>
    %68 = tpu.matmul %65, %67, %cst_47 {dimension_numbers = #tpu.dot_dimension_numbers<[2], [1], [1], [2], [0, 0, 0, 1, 1, 2], [0], [0]>} : vector<2x8x8xf32>, vector<2x8x32xf32>, vector<2x8x32xf32> -> vector<2x8x32xf32>
    "tpu.trace_stop"() : () -> ()
    %69 = arith.addf %45, %68 : vector<2x8x32xf32>
    %c8_i32_48 = arith.constant 8 : i32
    %70 = vector.broadcast %c8_i32_48 : i32 to vector<1x1x32xi32>
    %71 = arith.cmpi sge, %44, %70 : vector<1x1x32xi32>
    %c16_i32 = arith.constant 16 : i32
    %72 = vector.broadcast %c16_i32 : i32 to vector<1x1x32xi32>
    %73 = arith.cmpi slt, %44, %72 : vector<1x1x32xi32>
    %74 = arith.andi %71, %73 : vector<1x1x32xi1>
    %75 = arith.extui %74 : vector<1x1x32xi1> to vector<1x1x32xi32>
    %76 = arith.sitofp %75 : vector<1x1x32xi32> to vector<1x1x32xf32>
    %77 = vector.broadcast %76 : vector<1x1x32xf32> to vector<2x8x32xf32>
    %78 = arith.mulf %41, %77 : vector<2x8x32xf32>
    "tpu.trace_start"() <{level = 10 : i32, message = "bnd,bmd->bnm"}> : () -> ()
    %cst_49 = arith.constant dense<0.000000e+00> : vector<2x8x8xf32>
    %79 = tpu.matmul %78, %42, %cst_49 {dimension_numbers = #tpu.dot_dimension_numbers<[2], [2], [1], [1], [0, 0, 0, 1, 1, 1], [0], [0]>} : vector<2x8x32xf32>, vector<2x8x32xf32>, vector<2x8x8xf32> -> vector<2x8x8xf32>
    "tpu.trace_stop"() : () -> ()
    %cst_50 = arith.constant dense<0xFF800000> : vector<2x8xf32>
    %80 = vector.multi_reduction <maximumf>, %79, %cst_50 [2] : vector<2x8x8xf32> to vector<2x8xf32>
    %81 = vector.shape_cast %80 : vector<2x8xf32> to vector<2x8x1xf32>
    %82 = vector.broadcast %81 : vector<2x8x1xf32> to vector<2x8x8xf32>
    %83 = arith.subf %79, %82 : vector<2x8x8xf32>
    %84 = math.exp %83 : vector<2x8x8xf32>
    %cst_51 = arith.constant dense<0.000000e+00> : vector<2x8xf32>
    %85 = vector.multi_reduction <add>, %84, %cst_51 [2] : vector<2x8x8xf32> to vector<2x8xf32>
    %86 = vector.shape_cast %85 : vector<2x8xf32> to vector<2x8x1xf32>
    %87 = tpu.reciprocal %86 {approx = true} : vector<2x8x1xf32> -> vector<2x8x1xf32>
    %88 = vector.broadcast %87 : vector<2x8x1xf32> to vector<2x8x8xf32>
    %89 = arith.mulf %84, %88 : vector<2x8x8xf32>
    %90 = vector.broadcast %76 : vector<1x1x32xf32> to vector<2x8x32xf32>
    %91 = arith.mulf %43, %90 : vector<2x8x32xf32>
    "tpu.trace_start"() <{level = 10 : i32, message = "bnm,bmd->bnd"}> : () -> ()
    %cst_52 = arith.constant dense<0.000000e+00> : vector<2x8x32xf32>
    %92 = tpu.matmul %89, %91, %cst_52 {dimension_numbers = #tpu.dot_dimension_numbers<[2], [1], [1], [2], [0, 0, 0, 1, 1, 2], [0], [0]>} : vector<2x8x8xf32>, vector<2x8x32xf32>, vector<2x8x32xf32> -> vector<2x8x32xf32>
    "tpu.trace_stop"() : () -> ()
    %93 = arith.addf %69, %92 : vector<2x8x32xf32>
    %c16_i32_53 = arith.constant 16 : i32
    %94 = vector.broadcast %c16_i32_53 : i32 to vector<1x1x32xi32>
    %95 = arith.cmpi sge, %44, %94 : vector<1x1x32xi32>
    %c24_i32 = arith.constant 24 : i32
    %96 = vector.broadcast %c24_i32 : i32 to vector<1x1x32xi32>
    %97 = arith.cmpi slt, %44, %96 : vector<1x1x32xi32>
    %98 = arith.andi %95, %97 : vector<1x1x32xi1>
    %99 = arith.extui %98 : vector<1x1x32xi1> to vector<1x1x32xi32>
    %100 = arith.sitofp %99 : vector<1x1x32xi32> to vector<1x1x32xf32>
    %101 = vector.broadcast %100 : vector<1x1x32xf32> to vector<2x8x32xf32>
    %102 = arith.mulf %41, %101 : vector<2x8x32xf32>
    "tpu.trace_start"() <{level = 10 : i32, message = "bnd,bmd->bnm"}> : () -> ()
    %cst_54 = arith.constant dense<0.000000e+00> : vector<2x8x8xf32>
    %103 = tpu.matmul %102, %42, %cst_54 {dimension_numbers = #tpu.dot_dimension_numbers<[2], [2], [1], [1], [0, 0, 0, 1, 1, 1], [0], [0]>} : vector<2x8x32xf32>, vector<2x8x32xf32>, vector<2x8x8xf32> -> vector<2x8x8xf32>
    "tpu.trace_stop"() : () -> ()
    %cst_55 = arith.constant dense<0xFF800000> : vector<2x8xf32>
    %104 = vector.multi_reduction <maximumf>, %103, %cst_55 [2] : vector<2x8x8xf32> to vector<2x8xf32>
    %105 = vector.shape_cast %104 : vector<2x8xf32> to vector<2x8x1xf32>
    %106 = vector.broadcast %105 : vector<2x8x1xf32> to vector<2x8x8xf32>
    %107 = arith.subf %103, %106 : vector<2x8x8xf32>
    %108 = math.exp %107 : vector<2x8x8xf32>
    %cst_56 = arith.constant dense<0.000000e+00> : vector<2x8xf32>
    %109 = vector.multi_reduction <add>, %108, %cst_56 [2] : vector<2x8x8xf32> to vector<2x8xf32>
    %110 = vector.shape_cast %109 : vector<2x8xf32> to vector<2x8x1xf32>
    %111 = tpu.reciprocal %110 {approx = true} : vector<2x8x1xf32> -> vector<2x8x1xf32>
    %112 = vector.broadcast %111 : vector<2x8x1xf32> to vector<2x8x8xf32>
    %113 = arith.mulf %108, %112 : vector<2x8x8xf32>
    %114 = vector.broadcast %100 : vector<1x1x32xf32> to vector<2x8x32xf32>
    %115 = arith.mulf %43, %114 : vector<2x8x32xf32>
    "tpu.trace_start"() <{level = 10 : i32, message = "bnm,bmd->bnd"}> : () -> ()
    %cst_57 = arith.constant dense<0.000000e+00> : vector<2x8x32xf32>
    %116 = tpu.matmul %113, %115, %cst_57 {dimension_numbers = #tpu.dot_dimension_numbers<[2], [1], [1], [2], [0, 0, 0, 1, 1, 2], [0], [0]>} : vector<2x8x8xf32>, vector<2x8x32xf32>, vector<2x8x32xf32> -> vector<2x8x32xf32>
    "tpu.trace_stop"() : () -> ()
    %117 = arith.addf %93, %116 : vector<2x8x32xf32>
    %c24_i32_58 = arith.constant 24 : i32
    %118 = vector.broadcast %c24_i32_58 : i32 to vector<1x1x32xi32>
    %119 = arith.cmpi sge, %44, %118 : vector<1x1x32xi32>
    %c32_i32 = arith.constant 32 : i32
    %120 = vector.broadcast %c32_i32 : i32 to vector<1x1x32xi32>
    %121 = arith.cmpi slt, %44, %120 : vector<1x1x32xi32>
    %122 = arith.andi %119, %121 : vector<1x1x32xi1>
    %123 = arith.extui %122 : vector<1x1x32xi1> to vector<1x1x32xi32>
    %124 = arith.sitofp %123 : vector<1x1x32xi32> to vector<1x1x32xf32>
    %125 = vector.broadcast %124 : vector<1x1x32xf32> to vector<2x8x32xf32>
    %126 = arith.mulf %41, %125 : vector<2x8x32xf32>
    "tpu.trace_start"() <{level = 10 : i32, message = "bnd,bmd->bnm"}> : () -> ()
    %cst_59 = arith.constant dense<0.000000e+00> : vector<2x8x8xf32>
    %127 = tpu.matmul %126, %42, %cst_59 {dimension_numbers = #tpu.dot_dimension_numbers<[2], [2], [1], [1], [0, 0, 0, 1, 1, 1], [0], [0]>} : vector<2x8x32xf32>, vector<2x8x32xf32>, vector<2x8x8xf32> -> vector<2x8x8xf32>
    "tpu.trace_stop"() : () -> ()
    %cst_60 = arith.constant dense<0xFF800000> : vector<2x8xf32>
    %128 = vector.multi_reduction <maximumf>, %127, %cst_60 [2] : vector<2x8x8xf32> to vector<2x8xf32>
    %129 = vector.shape_cast %128 : vector<2x8xf32> to vector<2x8x1xf32>
    %130 = vector.broadcast %129 : vector<2x8x1xf32> to vector<2x8x8xf32>
    %131 = arith.subf %127, %130 : vector<2x8x8xf32>
    %132 = math.exp %131 : vector<2x8x8xf32>
    %cst_61 = arith.constant dense<0.000000e+00> : vector<2x8xf32>
    %133 = vector.multi_reduction <add>, %132, %cst_61 [2] : vector<2x8x8xf32> to vector<2x8xf32>
    %134 = vector.shape_cast %133 : vector<2x8xf32> to vector<2x8x1xf32>
    %135 = tpu.reciprocal %134 {approx = true} : vector<2x8x1xf32> -> vector<2x8x1xf32>
    %136 = vector.broadcast %135 : vector<2x8x1xf32> to vector<2x8x8xf32>
    %137 = arith.mulf %132, %136 : vector<2x8x8xf32>
    %138 = vector.broadcast %124 : vector<1x1x32xf32> to vector<2x8x32xf32>
    %139 = arith.mulf %43, %138 : vector<2x8x32xf32>
    "tpu.trace_start"() <{level = 10 : i32, message = "bnm,bmd->bnd"}> : () -> ()
    %cst_62 = arith.constant dense<0.000000e+00> : vector<2x8x32xf32>
    %140 = tpu.matmul %137, %139, %cst_62 {dimension_numbers = #tpu.dot_dimension_numbers<[2], [1], [1], [2], [0, 0, 0, 1, 1, 2], [0], [0]>} : vector<2x8x8xf32>, vector<2x8x32xf32>, vector<2x8x32xf32> -> vector<2x8x32xf32>
    "tpu.trace_stop"() : () -> ()
    %141 = arith.addf %117, %140 : vector<2x8x32xf32>
    %142 = vector.shape_cast %141 : vector<2x8x32xf32> to vector<16x32xf32>
    %cst_63 = arith.constant dense<0.000000e+00> : vector<16x32xf32>
    %143 = tpu.matmul %142, %11, %cst_63 {dimension_numbers = #tpu.dot_dimension_numbers<[1], [0], [0], [1], [0, 0, 1, 1], [], []>} : vector<16x32xf32>, vector<32x32xf32>, vector<16x32xf32> -> vector<16x32xf32>
    %144 = vector.broadcast %19 : vector<1x32xf32> to vector<16x32xf32>
    %145 = arith.addf %143, %144 : vector<16x32xf32>
    %146 = arith.addf %3, %145 : vector<16x32xf32>
    %cst_64 = arith.constant dense<0.000000e+00> : vector<16xf32>
    %147 = vector.multi_reduction <add>, %146, %cst_64 [1] : vector<16x32xf32> to vector<16xf32>
    %148 = vector.shape_cast %147 : vector<16xf32> to vector<16x1xf32>
    %cst_65 = arith.constant 3.200000e+01 : f32
    %149 = vector.broadcast %cst_65 : f32 to vector<16x1xf32>
    %150 = arith.divf %148, %149 : vector<16x1xf32>
    %151 = vector.broadcast %150 : vector<16x1xf32> to vector<16x32xf32>
    %152 = arith.subf %146, %151 : vector<16x32xf32>
    %153 = arith.mulf %152, %152 : vector<16x32xf32>
    %cst_66 = arith.constant dense<0.000000e+00> : vector<16xf32>
    %154 = vector.multi_reduction <add>, %153, %cst_66 [1] : vector<16x32xf32> to vector<16xf32>
    %155 = vector.shape_cast %154 : vector<16xf32> to vector<16x1xf32>
    %cst_67 = arith.constant 3.200000e+01 : f32
    %156 = vector.broadcast %cst_67 : f32 to vector<16x1xf32>
    %157 = arith.divf %155, %156 : vector<16x1xf32>
    %cst_68 = arith.constant 9.99999974E-6 : f32
    %158 = vector.broadcast %cst_68 : f32 to vector<16x1xf32>
    %159 = arith.addf %157, %158 : vector<16x1xf32>
    %160 = math.rsqrt %159 : vector<16x1xf32>
    %161 = vector.broadcast %160 : vector<16x1xf32> to vector<16x32xf32>
    %162 = arith.mulf %152, %161 : vector<16x32xf32>
    %163 = vector.broadcast %21 : vector<1x32xf32> to vector<16x32xf32>
    %164 = arith.mulf %162, %163 : vector<16x32xf32>
    %165 = vector.broadcast %23 : vector<1x32xf32> to vector<16x32xf32>
    %166 = arith.addf %164, %165 : vector<16x32xf32>
    %c0_69 = arith.constant 0 : index
    %c0_70 = arith.constant 0 : index
    %c0_71 = arith.constant 0 : index
    %167 = vector.load %arg7[%c0_69, %c0_70, %c0_71] : memref<1x32x64xf32, #tpu.memory_space<vmem>>, vector<1x32x64xf32>
    %168 = vector.shape_cast %167 : vector<1x32x64xf32> to vector<32x64xf32>
    %cst_72 = arith.constant dense<0.000000e+00> : vector<16x64xf32>
    %169 = tpu.matmul %166, %168, %cst_72 {dimension_numbers = #tpu.dot_dimension_numbers<[1], [0], [0], [1], [0, 0, 1, 1], [], []>} : vector<16x32xf32>, vector<32x64xf32>, vector<16x64xf32> -> vector<16x64xf32>
    %170 = vector.broadcast %31 : vector<1x64xf32> to vector<16x64xf32>
    %171 = arith.addf %169, %170 : vector<16x64xf32>
    %cst_73 = arith.constant 0.000000e+00 : f32
    %172 = vector.broadcast %cst_73 : f32 to vector<16x64xf32>
    %173 = arith.maximumf %171, %172 : vector<16x64xf32>
    %c0_74 = arith.constant 0 : index
    %c0_75 = arith.constant 0 : index
    %c0_76 = arith.constant 0 : index
    %174 = vector.load %arg8[%c0_74, %c0_75, %c0_76] : memref<1x64x32xf32, #tpu.memory_space<vmem>>, vector<1x64x32xf32>
    %175 = vector.shape_cast %174 : vector<1x64x32xf32> to vector<64x32xf32>
    %cst_77 = arith.constant dense<0.000000e+00> : vector<16x32xf32>
    %176 = tpu.matmul %173, %175, %cst_77 {dimension_numbers = #tpu.dot_dimension_numbers<[1], [0], [0], [1], [0, 0, 1, 1], [], []>} : vector<16x64xf32>, vector<64x32xf32>, vector<16x32xf32> -> vector<16x32xf32>
    %177 = vector.broadcast %25 : vector<1x32xf32> to vector<16x32xf32>
    %178 = arith.addf %176, %177 : vector<16x32xf32>
    %179 = arith.addf %166, %178 : vector<16x32xf32>
    %cst_78 = arith.constant dense<0.000000e+00> : vector<16xf32>
    %180 = vector.multi_reduction <add>, %179, %cst_78 [1] : vector<16x32xf32> to vector<16xf32>
    %181 = vector.shape_cast %180 : vector<16xf32> to vector<16x1xf32>
    %cst_79 = arith.constant 3.200000e+01 : f32
    %182 = vector.broadcast %cst_79 : f32 to vector<16x1xf32>
    %183 = arith.divf %181, %182 : vector<16x1xf32>
    %184 = vector.broadcast %183 : vector<16x1xf32> to vector<16x32xf32>
    %185 = arith.subf %179, %184 : vector<16x32xf32>
    %186 = arith.mulf %185, %185 : vector<16x32xf32>
    %cst_80 = arith.constant dense<0.000000e+00> : vector<16xf32>
    %187 = vector.multi_reduction <add>, %186, %cst_80 [1] : vector<16x32xf32> to vector<16xf32>
    %188 = vector.shape_cast %187 : vector<16xf32> to vector<16x1xf32>
    %cst_81 = arith.constant 3.200000e+01 : f32
    %189 = vector.broadcast %cst_81 : f32 to vector<16x1xf32>
    %190 = arith.divf %188, %189 : vector<16x1xf32>
    %cst_82 = arith.constant 9.99999974E-6 : f32
    %191 = vector.broadcast %cst_82 : f32 to vector<16x1xf32>
    %192 = arith.addf %190, %191 : vector<16x1xf32>
    %193 = math.rsqrt %192 : vector<16x1xf32>
    %194 = vector.broadcast %193 : vector<16x1xf32> to vector<16x32xf32>
    %195 = arith.mulf %185, %194 : vector<16x32xf32>
    %196 = vector.broadcast %27 : vector<1x32xf32> to vector<16x32xf32>
    %197 = arith.mulf %195, %196 : vector<16x32xf32>
    %198 = vector.broadcast %29 : vector<1x32xf32> to vector<16x32xf32>
    %199 = arith.addf %197, %198 : vector<16x32xf32>
    %c0_83 = arith.constant 0 : index
    %c0_84 = arith.constant 0 : index
    %200 = vector.load %arg12[%c0_83, %c0_84] : memref<16x32xf32, #tpu.memory_space<vmem>>, vector<16x32xf32>
    tpu.vector_store %arg12[%c0_83, %c0_84], %199 {strides = array<i32>} : memref<16x32xf32, #tpu.memory_space<vmem>>, vector<16x32xf32>,
    %c1_i32 = arith.constant 1 : i32
    %201 = arith.cmpi eq, %arg1, %c1_i32 : i32
    %202 = arith.extui %201 : i1 to i32
    %c0_i32_85 = arith.constant 0 : i32
    %203 = arith.cmpi ne, %202, %c0_i32_85 : i32
    scf.if %203 {
      %c1_86 = arith.constant 1 : index
      %c0_87 = arith.constant 0 : index
      %204 = vector.load %arg4[%c1_86, %c0_87] : memref<3x32xf32, #tpu.memory_space<vmem>>, vector<1x32xf32>
      %c2_88 = arith.constant 2 : index
      %c0_89 = arith.constant 0 : index
      %205 = vector.load %arg4[%c2_88, %c0_89] : memref<3x32xf32, #tpu.memory_space<vmem>>, vector<1x32xf32>
      %cst_90 = arith.constant dense<0.000000e+00> : vector<16xf32>
      %206 = vector.multi_reduction <add>, %199, %cst_90 [1] : vector<16x32xf32> to vector<16xf32>
      %207 = vector.shape_cast %206 : vector<16xf32> to vector<16x1xf32>
      %cst_91 = arith.constant 3.200000e+01 : f32
      %208 = vector.broadcast %cst_91 : f32 to vector<16x1xf32>
      %209 = arith.divf %207, %208 : vector<16x1xf32>
      %210 = vector.broadcast %209 : vector<16x1xf32> to vector<16x32xf32>
      %211 = arith.subf %199, %210 : vector<16x32xf32>
      %212 = arith.mulf %211, %211 : vector<16x32xf32>
      %cst_92 = arith.constant dense<0.000000e+00> : vector<16xf32>
      %213 = vector.multi_reduction <add>, %212, %cst_92 [1] : vector<16x32xf32> to vector<16xf32>
      %214 = vector.shape_cast %213 : vector<16xf32> to vector<16x1xf32>
      %cst_93 = arith.constant 3.200000e+01 : f32
      %215 = vector.broadcast %cst_93 : f32 to vector<16x1xf32>
      %216 = arith.divf %214, %215 : vector<16x1xf32>
      %cst_94 = arith.constant 9.99999974E-6 : f32
      %217 = vector.broadcast %cst_94 : f32 to vector<16x1xf32>
      %218 = arith.addf %216, %217 : vector<16x1xf32>
      %219 = math.rsqrt %218 : vector<16x1xf32>
      %220 = vector.broadcast %219 : vector<16x1xf32> to vector<16x32xf32>
      %221 = arith.mulf %211, %220 : vector<16x32xf32>
      %222 = vector.broadcast %204 : vector<1x32xf32> to vector<16x32xf32>
      %223 = arith.mulf %221, %222 : vector<16x32xf32>
      %224 = vector.broadcast %205 : vector<1x32xf32> to vector<16x32xf32>
      %225 = arith.addf %223, %224 : vector<16x32xf32>
      %c0_95 = arith.constant 0 : index
      %c0_96 = arith.constant 0 : index
      %226 = vector.load %arg5[%c0_95, %c0_96] : memref<33x8xf32, #tpu.memory_space<vmem>>, vector<33x8xf32>
      %227 = vector.extract_strided_slice %226 {offsets = [0, 0], sizes = [32, 8], strides = [1, 1]} : vector<33x8xf32> to vector<32x8xf32>
      %cst_97 = arith.constant dense<0.000000e+00> : vector<16x8xf32>
      %228 = tpu.matmul %225, %227, %cst_97 {dimension_numbers = #tpu.dot_dimension_numbers<[1], [0], [0], [1], [0, 0, 1, 1], [], []>} : vector<16x32xf32>, vector<32x8xf32>, vector<16x8xf32> -> vector<16x8xf32>
      %229 = vector.extract_strided_slice %226 {offsets = [32, 0], sizes = [1, 8], strides = [1, 1]} : vector<33x8xf32> to vector<1x8xf32>
      %230 = vector.broadcast %229 : vector<1x8xf32> to vector<16x8xf32>
      %231 = arith.addf %228, %230 : vector<16x8xf32>
      %c0_98 = arith.constant 0 : index
      %c0_99 = arith.constant 0 : index
      %232 = vector.load %arg11[%c0_98, %c0_99] : memref<16x8xf32, #tpu.memory_space<vmem>>, vector<16x8xf32>
      tpu.vector_store %arg11[%c0_98, %c0_99], %231 {strides = array<i32>} : memref<16x8xf32, #tpu.memory_space<vmem>>, vector<16x8xf32>,
    } else {
    }
    return
  }
  func.func @transform_0(%arg0: i32, %arg1: i32) -> (i32, i32) {
    %c0_i32 = arith.constant 0 : i32
    %c0_i32_0 = arith.constant 0 : i32
    return %arg0, %c0_i32 : i32, i32
  }
  func.func @transform_1(%arg0: i32, %arg1: i32) -> (i32, i32) {
    %c0_i32 = arith.constant 0 : i32
    %c0_i32_0 = arith.constant 0 : i32
    %c0_i32_1 = arith.constant 0 : i32
    return %c0_i32, %c0_i32_0 : i32, i32
  }
  func.func @transform_2(%arg0: i32, %arg1: i32) -> (i32, i32) {
    %c0_i32 = arith.constant 0 : i32
    %c0_i32_0 = arith.constant 0 : i32
    %c0_i32_1 = arith.constant 0 : i32
    return %c0_i32, %c0_i32_0 : i32, i32
  }
  func.func @transform_3(%arg0: i32, %arg1: i32) -> (i32, i32) {
    %c0_i32 = arith.constant 0 : i32
    %c0_i32_0 = arith.constant 0 : i32
    %c0_i32_1 = arith.constant 0 : i32
    return %c0_i32, %c0_i32_0 : i32, i32
  }
  func.func @transform_4(%arg0: i32, %arg1: i32) -> (i32, i32, i32, i32) {
    %c0_i32 = arith.constant 0 : i32
    %c0_i32_0 = arith.constant 0 : i32
    %c0_i32_1 = arith.constant 0 : i32
    %c0_i32_2 = arith.constant 0 : i32
    return %arg1, %c0_i32, %c0_i32_0, %c0_i32_1 : i32, i32, i32, i32
  }
  func.func @transform_5(%arg0: i32, %arg1: i32) -> (i32, i32, i32) {
    %c0_i32 = arith.constant 0 : i32
    %c0_i32_0 = arith.constant 0 : i32
    %c0_i32_1 = arith.constant 0 : i32
    return %arg1, %c0_i32, %c0_i32_0 : i32, i32, i32
  }
  func.func @transform_6(%arg0: i32, %arg1: i32) -> (i32, i32, i32) {
    %c0_i32 = arith.constant 0 : i32
    %c0_i32_0 = arith.constant 0 : i32
    %c0_i32_1 = arith.constant 0 : i32
    return %arg1, %c0_i32, %c0_i32_0 : i32, i32, i32
  }
  func.func @transform_7(%arg0: i32, %arg1: i32) -> (i32, i32, i32) {
    %c0_i32 = arith.constant 0 : i32
    %c0_i32_0 = arith.constant 0 : i32
    %c0_i32_1 = arith.constant 0 : i32
    return %arg1, %c0_i32, %c0_i32_0 : i32, i32, i32
  }
  func.func @transform_8(%arg0: i32, %arg1: i32) -> (i32, i32, i32) {
    %c0_i32 = arith.constant 0 : i32
    %c0_i32_0 = arith.constant 0 : i32
    %c0_i32_1 = arith.constant 0 : i32
    return %arg1, %c0_i32, %c0_i32_0 : i32, i32, i32
  }
  func.func @transform_9(%arg0: i32, %arg1: i32) -> (i32, i32) {
    %c0_i32 = arith.constant 0 : i32
    %c0_i32_0 = arith.constant 0 : i32
    return %arg0, %c0_i32 : i32, i32
  }
}

</mosaic_0001>

<llo_original>
// kernel: tpu_custom_call.1
$region0: #{tpu_custom_call.1}
  #allocation0 [shape = 'u32[]', space=smem, size = 0x4, offset = 0x4, fixed_abs, tag = 'smem constant byte address 0x4 - core index']
  #allocation1 [shape = 'u32[144,128]{1,0:T(1,128)}', space=vmem, size = 0x12000, scoped, tag = 'internal scratch']
  #allocation2 [shape = 'f32[16,32]{1,0:T(8,128)}', space=vmem, size = 0x2000, scoped, tag = 'scratch operand']
  %s0 = inlined_call_operand.vmem [shape: f32[16,16], index: 0, kind: input, shape index: {}]
  %s1 = inlined_call_operand.vmem [shape: f32[16,32], index: 1, kind: input, shape index: {}]
  %s2 = inlined_call_operand.vmem [shape: f32[3,32], index: 2, kind: input, shape index: {}]
  %s3 = inlined_call_operand.vmem [shape: f32[33,8], index: 3, kind: input, shape index: {}]
  %s4 = inlined_call_operand.vmem [shape: f32[2,4,32,32], index: 4, kind: input, shape index: {}]
  %s5 = inlined_call_operand.hbm [shape: f32[2,32,64], index: 5, kind: input, shape index: {}]
  %s6 = inlined_call_operand.vmem [shape: f32[2,64,32], index: 6, kind: input, shape index: {}]
  %s7 = inlined_call_operand.vmem [shape: f32[2,9,32], index: 7, kind: input, shape index: {}]
  %s8 = inlined_call_operand.vmem [shape: f32[2,1,64], index: 8, kind: input, shape index: {}]
  %s9 = inlined_call_operand.vmem [shape: f32[16,8], index: 9, kind: output, shape index: {}]
  %s10 = sld [smem:[#allocation0]]
  $region81: #{tpu_custom_call.1} parent=0
    _
  %s12 = ssub.s32 1, %s10
  %s13 = scalar_select 0, %s12, %s10
  $region1: #{tpu_custom_call.1} parent=0
    #allocation3 [shape = 'u8[32768]{0}', space=vmem, size = 0x8000, scoped, tag = 'input window, operand 5']
    #allocation4 [shape = 's32[2]{0}', space=sflag, size = 0x8, scoped, tag = 'scoped memory for tpu_custom_call.1']
    %14 = vsyncpa [#allocation4], 0
    %s15 = scalar_lea.sflag [#allocation4], 1
    %16 = vsyncpa %s15, 0
    loop: start=0, step=1, limit=4
    $region2: #{tpu_custom_call.1} parent=1 // loop_pre_header
      _
    $region3: #{tpu_custom_call.1} parent=1 // loop_header
      %s18 = sphi 0, %s22
      %p19 = scmp.ge.s32.totalorder %s18, 4
      %s25 = sphi 0, %s37
      %s26 = sphi 0, %s33
      %s27 = sphi 0, %s25
      %s28 = sphi 0, %s26
      %s29 = sphi 0, %s27
      %s30 = sphi 0, %s28
      %s40 = sphi 0, %s42
      %s43 = sphi 0, %s40
      %s44 = sphi 0, %s43
      %s60 = sphi 0, %s44
      %s64 = sphi 0, %s64
      %s66 = sphi 0, %s64
      %s67 = sphi 0, %s66
      %s81 = sphi 0, %s67
      %s85 = sphi 0, %s85
      %s87 = sphi 0, %s85
      %s88 = sphi 0, %s87
      %s102 = sphi 0, %s88
      %s106 = sphi 0, %s106
      %s108 = sphi 0, %s106
      %s109 = sphi 0, %s108
      %s123 = sphi 0, %s109
      %s129 = sphi 0, %s131
      %s132 = sphi 0, %s129
      %s133 = sphi 0, %s132
      %s149 = sphi 0, %s133
      %s155 = sphi 0, %s157
      %s158 = sphi 0, %s155
      %s159 = sphi 0, %s158
      %s175 = sphi 0, %s159
      %s181 = sphi 0, %s183
      %s184 = sphi 0, %s181
      %s185 = sphi 0, %s184
      %s201 = sphi 0, %s185
      %s207 = sphi 0, %s209
      %s210 = sphi 0, %s207
      %s211 = sphi 0, %s210
      %s227 = sphi 0, %s211
      %s233 = sphi 0, %s235
      %s236 = sphi 0, %s233
      %s237 = sphi 0, %s236
      %s253 = sphi 0, %s237
      %s259 = sphi 0, %s261
      %s262 = sphi 0, %s259
      %s263 = sphi 0, %s262
      %s279 = sphi 0, %s263
    $region4: #{tpu_custom_call.1} parent=1 // loop_header_branch
      %21 = sbr.rel (%p19) target = $region8
    $region5: #{tpu_custom_call.1} parent=1 // loop_body
      %s23 = ssub.s32 %s18, 1
      %s24 = ssub.s32 %s18, 2
      %s31 = sadd.s32 1, %s26
      %p32 = scmp.ge.s32.totalorder %s31, 2
      %s33 = scalar_select %p32, 0, %s31
      %s34 = sadd.s32 1, %s25
      %s35 = scalar_select %p32, %s34, %s25
      %p36 = scmp.ge.s32.totalorder %s35, 1
      %s37 = scalar_select %p36, 0, %s35
      %s38 = ssub.s32 %s25, %s37
      %p39 = scmp.eq.s32.totalorder %s38, 0
      %s41 = sadd.s32 %s40, 1
      %s42 = scalar_select %p39, %s40, %s41
      %p45 = pneg %p39
      %p46 = scmp.eq.s32.totalorder %s18, 1
      %p47 = por %p45, %p46
      %p48 = scmp.ne.s32.totalorder %s40, %s43
      %p49 = scmp.eq.s32.totalorder %s18, 0
      %p50 = por %p48, %p49
      %p51 = scmp.ne.s32.totalorder %s40, %s43
      %p52 = scmp.eq.s32.totalorder %s23, 1
      %p53 = por %p51, %p52
      %p54 = scmp.ne.s32.totalorder %s43, %s44
      %p55 = scmp.eq.s32.totalorder %s23, 0
      %p56 = por %p54, %p55
      %p57 = scmp.ne.s32.totalorder %s43, %s44
      %p58 = scmp.eq.s32.totalorder %s24, 1
      %p59 = por %p57, %p58
      %p61 = scmp.ne.s32.totalorder %s44, %s60
      %p62 = scmp.eq.s32.totalorder %s24, 0
      %p63 = por %p61, %p62
      %s65 = sadd.s32 %s64, 1
      %p68 = scmp.eq.s32.totalorder %s18, 1
      %p69 = scmp.ne.s32.totalorder %s64, %s66
      %p70 = scmp.eq.s32.totalorder %s18, 0
      %p71 = por %p69, %p70
      %p72 = scmp.ne.s32.totalorder %s64, %s66
      %p73 = scmp.eq.s32.totalorder %s23, 1
      %p74 = por %p72, %p73
      %p75 = scmp.ne.s32.totalorder %s66, %s67
      %p76 = scmp.eq.s32.totalorder %s23, 0
      %p77 = por %p75, %p76
      %p78 = scmp.ne.s32.totalorder %s66, %s67
      %p79 = scmp.eq.s32.totalorder %s24, 1
      %p80 = por %p78, %p79
      %p82 = scmp.ne.s32.totalorder %s67, %s81
      %p83 = scmp.eq.s32.totalorder %s24, 0
      %p84 = por %p82, %p83
      %s86 = sadd.s32 %s85, 1
      %p89 = scmp.eq.s32.totalorder %s18, 1
      %p90 = scmp.ne.s32.totalorder %s85, %s87
      %p91 = scmp.eq.s32.totalorder %s18, 0
      %p92 = por %p90, %p91
      %p93 = scmp.ne.s32.totalorder %s85, %s87
      %p94 = scmp.eq.s32.totalorder %s23, 1
      %p95 = por %p93, %p94
      %p96 = scmp.ne.s32.totalorder %s87, %s88
      %p97 = scmp.eq.s32.totalorder %s23, 0
      %p98 = por %p96, %p97
      %p99 = scmp.ne.s32.totalorder %s87, %s88
      %p100 = scmp.eq.s32.totalorder %s24, 1
      %p101 = por %p99, %p100
      %p103 = scmp.ne.s32.totalorder %s88, %s102
      %p104 = scmp.eq.s32.totalorder %s24, 0
      %p105 = por %p103, %p104
      %s107 = sadd.s32 %s106, 1
      %p110 = scmp.eq.s32.totalorder %s18, 1
      %p111 = scmp.ne.s32.totalorder %s106, %s108
      %p112 = scmp.eq.s32.totalorder %s18, 0
      %p113 = por %p111, %p112
      %p114 = scmp.ne.s32.totalorder %s106, %s108
      %p115 = scmp.eq.s32.totalorder %s23, 1
      %p116 = por %p114, %p115
      %p117 = scmp.ne.s32.totalorder %s108, %s109
      %p118 = scmp.eq.s32.totalorder %s23, 0
      %p119 = por %p117, %p118
      %p120 = scmp.ne.s32.totalorder %s108, %s109
      %p121 = scmp.eq.s32.totalorder %s24, 1
      %p122 = por %p120, %p121
      %p124 = scmp.ne.s32.totalorder %s109, %s123
      %p125 = scmp.eq.s32.totalorder %s24, 0
      %p126 = por %p124, %p125
      %s127 = ssub.s32 %s26, %s33
      %p128 = scmp.eq.s32.totalorder %s127, 0
      %s130 = sadd.s32 %s129, 1
      %s131 = scalar_select %p128, %s129, %s130
      %p134 = pneg %p128
      %p135 = scmp.eq.s32.totalorder %s18, 1
      %p136 = por %p134, %p135
      %p137 = scmp.ne.s32.totalorder %s129, %s132
      %p138 = scmp.eq.s32.totalorder %s18, 0
      %p139 = por %p137, %p138
      %p140 = scmp.ne.s32.totalorder %s129, %s132
      %p141 = scmp.eq.s32.totalorder %s23, 1
      %p142 = por %p140, %p141
      %p143 = scmp.ne.s32.totalorder %s132, %s133
      %p144 = scmp.eq.s32.totalorder %s23, 0
      %p145 = por %p143, %p144
      %p146 = scmp.ne.s32.totalorder %s132, %s133
      %p147 = scmp.eq.s32.totalorder %s24, 1
      %p148 = por %p146, %p147
      %p150 = scmp.ne.s32.totalorder %s133, %s149
      %p151 = scmp.eq.s32.totalorder %s24, 0
      %p152 = por %p150, %p151
      %s153 = ssub.s32 %s26, %s33
      %p154 = scmp.eq.s32.totalorder %s153, 0
      %s156 = sadd.s32 %s155, 1
      %s157 = scalar_select %p154, %s155, %s156
      %p160 = pneg %p154
      %p161 = scmp.eq.s32.totalorder %s18, 1
      %p162 = por %p160, %p161
      %p163 = scmp.ne.s32.totalorder %s155, %s158
      %p164 = scmp.eq.s32.totalorder %s18, 0
      %p165 = por %p163, %p164
      %p166 = scmp.ne.s32.totalorder %s155, %s158
      %p167 = scmp.eq.s32.totalorder %s23, 1
      %p168 = por %p166, %p167
      %p169 = scmp.ne.s32.totalorder %s158, %s159
      %p170 = scmp.eq.s32.totalorder %s23, 0
      %p171 = por %p169, %p170
      %p172 = scmp.ne.s32.totalorder %s158, %s159
      %p173 = scmp.eq.s32.totalorder %s24, 1
      %p174 = por %p172, %p173
      %p176 = scmp.ne.s32.totalorder %s159, %s175
      %p177 = scmp.eq.s32.totalorder %s24, 0
      %p178 = por %p176, %p177
      %s179 = ssub.s32 %s26, %s33
      %p180 = scmp.eq.s32.totalorder %s179, 0
      %s182 = sadd.s32 %s181, 1
      %s183 = scalar_select %p180, %s181, %s182
      %p186 = pneg %p180
      %p187 = scmp.eq.s32.totalorder %s18, 1
      %p188 = por %p186, %p187
      %p189 = scmp.ne.s32.totalorder %s181, %s184
      %p190 = scmp.eq.s32.totalorder %s18, 0
      %p191 = por %p189, %p190
      %p192 = scmp.ne.s32.totalorder %s181, %s184
      %p193 = scmp.eq.s32.totalorder %s23, 1
      %p194 = por %p192, %p193
      %p195 = scmp.ne.s32.totalorder %s184, %s185
      %p196 = scmp.eq.s32.totalorder %s23, 0
      %p197 = por %p195, %p196
      %p198 = scmp.ne.s32.totalorder %s184, %s185
      %p199 = scmp.eq.s32.totalorder %s24, 1
      %p200 = por %p198, %p199
      %p202 = scmp.ne.s32.totalorder %s185, %s201
      %p203 = scmp.eq.s32.totalorder %s24, 0
      %p204 = por %p202, %p203
      %s205 = ssub.s32 %s26, %s33
      %p206 = scmp.eq.s32.totalorder %s205, 0
      %s208 = sadd.s32 %s207, 1
      %s209 = scalar_select %p206, %s207, %s208
      %p212 = pneg %p206
      %p213 = scmp.eq.s32.totalorder %s18, 1
      %p214 = por %p212, %p213
      %p215 = scmp.ne.s32.totalorder %s207, %s210
      %p216 = scmp.eq.s32.totalorder %s18, 0
      %p217 = por %p215, %p216
      %p218 = scmp.ne.s32.totalorder %s207, %s210
      %p219 = scmp.eq.s32.totalorder %s23, 1
      %p220 = por %p218, %p219
      %p221 = scmp.ne.s32.totalorder %s210, %s211
      %p222 = scmp.eq.s32.totalorder %s23, 0
      %p223 = por %p221, %p222
      %p224 = scmp.ne.s32.totalorder %s210, %s211
      %p225 = scmp.eq.s32.totalorder %s24, 1
      %p226 = por %p224, %p225
      %p228 = scmp.ne.s32.totalorder %s211, %s227
      %p229 = scmp.eq.s32.totalorder %s24, 0
      %p230 = por %p228, %p229
      %s231 = ssub.s32 %s26, %s33
      %p232 = scmp.eq.s32.totalorder %s231, 0
      %s234 = sadd.s32 %s233, 1
      %s235 = scalar_select %p232, %s233, %s234
      %p238 = pneg %p232
      %p239 = scmp.eq.s32.totalorder %s18, 1
      %p240 = por %p238, %p239
      %p241 = scmp.ne.s32.totalorder %s233, %s236
      %p242 = scmp.eq.s32.totalorder %s18, 0
      %p243 = por %p241, %p242
      %p244 = scmp.ne.s32.totalorder %s233, %s236
      %p245 = scmp.eq.s32.totalorder %s23, 1
      %p246 = por %p244, %p245
      %p247 = scmp.ne.s32.totalorder %s236, %s237
      %p248 = scmp.eq.s32.totalorder %s23, 0
      %p249 = por %p247, %p248
      %p250 = scmp.ne.s32.totalorder %s236, %s237
      %p251 = scmp.eq.s32.totalorder %s24, 1
      %p252 = por %p250, %p251
      %p254 = scmp.ne.s32.totalorder %s237, %s253
      %p255 = scmp.eq.s32.totalorder %s24, 0
      %p256 = por %p254, %p255
      %s257 = ssub.s32 %s25, %s37
      %p258 = scmp.eq.s32.totalorder %s257, 0
      %s260 = sadd.s32 %s259, 1
      %s261 = scalar_select %p258, %s259, %s260
      %p264 = pneg %p258
      %p265 = scmp.eq.s32.totalorder %s18, 1
      %p266 = por %p264, %p265
      %p267 = scmp.ne.s32.totalorder %s259, %s262
      %p268 = scmp.eq.s32.totalorder %s18, 0
      %p269 = por %p267, %p268
      %p270 = scmp.ne.s32.totalorder %s259, %s262
      %p271 = scmp.eq.s32.totalorder %s23, 1
      %p272 = por %p270, %p271
      %p273 = scmp.ne.s32.totalorder %s262, %s263
      %p274 = scmp.eq.s32.totalorder %s23, 0
      %p275 = por %p273, %p274
      %p276 = scmp.ne.s32.totalorder %s262, %s263
      %p277 = scmp.eq.s32.totalorder %s24, 1
      %p278 = por %p276, %p277
      %p280 = scmp.ne.s32.totalorder %s263, %s279
      %p281 = scmp.eq.s32.totalorder %s24, 0
      %p282 = por %p280, %p281
      %p283 = scmp.le.s32.totalorder 1, %s18
      %p284 = scmp.lt.s32.totalorder %s18, 3
      %p285 = pnand %p283, %p284
      %p286 = pneg %p285
      // Predicated region
      $region9: #{tpu_custom_call.1} parent=5 // pred_check
        _
      $region10: #{tpu_custom_call.1} parent=5 // pred_check_branch
        %288 = sbr.rel (%p285) target = $region12
      $region11: #{tpu_custom_call.1} parent=5 // pred_region
        %s289 = ssub.s32 %s18, 1
        // Predicated region
        $region13: #{tpu_custom_call.1} parent=11 // pred_check
          %p290 = pneg %p56
        $region14: #{tpu_custom_call.1} parent=11 // pred_check_branch
          %292 = sbr.rel (%p290) target = $region16
        $region15: #{tpu_custom_call.1} parent=11 // pred_region
          %s293 = smul.u32 2, %s27
          %p294 = scmp.lt.s32.totalorder %s293, 1
          %s295 = scalar_select %p294, %s293, 1
          %s296 = smul.addr %s295, 8
          %s297 = scalar_lea.vmem %s0, %s296
          %s298 = smul.u32 2, %s27
        $region16: #{tpu_custom_call.1} parent=11 // pred_fallthru
          _
        // Predicated region
        $region17: #{tpu_custom_call.1} parent=11 // pred_check
          %p299 = pneg %p77
        $region18: #{tpu_custom_call.1} parent=11 // pred_check_branch
          %301 = sbr.rel (%p299) target = $region20
        $region19: #{tpu_custom_call.1} parent=11 // pred_region
          _
        $region20: #{tpu_custom_call.1} parent=11 // pred_fallthru
          _
        // Predicated region
        $region21: #{tpu_custom_call.1} parent=11 // pred_check
          %p302 = pneg %p98
        $region22: #{tpu_custom_call.1} parent=11 // pred_check_branch
          %304 = sbr.rel (%p302) target = $region24
        $region23: #{tpu_custom_call.1} parent=11 // pred_region
          _
        $region24: #{tpu_custom_call.1} parent=11 // pred_fallthru
          _
        // Predicated region
        $region25: #{tpu_custom_call.1} parent=11 // pred_check
          %p305 = pneg %p119
        $region26: #{tpu_custom_call.1} parent=11 // pred_check_branch
          %307 = sbr.rel (%p305) target = $region28
        $region27: #{tpu_custom_call.1} parent=11 // pred_region
          _
        $region28: #{tpu_custom_call.1} parent=11 // pred_fallthru
          _
      $region12: #{tpu_custom_call.1} parent=5 // pred_fallthru
        _
      %p308 = scmp.lt.s32.totalorder %s18, 2
      // Predicated region
      $region29: #{tpu_custom_call.1} parent=5 // pred_check
        %p309 = pneg %p308
      $region30: #{tpu_custom_call.1} parent=5 // pred_check_branch
        %311 = sbr.rel (%p309) target = $region32
      $region31: #{tpu_custom_call.1} parent=5 // pred_region
        // Predicated region
        $region33: #{tpu_custom_call.1} parent=31 // pred_check
          %p312 = pneg %p139
        $region34: #{tpu_custom_call.1} parent=31 // pred_check_branch
          %314 = sbr.rel (%p312) target = $region36
        $region35: #{tpu_custom_call.1} parent=31 // pred_region
          %p315 = scmp.lt.s32.totalorder %s26, 1
          %s316 = scalar_select %p315, %s26, 1
          %s317 = smul.addr %s316, 16
          %s318 = smul.addr %s317, 8
          %s319 = scalar_lea.vmem %s4, %s318
        $region36: #{tpu_custom_call.1} parent=31 // pred_fallthru
          _
        // Predicated region
        $region37: #{tpu_custom_call.1} parent=31 // pred_check
          %p320 = pneg %p165
        $region38: #{tpu_custom_call.1} parent=31 // pred_check_branch
          %322 = sbr.rel (%p320) target = $region40
        $region39: #{tpu_custom_call.1} parent=31 // pred_region
          %s323 = sand.u32 %s155, 1
          %s324 = scalar_lea.sflag [#allocation4], %s323
          %s325 = sand.u32 %s155, 1
          %s326 = smul.addr %s325, 32
          %s327 = scalar_lea.vmem [#allocation3], %s326
          %s329 = ssub.s32 512, 512
          %330 = vsyncadd %s324, %s329
          %s331 = smul.addr %s26, 4
          %s332 = smul.addr %s331, 128
          %s333 = scalar_lea.hbm %s5, %s332
          %s334 = sshll.u32 %s327, 4
          %s335 = int_to_ptr.vmem [resolvable:$true] %s334
          %340 = dma.hbm_to_vmem [thread:$0]  %s333, 512, %s335, %s324, 128, 128, 8
        $region40: #{tpu_custom_call.1} parent=31 // pred_fallthru
          _
        // Predicated region
        $region41: #{tpu_custom_call.1} parent=31 // pred_check
          %p341 = pneg %p191
        $region42: #{tpu_custom_call.1} parent=31 // pred_check_branch
          %343 = sbr.rel (%p341) target = $region44
        $region43: #{tpu_custom_call.1} parent=31 // pred_region
          %p344 = scmp.lt.s32.totalorder %s26, 1
          %s345 = scalar_select %p344, %s26, 1
          %s346 = smul.addr %s345, 8
          %s347 = smul.addr %s346, 8
          %s348 = scalar_lea.vmem %s6, %s347
        $region44: #{tpu_custom_call.1} parent=31 // pred_fallthru
          _
        // Predicated region
        $region45: #{tpu_custom_call.1} parent=31 // pred_check
          %p349 = pneg %p217
        $region46: #{tpu_custom_call.1} parent=31 // pred_check_branch
          %351 = sbr.rel (%p349) target = $region48
        $region47: #{tpu_custom_call.1} parent=31 // pred_region
          %p352 = scmp.lt.s32.totalorder %s26, 1
          %s353 = scalar_select %p352, %s26, 1
          %s354 = smul.addr %s353, 2
          %s355 = smul.addr %s354, 8
          %s356 = scalar_lea.vmem %s7, %s355
        $region48: #{tpu_custom_call.1} parent=31 // pred_fallthru
          _
        // Predicated region
        $region49: #{tpu_custom_call.1} parent=31 // pred_check
          %p357 = pneg %p243
        $region50: #{tpu_custom_call.1} parent=31 // pred_check_branch
          %359 = sbr.rel (%p357) target = $region52
        $region51: #{tpu_custom_call.1} parent=31 // pred_region
          %p360 = scmp.lt.s32.totalorder %s26, 1
          %s361 = scalar_select %p360, %s26, 1
          %s362 = scalar_lea.vmem %s8, %s361
        $region52: #{tpu_custom_call.1} parent=31 // pred_fallthru
          _
      $region32: #{tpu_custom_call.1} parent=5 // pred_fallthru
        _
      %p363 = scmp.le.s32.totalorder 1, %s18
      %p364 = scmp.lt.s32.totalorder %s18, 3
      %p365 = pnand %p363, %p364
      %p366 = pneg %p365
      // Predicated region
      $region53: #{tpu_custom_call.1} parent=5 // pred_check
        _
      $region54: #{tpu_custom_call.1} parent=5 // pred_check_branch
        %368 = sbr.rel (%p365) target = $region56
      $region55: #{tpu_custom_call.1} parent=5 // pred_region
        %s369 = ssub.s32 %s18, 1
        %s370 = sand.u32 %s158, 1
        %s371 = scalar_lea.sflag [#allocation4], %s370
        %s372 = sand.u32 %s158, 1
        %s373 = smul.addr %s372, 32
        %s374 = scalar_lea.vmem [#allocation3], %s373
        // Predicated region
        $region57: #{tpu_custom_call.1} parent=55 // pred_check
          %p375 = pneg %p171
        $region58: #{tpu_custom_call.1} parent=55 // pred_check_branch
          %377 = sbr.rel (%p375) target = $region60
        $region59: #{tpu_custom_call.1} parent=55 // pred_region
          %378 = dma.done %s371, 512
        $region60: #{tpu_custom_call.1} parent=55 // pred_fallthru
          _
        %s379 = smul.u32 2, %s27
        %p380 = scmp.lt.s32.totalorder %s379, 1
        %s381 = scalar_select %p380, %s379, 1
        %s382 = smul.addr %s381, 8
        %s383 = scalar_lea.vmem %s0, %s382
        %p384 = pneg %p56
        %p385 = pneg %p53
        %p386 = pneg %p77
        %p387 = pneg %p74
        %p388 = pneg %p98
        %p389 = pneg %p95
        %p390 = pneg %p119
        %p391 = pneg %p116
        %p392 = scmp.lt.s32.totalorder %s28, 1
        %s393 = scalar_select %p392, %s28, 1
        %s394 = smul.addr %s393, 16
        %s395 = smul.addr %s394, 8
        %s396 = scalar_lea.vmem %s4, %s395
        %p397 = pneg %p145
        %p398 = pneg %p142
        %s399 = sand.u32 %s158, 1
        %s400 = scalar_lea.sflag [#allocation4], %s399
        %s401 = sand.u32 %s158, 1
        %s402 = smul.addr %s401, 32
        %s403 = scalar_lea.vmem [#allocation3], %s402
        %p404 = pneg %p171
        %p405 = pneg %p168
        %p406 = scmp.lt.s32.totalorder %s28, 1
        %s407 = scalar_select %p406, %s28, 1
        %s408 = smul.addr %s407, 8
        %s409 = smul.addr %s408, 8
        %s410 = scalar_lea.vmem %s6, %s409
        %p411 = pneg %p197
        %p412 = pneg %p194
        %p413 = scmp.lt.s32.totalorder %s28, 1
        %s414 = scalar_select %p413, %s28, 1
        %s415 = smul.addr %s414, 2
        %s416 = smul.addr %s415, 8
        %s417 = scalar_lea.vmem %s7, %s416
        %p418 = pneg %p223
        %p419 = pneg %p220
        %p420 = scmp.lt.s32.totalorder %s28, 1
        %s421 = scalar_select %p420, %s28, 1
        %s422 = scalar_lea.vmem %s8, %s421
        %p423 = pneg %p249
        %p424 = pneg %p246
        %p425 = pneg %p275
        %p426 = pneg %p272
        %s427 = smul.u32 2, %s27
        %p428 = scmp.lt.s32.totalorder %s427, 1
        %s429 = scalar_select %p428, %s427, 1
        %s430 = smul.addr %s429, 8
        %s431 = scalar_lea.vmem %s9, %s430
        %s432 = smul.u32 2, %s27
        %p433 = scmp.lt.s32.totalorder %s432, 1
        %s434 = scalar_select %p433, %s432, 1
        %s435 = smul.addr %s434, 8
        %s436 = scalar_lea.vmem %s0, %s435
        %s437 = smul.u32 2, %s27
        %p438 = scmp.lt.s32.totalorder %s28, 1
        %s439 = scalar_select %p438, %s28, 1
        %s440 = smul.addr %s439, 16
        %s441 = smul.addr %s440, 8
        %s442 = scalar_lea.vmem %s4, %s441
        %p443 = scmp.lt.s32.totalorder %s28, 1
        %s444 = scalar_select %p443, %s28, 1
        %s445 = smul.addr %s444, 8
        %s446 = smul.addr %s445, 8
        %s447 = scalar_lea.vmem %s6, %s446
        %p448 = scmp.lt.s32.totalorder %s28, 1
        %s449 = scalar_select %p448, %s28, 1
        %s450 = smul.addr %s449, 2
        %s451 = smul.addr %s450, 8
        %s452 = scalar_lea.vmem %s7, %s451
        %p453 = scmp.lt.s32.totalorder %s28, 1
        %s454 = scalar_select %p453, %s28, 1
        %s455 = scalar_lea.vmem %s8, %s454
        %s456 = smul.u32 2, %s27
        %p457 = scmp.lt.s32.totalorder %s456, 1
        %s458 = scalar_select %p457, %s456, 1
        %s459 = smul.addr %s458, 8
        %s460 = scalar_lea.vmem %s9, %s459
        %s461 = smul.u32 2, %s27
        %p462 = scmp.eq.s32.totalorder %s28, 0
        // Predicated region
        $region61: #{tpu_custom_call.1} parent=55 // pred_check
          %p463 = pneg %p462
        $region62: #{tpu_custom_call.1} parent=55 // pred_check_branch
          %465 = sbr.rel (%p463) target = $region64
        $region63: #{tpu_custom_call.1} parent=55 // pred_region
          %v466 = vld [vmem:[%s436] sm:$0xff]
          %v467 = vld [vmem:[%s436 + $0x8] sm:$0xff]
          %v468 = vld [vmem:[%s1] sm:$0xff]
          %v469 = vld [vmem:[%s1 + $0x8] sm:$0xff]
          %v470 = vld [vmem:[%s2] sm:$0x1]
          %v471 = vlaneseq
          %v472 = vshrl.u32 %v471, 7
          %v473 = vsub.s32 0, %v472
          %v474 = vrot.slane %v470, %v473
          %vm475 = vcmask 130048
          %v477 = vsel %vm475, %v466, 0
          %v480 = vsel %vm475, %v467, 0
          %482 = vmatprep.subr.mxu0 0.0
          %483 = vmatpush1.msra.mxu0 %v468
          %484 = vmatprep.subr.mxu0 0.0
          %485 = vmatpush1.msra.mxu0 %v469
          %486 = vmatprep.subr.mxu0 0.0
          %487 = vmatpush1.msra.mxu0 0.0
          %488 = vmatprep.subr.mxu0 0.0
          %489 = vmatpush1.msra.mxu0 0.0
          %490 = vmatprep.subr.mxu0 0.0
          %491 = vmatpush1.msra.mxu0 0.0
          %492 = vmatprep.subr.mxu0 0.0
          %493 = vmatpush1.msra.mxu0 0.0
          %494 = vmatprep.subr.mxu0 0.0
          %495 = vmatpush1.msra.mxu0 0.0
          %496 = vmatprep.subr.mxu0 0.0
          %497 = vmatpush1.msra.mxu0 0.0
          %498 = vmatprep.subr.mxu0 0.0
          %499 = vmatpush1.msra.mxu0 0.0
          %500 = vmatprep.subr.mxu0 0.0
          %501 = vmatpush1.msra.mxu0 0.0
          %502 = vmatprep.subr.mxu0 0.0
          %503 = vmatpush1.msra.mxu0 0.0
          %504 = vmatprep.subr.mxu0 0.0
          %505 = vmatpush1.msra.mxu0 0.0
          %506 = vmatprep.subr.mxu0 0.0
          %507 = vmatpush1.msra.mxu0 0.0
          %508 = vmatprep.subr.mxu0 0.0
          %509 = vmatpush1.msra.mxu0 0.0
          %510 = vmatprep.subr.mxu0 0.0
          %511 = vmatpush1.msra.mxu0 0.0
          %512 = vmatprep.subr.mxu0 0.0
          %513 = vmatpush1.msra.mxu0 0.0
          %514 = vmatprep.subr.mxu0 0.0
          %515 = vmatpush1.msra.mxu0 0.0
          %516 = vmatprep.subr.mxu0 0.0
          %517 = vmatpush1.msra.mxu0 0.0
          %518 = vmatprep.subr.mxu0 0.0
          %519 = vmatpush1.msra.mxu0 0.0
          %520 = vmatprep.subr.mxu0 0.0
          %521 = vmatpush1.msra.mxu0 0.0
          %522 = vmatprep.subr.mxu0 0.0
          %523 = vmatpush1.msra.mxu0 0.0
          %524 = vmatprep.subr.mxu0 0.0
          %525 = vmatpush1.msra.mxu0 0.0
          %526 = vmatprep.subr.mxu0 0.0
          %527 = vmatpush1.msra.mxu0 0.0
          %528 = vmatprep.subr.mxu0 0.0
          %529 = vmatpush1.msra.mxu0 0.0
          %530 = vmatprep.subr.mxu0 0.0
          %531 = vmatpush1.msra.mxu0 0.0
          %532 = vmatprep.subr.mxu0 0.0
          %533 = vmatpush1.msra.mxu0 0.0
          %534 = vmatprep.subr.mxu0 0.0
          %535 = vmatpush1.msra.mxu0 0.0
          %536 = vmatprep.subr.mxu0 0.0
          %537 = vmatpush1.msra.mxu0 0.0
          %538 = vmatprep.subr.mxu0 0.0
          %539 = vmatpush1.msra.mxu0 0.0
          %540 = vmatprep.subr.mxu0 0.0
          %541 = vmatpush1.msra.mxu0 0.0
          %542 = vmatprep.subr.mxu0 0.0
          %543 = vmatpush1.msra.mxu0 0.0
          %544 = vmatprep.subr.mxu0 0.0
          %545 = vmatpush1.msra.mxu0 0.0
          %546 = vmatprep.mubr.f32.mxu0 0.0
          %547 = vmatmul.mubr.f32.gmra.mrb[0].mxu0 %v477
          %v548 = vpop.f32.mrb[0].mxu0
          %v549 = vadd.f32 %v474, %v548
          %v550 = vpop.f32.mrb[0].mxu0
          %551 = vmatprep.mubr.f32.mxu0 0.0
          %552 = vmatmul.mubr.f32.gmra.mrb[0].mxu0 %v480
          %v553 = vpop.f32.mrb[0].mxu0
          %v554 = vadd.f32 %v474, %v553
          %v555 = vpop.f32.mrb[0].mxu0
          %556 = vdwg.mxu0
          %vm557 = vcmask 261120
          %558 = vst.msk [vmem:[#allocation2] sm:$0xff] %vm557, %v549
          %559 = vst.msk [vmem:[#allocation2 + $0x8] sm:$0xff] %vm557, %v554
        $region64: #{tpu_custom_call.1} parent=55 // pred_fallthru
          _
        %v560 = vld [vmem:[#allocation2] sm:$0xff]
        %v561 = vld [vmem:[#allocation2 + $0x8] sm:$0xff]
        %v562 = vld [vmem:[%s442] sm:$0xff]
        %v563 = vld [vmem:[%s442 + $0x8] sm:$0xff]
        %v564 = vld [vmem:[%s442 + $0x10] sm:$0xff]
        %v565 = vld [vmem:[%s442 + $0x18] sm:$0xff]
        %s566 = scalar_lea.vmem %s442, 32
        %v567 = vld [vmem:[%s566] sm:$0xff]
        %v568 = vld [vmem:[%s566 + $0x8] sm:$0xff]
        %v569 = vld [vmem:[%s566 + $0x10] sm:$0xff]
        %v570 = vld [vmem:[%s566 + $0x18] sm:$0xff]
        %s571 = scalar_lea.vmem %s442, 64
        %v572 = vld [vmem:[%s571] sm:$0xff]
        %v573 = vld [vmem:[%s571 + $0x8] sm:$0xff]
        %v574 = vld [vmem:[%s571 + $0x10] sm:$0xff]
        %v575 = vld [vmem:[%s571 + $0x18] sm:$0xff]
        %s576 = scalar_lea.vmem %s442, 96
        %v577 = vld [vmem:[%s576] sm:$0xff]
        %v578 = vld [vmem:[%s576 + $0x8] sm:$0xff]
        %v579 = vld [vmem:[%s576 + $0x10] sm:$0xff]
        %v580 = vld [vmem:[%s576 + $0x18] sm:$0xff]
        %v581 = vld [vmem:[%s452] sm:$0x1]
        %v582 = vld [vmem:[%s452 + $0x1] sm:$0x1]
        %v583 = vld [vmem:[%s452 + $0x2] sm:$0x1]
        %v584 = vld [vmem:[%s452 + $0x3] sm:$0x1]
        %v585 = vld [vmem:[%s452 + $0x4] sm:$0x1]
        %v586 = vld [vmem:[%s452 + $0x5] sm:$0x1]
        %v587 = vld [vmem:[%s452 + $0x6] sm:$0x1]
        %v588 = vld [vmem:[%s452 + $0x7] sm:$0x1]
        %v589 = vld [vmem:[%s452 + $0x8] sm:$0x1]
        %v590 = vld [vmem:[%s455] sm:$0x1]
        %v591 = vlaneseq
        %v592 = vshrl.u32 %v591, 7
        %v593 = vsub.s32 0, %v592
        %v594 = vrot.slane %v581, %v593
        %vm595 = vcmask 261120
        %v597 = vsel %vm595, %v560, 0
        %v600 = vsel %vm595, %v561, 0
        %602 = vmatprep.subr.mxu0 0.0
        %603 = vmatpush1.msra.mxu0 %v562
        %604 = vmatprep.subr.mxu0 0.0
        %605 = vmatpush1.msra.mxu0 %v563
        %606 = vmatprep.subr.mxu0 0.0
        %607 = vmatpush1.msra.mxu0 %v564
        %608 = vmatprep.subr.mxu0 0.0
        %609 = vmatpush1.msra.mxu0 %v565
        %610 = vmatprep.subr.mxu0 0.0
        %611 = vmatpush1.msra.mxu0 0.0
        %612 = vmatprep.subr.mxu0 0.0
        %613 = vmatpush1.msra.mxu0 0.0
        %614 = vmatprep.subr.mxu0 0.0
        %615 = vmatpush1.msra.mxu0 0.0
        %616 = vmatprep.subr.mxu0 0.0
        %617 = vmatpush1.msra.mxu0 0.0
        %618 = vmatprep.subr.mxu0 0.0
        %619 = vmatpush1.msra.mxu0 0.0
        %620 = vmatprep.subr.mxu0 0.0
        %621 = vmatpush1.msra.mxu0 0.0
        %622 = vmatprep.subr.mxu0 0.0
        %623 = vmatpush1.msra.mxu0 0.0
        %624 = vmatprep.subr.mxu0 0.0
        %625 = vmatpush1.msra.mxu0 0.0
        %626 = vmatprep.subr.mxu0 0.0
        %627 = vmatpush1.msra.mxu0 0.0
        %628 = vmatprep.subr.mxu0 0.0
        %629 = vmatpush1.msra.mxu0 0.0
        %630 = vmatprep.subr.mxu0 0.0
        %631 = vmatpush1.msra.mxu0 0.0
        %632 = vmatprep.subr.mxu0 0.0
        %633 = vmatpush1.msra.mxu0 0.0
        %634 = vmatprep.subr.mxu0 0.0
        %635 = vmatpush1.msra.mxu0 0.0
        %636 = vmatprep.subr.mxu0 0.0
        %637 = vmatpush1.msra.mxu0 0.0
        %638 = vmatprep.subr.mxu0 0.0
        %639 = vmatpush1.msra.mxu0 0.0
        %640 = vmatprep.subr.mxu0 0.0
        %641 = vmatpush1.msra.mxu0 0.0
        %642 = vmatprep.subr.mxu0 0.0
        %643 = vmatpush1.msra.mxu0 0.0
        %644 = vmatprep.subr.mxu0 0.0
        %645 = vmatpush1.msra.mxu0 0.0
        %646 = vmatprep.subr.mxu0 0.0
        %647 = vmatpush1.msra.mxu0 0.0
        %648 = vmatprep.subr.mxu0 0.0
        %649 = vmatpush1.msra.mxu0 0.0
        %650 = vmatprep.subr.mxu0 0.0
        %651 = vmatpush1.msra.mxu0 0.0
        %652 = vmatprep.subr.mxu0 0.0
        %653 = vmatpush1.msra.mxu0 0.0
        %654 = vmatprep.subr.mxu0 0.0
        %655 = vmatpush1.msra.mxu0 0.0
        %656 = vmatprep.subr.mxu0 0.0
        %657 = vmatpush1.msra.mxu0 0.0
        %658 = vmatprep.subr.mxu0 0.0
        %659 = vmatpush1.msra.mxu0 0.0
        %660 = vmatprep.subr.mxu0 0.0
        %661 = vmatpush1.msra.mxu0 0.0
        %662 = vmatprep.subr.mxu0 0.0
        %663 = vmatpush1.msra.mxu0 0.0
        %664 = vmatprep.subr.mxu0 0.0
        %665 = vmatpush1.msra.mxu0 0.0
        %666 = vmatprep.mubr.f32.mxu0 0.0
        %667 = vmatmul.mubr.f32.gmra.mrb[0].mxu0 %v597
        %v668 = vpop.f32.mrb[0].mxu0
        %v669 = vadd.f32 %v594, %v668
        %v670 = vpop.f32.mrb[0].mxu0
        %671 = vmatprep.mubr.f32.mxu0 0.0
        %672 = vmatmul.mubr.f32.gmra.mrb[0].mxu0 %v600
        %v673 = vpop.f32.mrb[0].mxu0
        %v674 = vadd.f32 %v594, %v673
        %v675 = vpop.f32.mrb[0].mxu0
        %676 = vdwg.mxu0
        %v677 = vlaneseq
        %v678 = vshrl.u32 %v677, 7
        %v679 = vsub.s32 0, %v678
        %v680 = vrot.slane %v582, %v679
        %681 = vmatprep.subr.mxu0 0.0
        %682 = vmatpush1.msra.mxu0 %v567
        %683 = vmatprep.subr.mxu0 0.0
        %684 = vmatpush1.msra.mxu0 %v568
        %685 = vmatprep.subr.mxu0 0.0
        %686 = vmatpush1.msra.mxu0 %v569
        %687 = vmatprep.subr.mxu0 0.0
        %688 = vmatpush1.msra.mxu0 %v570
        %689 = vmatprep.subr.mxu0 0.0
        %690 = vmatpush1.msra.mxu0 0.0
        %691 = vmatprep.subr.mxu0 0.0
        %692 = vmatpush1.msra.mxu0 0.0
        %693 = vmatprep.subr.mxu0 0.0
        %694 = vmatpush1.msra.mxu0 0.0
        %695 = vmatprep.subr.mxu0 0.0
        %696 = vmatpush1.msra.mxu0 0.0
        %697 = vmatprep.subr.mxu0 0.0
        %698 = vmatpush1.msra.mxu0 0.0
        %699 = vmatprep.subr.mxu0 0.0
        %700 = vmatpush1.msra.mxu0 0.0
        %701 = vmatprep.subr.mxu0 0.0
        %702 = vmatpush1.msra.mxu0 0.0
        %703 = vmatprep.subr.mxu0 0.0
        %704 = vmatpush1.msra.mxu0 0.0
        %705 = vmatprep.subr.mxu0 0.0
        %706 = vmatpush1.msra.mxu0 0.0
        %707 = vmatprep.subr.mxu0 0.0
        %708 = vmatpush1.msra.mxu0 0.0
        %709 = vmatprep.subr.mxu0 0.0
        %710 = vmatpush1.msra.mxu0 0.0
        %711 = vmatprep.subr.mxu0 0.0
        %712 = vmatpush1.msra.mxu0 0.0
        %713 = vmatprep.subr.mxu0 0.0
        %714 = vmatpush1.msra.mxu0 0.0
        %715 = vmatprep.subr.mxu0 0.0
        %716 = vmatpush1.msra.mxu0 0.0
        %717 = vmatprep.subr.mxu0 0.0
        %718 = vmatpush1.msra.mxu0 0.0
        %719 = vmatprep.subr.mxu0 0.0
        %720 = vmatpush1.msra.mxu0 0.0
        %721 = vmatprep.subr.mxu0 0.0
        %722 = vmatpush1.msra.mxu0 0.0
        %723 = vmatprep.subr.mxu0 0.0
        %724 = vmatpush1.msra.mxu0 0.0
        %725 = vmatprep.subr.mxu0 0.0
        %726 = vmatpush1.msra.mxu0 0.0
        %727 = vmatprep.subr.mxu0 0.0
        %728 = vmatpush1.msra.mxu0 0.0
        %729 = vmatprep.subr.mxu0 0.0
        %730 = vmatpush1.msra.mxu0 0.0
        %731 = vmatprep.subr.mxu0 0.0
        %732 = vmatpush1.msra.mxu0 0.0
        %733 = vmatprep.subr.mxu0 0.0
        %734 = vmatpush1.msra.mxu0 0.0
        %735 = vmatprep.subr.mxu0 0.0
        %736 = vmatpush1.msra.mxu0 0.0
        %737 = vmatprep.subr.mxu0 0.0
        %738 = vmatpush1.msra.mxu0 0.0
        %739 = vmatprep.subr.mxu0 0.0
        %740 = vmatpush1.msra.mxu0 0.0
        %741 = vmatprep.subr.mxu0 0.0
        %742 = vmatpush1.msra.mxu0 0.0
        %743 = vmatprep.subr.mxu0 0.0
        %744 = vmatpush1.msra.mxu0 0.0
        %745 = vmatprep.mubr.f32.mxu0 0.0
        %746 = vmatmul.mubr.f32.gmra.mrb[0].mxu0 %v597
        %v747 = vpop.f32.mrb[0].mxu0
        %v748 = vadd.f32 %v680, %v747
        %v749 = vpop.f32.mrb[0].mxu0
        %750 = vmatprep.mubr.f32.mxu0 0.0
        %751 = vmatmul.mubr.f32.gmra.mrb[0].mxu0 %v600
        %v752 = vpop.f32.mrb[0].mxu0
        %v753 = vadd.f32 %v680, %v752
        %v754 = vpop.f32.mrb[0].mxu0
        %755 = vdwg.mxu0
        %v756 = vlaneseq
        %v757 = vshrl.u32 %v756, 7
        %v758 = vsub.s32 0, %v757
        %v759 = vrot.slane %v583, %v758
        %760 = vmatprep.subr.mxu0 0.0
        %761 = vmatpush1.msra.mxu0 %v572
        %762 = vmatprep.subr.mxu0 0.0
        %763 = vmatpush1.msra.mxu0 %v573
        %764 = vmatprep.subr.mxu0 0.0
        %765 = vmatpush1.msra.mxu0 %v574
        %766 = vmatprep.subr.mxu0 0.0
        %767 = vmatpush1.msra.mxu0 %v575
        %768 = vmatprep.subr.mxu0 0.0
        %769 = vmatpush1.msra.mxu0 0.0
        %770 = vmatprep.subr.mxu0 0.0
        %771 = vmatpush1.msra.mxu0 0.0
        %772 = vmatprep.subr.mxu0 0.0
        %773 = vmatpush1.msra.mxu0 0.0
        %774 = vmatprep.subr.mxu0 0.0
        %775 = vmatpush1.msra.mxu0 0.0
        %776 = vmatprep.subr.mxu0 0.0
        %777 = vmatpush1.msra.mxu0 0.0
        %778 = vmatprep.subr.mxu0 0.0
        %779 = vmatpush1.msra.mxu0 0.0
        %780 = vmatprep.subr.mxu0 0.0
        %781 = vmatpush1.msra.mxu0 0.0
        %782 = vmatprep.subr.mxu0 0.0
        %783 = vmatpush1.msra.mxu0 0.0
        %784 = vmatprep.subr.mxu0 0.0
        %785 = vmatpush1.msra.mxu0 0.0
        %786 = vmatprep.subr.mxu0 0.0
        %787 = vmatpush1.msra.mxu0 0.0
        %788 = vmatprep.subr.mxu0 0.0
        %789 = vmatpush1.msra.mxu0 0.0
        %790 = vmatprep.subr.mxu0 0.0
        %791 = vmatpush1.msra.mxu0 0.0
        %792 = vmatprep.subr.mxu0 0.0
        %793 = vmatpush1.msra.mxu0 0.0
        %794 = vmatprep.subr.mxu0 0.0
        %795 = vmatpush1.msra.mxu0 0.0
        %796 = vmatprep.subr.mxu0 0.0
        %797 = vmatpush1.msra.mxu0 0.0
        %798 = vmatprep.subr.mxu0 0.0
        %799 = vmatpush1.msra.mxu0 0.0
        %800 = vmatprep.subr.mxu0 0.0
        %801 = vmatpush1.msra.mxu0 0.0
        %802 = vmatprep.subr.mxu0 0.0
        %803 = vmatpush1.msra.mxu0 0.0
        %804 = vmatprep.subr.mxu0 0.0
        %805 = vmatpush1.msra.mxu0 0.0
        %806 = vmatprep.subr.mxu0 0.0
        %807 = vmatpush1.msra.mxu0 0.0
        %808 = vmatprep.subr.mxu0 0.0
        %809 = vmatpush1.msra.mxu0 0.0
        %810 = vmatprep.subr.mxu0 0.0
        %811 = vmatpush1.msra.mxu0 0.0
        %812 = vmatprep.subr.mxu0 0.0
        %813 = vmatpush1.msra.mxu0 0.0
        %814 = vmatprep.subr.mxu0 0.0
        %815 = vmatpush1.msra.mxu0 0.0
        %816 = vmatprep.subr.mxu0 0.0
        %817 = vmatpush1.msra.mxu0 0.0
        %818 = vmatprep.subr.mxu0 0.0
        %819 = vmatpush1.msra.mxu0 0.0
        %820 = vmatprep.subr.mxu0 0.0
        %821 = vmatpush1.msra.mxu0 0.0
        %822 = vmatprep.subr.mxu0 0.0
        %823 = vmatpush1.msra.mxu0 0.0
        %824 = vmatprep.mubr.f32.mxu0 0.0
        %825 = vmatmul.mubr.f32.gmra.mrb[0].mxu0 %v597
        %v826 = vpop.f32.mrb[0].mxu0
        %v827 = vadd.f32 %v759, %v826
        %v828 = vpop.f32.mrb[0].mxu0
        %829 = vmatprep.mubr.f32.mxu0 0.0
        %830 = vmatmul.mubr.f32.gmra.mrb[0].mxu0 %v600
        %v831 = vpop.f32.mrb[0].mxu0
        %v832 = vadd.f32 %v759, %v831
        %v833 = vpop.f32.mrb[0].mxu0
        %834 = vdwg.mxu0
        %v835 = vlaneseq
        %v836 = vand.u32 %v835, 127
        %vm837 = vcmp.ge.s32.totalorder %v836, 0
        %vm838 = vcmp.lt.s32.totalorder %v836, 8
        %vm839 = vmand %vm837, %vm838
        %v840 = vsel %vm839, 1, 0
        %v841 = vcvt.s32.f32 %v840
        %v842 = vmul.f32 %v669, %v841
        %v843 = vmul.f32 %v674, %v841
        %v845 = vsel %vm595, %v842, 0
        %v848 = vsel %vm595, %v748, 0
        %850 = vmatprep.subr.mxu0 0.0
        %851 = vmatpush1.xpose.msra.mxu0 %v848
        %852 = vmatprep.subr.mxu0 0.0
        %853 = vmatpush1.xpose.msra.mxu0 0.0
        %854 = vmatprep.subr.mxu0 0.0
        %855 = vmatpush1.xpose.msra.mxu0 0.0
        %856 = vmatprep.subr.mxu0 0.0
        %857 = vmatpush1.xpose.msra.mxu0 0.0
        %858 = vmatprep.subr.mxu0 0.0
        %859 = vmatpush1.xpose.msra.mxu0 0.0
        %860 = vmatprep.subr.mxu0 0.0
        %861 = vmatpush1.xpose.msra.mxu0 0.0
        %862 = vmatprep.subr.mxu0 0.0
        %863 = vmatpush1.xpose.msra.mxu0 0.0
        %864 = vmatprep.subr.mxu0 0.0
        %865 = vmatpush1.xpose.msra.mxu0 0.0
        %866 = vmatprep.subr.mxu0 0.0
        %867 = vmatpush1.xpose.msra.mxu0 0.0
        %868 = vmatprep.subr.mxu0 0.0
        %869 = vmatpush1.xpose.msra.mxu0 0.0
        %870 = vmatprep.subr.mxu0 0.0
        %871 = vmatpush1.xpose.msra.mxu0 0.0
        %872 = vmatprep.subr.mxu0 0.0
        %873 = vmatpush1.xpose.msra.mxu0 0.0
        %874 = vmatprep.subr.mxu0 0.0
        %875 = vmatpush1.xpose.msra.mxu0 0.0
        %876 = vmatprep.subr.mxu0 0.0
        %877 = vmatpush1.xpose.msra.mxu0 0.0
        %878 = vmatprep.subr.mxu0 0.0
        %879 = vmatpush1.xpose.msra.mxu0 0.0
        %880 = vmatprep.subr.mxu0 0.0
        %881 = vmatpush1.xpose.msra.mxu0 0.0
        %882 = vmatprep.subr.mxu0 0.0
        %883 = vmatpush1.xpose.msra.mxu0 0.0
        %884 = vmatprep.subr.mxu0 0.0
        %885 = vmatpush1.xpose.msra.mxu0 0.0
        %886 = vmatprep.subr.mxu0 0.0
        %887 = vmatpush1.xpose.msra.mxu0 0.0
        %888 = vmatprep.subr.mxu0 0.0
        %889 = vmatpush1.xpose.msra.mxu0 0.0
        %890 = vmatprep.subr.mxu0 0.0
        %891 = vmatpush1.xpose.msra.mxu0 0.0
        %892 = vmatprep.subr.mxu0 0.0
        %893 = vmatpush1.xpose.msra.mxu0 0.0
        %894 = vmatprep.subr.mxu0 0.0
        %895 = vmatpush1.xpose.msra.mxu0 0.0
        %896 = vmatprep.subr.mxu0 0.0
        %897 = vmatpush1.xpose.msra.mxu0 0.0
        %898 = vmatprep.subr.mxu0 0.0
        %899 = vmatpush1.xpose.msra.mxu0 0.0
        %900 = vmatprep.subr.mxu0 0.0
        %901 = vmatpush1.xpose.msra.mxu0 0.0
        %902 = vmatprep.subr.mxu0 0.0
        %903 = vmatpush1.xpose.msra.mxu0 0.0
        %904 = vmatprep.subr.mxu0 0.0
        %905 = vmatpush1.xpose.msra.mxu0 0.0
        %906 = vmatprep.subr.mxu0 0.0
        %907 = vmatpush1.xpose.msra.mxu0 0.0
        %908 = vmatprep.subr.mxu0 0.0
        %909 = vmatpush1.xpose.msra.mxu0 0.0
        %910 = vmatprep.subr.mxu0 0.0
        %911 = vmatpush1.xpose.msra.mxu0 0.0
        %912 = vmatprep.subr.mxu0 0.0
        %913 = vmatpush1.xpose.msra.mxu0 0.0
        %914 = vmatprep.mubr.f32.mxu0 0.0
        %915 = vmatmul.mubr.f32.gmra.mrb[0].mxu0 %v845
        %v916 = vpop.f32.mrb[0].mxu0
        %v917 = vadd.f32 0.0, %v916
        %v918 = vpop.f32.mrb[0].mxu0
        %919 = vdwg.mxu0
        %v921 = vsel %vm595, %v843, 0
        %v924 = vsel %vm595, %v753, 0
        %926 = vmatprep.subr.mxu0 0.0
        %927 = vmatpush1.xpose.msra.mxu0 %v924
        %928 = vmatprep.subr.mxu0 0.0
        %929 = vmatpush1.xpose.msra.mxu0 0.0
        %930 = vmatprep.subr.mxu0 0.0
        %931 = vmatpush1.xpose.msra.mxu0 0.0
        %932 = vmatprep.subr.mxu0 0.0
        %933 = vmatpush1.xpose.msra.mxu0 0.0
        %934 = vmatprep.subr.mxu0 0.0
        %935 = vmatpush1.xpose.msra.mxu0 0.0
        %936 = vmatprep.subr.mxu0 0.0
        %937 = vmatpush1.xpose.msra.mxu0 0.0
        %938 = vmatprep.subr.mxu0 0.0
        %939 = vmatpush1.xpose.msra.mxu0 0.0
        %940 = vmatprep.subr.mxu0 0.0
        %941 = vmatpush1.xpose.msra.mxu0 0.0
        %942 = vmatprep.subr.mxu0 0.0
        %943 = vmatpush1.xpose.msra.mxu0 0.0
        %944 = vmatprep.subr.mxu0 0.0
        %945 = vmatpush1.xpose.msra.mxu0 0.0
        %946 = vmatprep.subr.mxu0 0.0
        %947 = vmatpush1.xpose.msra.mxu0 0.0
        %948 = vmatprep.subr.mxu0 0.0
        %949 = vmatpush1.xpose.msra.mxu0 0.0
        %950 = vmatprep.subr.mxu0 0.0
        %951 = vmatpush1.xpose.msra.mxu0 0.0
        %952 = vmatprep.subr.mxu0 0.0
        %953 = vmatpush1.xpose.msra.mxu0 0.0
        %954 = vmatprep.subr.mxu0 0.0
        %955 = vmatpush1.xpose.msra.mxu0 0.0
        %956 = vmatprep.subr.mxu0 0.0
        %957 = vmatpush1.xpose.msra.mxu0 0.0
        %958 = vmatprep.subr.mxu0 0.0
        %959 = vmatpush1.xpose.msra.mxu0 0.0
        %960 = vmatprep.subr.mxu0 0.0
        %961 = vmatpush1.xpose.msra.mxu0 0.0
        %962 = vmatprep.subr.mxu0 0.0
        %963 = vmatpush1.xpose.msra.mxu0 0.0
        %964 = vmatprep.subr.mxu0 0.0
        %965 = vmatpush1.xpose.msra.mxu0 0.0
        %966 = vmatprep.subr.mxu0 0.0
        %967 = vmatpush1.xpose.msra.mxu0 0.0
        %968 = vmatprep.subr.mxu0 0.0
        %969 = vmatpush1.xpose.msra.mxu0 0.0
        %970 = vmatprep.subr.mxu0 0.0
        %971 = vmatpush1.xpose.msra.mxu0 0.0
        %972 = vmatprep.subr.mxu0 0.0
        %973 = vmatpush1.xpose.msra.mxu0 0.0
        %974 = vmatprep.subr.mxu0 0.0
        %975 = vmatpush1.xpose.msra.mxu0 0.0
        %976 = vmatprep.subr.mxu0 0.0
        %977 = vmatpush1.xpose.msra.mxu0 0.0
        %978 = vmatprep.subr.mxu0 0.0
        %979 = vmatpush1.xpose.msra.mxu0 0.0
        %980 = vmatprep.subr.mxu0 0.0
        %981 = vmatpush1.xpose.msra.mxu0 0.0
        %982 = vmatprep.subr.mxu0 0.0
        %983 = vmatpush1.xpose.msra.mxu0 0.0
        %984 = vmatprep.subr.mxu0 0.0
        %985 = vmatpush1.xpose.msra.mxu0 0.0
        %986 = vmatprep.subr.mxu0 0.0
        %987 = vmatpush1.xpose.msra.mxu0 0.0
        %988 = vmatprep.subr.mxu0 0.0
        %989 = vmatpush1.xpose.msra.mxu0 0.0
        %990 = vmatprep.mubr.f32.mxu0 0.0
        %991 = vmatmul.mubr.f32.gmra.mrb[0].mxu0 %v921
        %v992 = vpop.f32.mrb[0].mxu0
        %v993 = vadd.f32 0.0, %v992
        %v994 = vpop.f32.mrb[0].mxu0
        %995 = vdwg.mxu0
        %vm996 = vcmask 64512
        %v997 = vsel %vm996, %v917, -inf
        %998 = vmax.xlane.f32.xlu0 %v997
        %v999 = vpop.xlane.xlu0 %998
        %v1000 = vsel %vm996, %v993, -inf
        %1001 = vmax.xlane.f32.xlu0 %v1000
        %v1002 = vpop.xlane.xlu0 %1001
        %v1003 = vsub.f32 %v917, %v999
        %v1004 = vsub.f32 %v993, %v1002
        %v1005 = vmul.f32 %v1003, 1.442695
        %v1006 = vpow.pop %v1005
        %v1007 = vmul.f32 %v1004, 1.442695
        %v1008 = vpow.pop %v1007
        %v1009 = vsel %vm996, %v1006, 0.0
        %1010 = vadd.xlane.f32.xlu0 %v1009
        %v1011 = vpop.xlane.xlu0 %1010
        %v1012 = vsel %vm996, %v1008, 0.0
        %1013 = vadd.xlane.f32.xlu0 %v1012
        %v1014 = vpop.xlane.xlu0 %1013
        %v1015 = vrcp.pop %v1011
        %v1016 = vrcp.pop %v1014
        %v1017 = vmul.f32 %v1006, %v1015
        %v1018 = vmul.f32 %v1008, %v1016
        %v1019 = vmul.f32 %v827, %v841
        %v1020 = vmul.f32 %v832, %v841
        %vm1021 = vcmp.ge.s32.totalorder %v836, 8
        %vm1022 = vcmp.lt.s32.totalorder %v836, 16
        %vm1023 = vmand %vm1021, %vm1022
        %v1024 = vsel %vm1023, 1, 0
        %v1025 = vcvt.s32.f32 %v1024
        %v1026 = vmul.f32 %v669, %v1025
        %v1027 = vmul.f32 %v674, %v1025
        %v1029 = vsel %vm595, %v1026, 0
        %1031 = vmatprep.subr.mxu0 0.0
        %1032 = vmatpush1.xpose.msra.mxu0 %v848
        %1033 = vmatprep.subr.mxu0 0.0
        %1034 = vmatpush1.xpose.msra.mxu0 0.0
        %1035 = vmatprep.subr.mxu0 0.0
        %1036 = vmatpush1.xpose.msra.mxu0 0.0
        %1037 = vmatprep.subr.mxu0 0.0
        %1038 = vmatpush1.xpose.msra.mxu0 0.0
        %1039 = vmatprep.subr.mxu0 0.0
        %1040 = vmatpush1.xpose.msra.mxu0 0.0
        %1041 = vmatprep.subr.mxu0 0.0
        %1042 = vmatpush1.xpose.msra.mxu0 0.0
        %1043 = vmatprep.subr.mxu0 0.0
        %1044 = vmatpush1.xpose.msra.mxu0 0.0
        %1045 = vmatprep.subr.mxu0 0.0
        %1046 = vmatpush1.xpose.msra.mxu0 0.0
        %1047 = vmatprep.subr.mxu0 0.0
        %1048 = vmatpush1.xpose.msra.mxu0 0.0
        %1049 = vmatprep.subr.mxu0 0.0
        %1050 = vmatpush1.xpose.msra.mxu0 0.0
        %1051 = vmatprep.subr.mxu0 0.0
        %1052 = vmatpush1.xpose.msra.mxu0 0.0
        %1053 = vmatprep.subr.mxu0 0.0
        %1054 = vmatpush1.xpose.msra.mxu0 0.0
        %1055 = vmatprep.subr.mxu0 0.0
        %1056 = vmatpush1.xpose.msra.mxu0 0.0
        %1057 = vmatprep.subr.mxu0 0.0
        %1058 = vmatpush1.xpose.msra.mxu0 0.0
        %1059 = vmatprep.subr.mxu0 0.0
        %1060 = vmatpush1.xpose.msra.mxu0 0.0
        %1061 = vmatprep.subr.mxu0 0.0
        %1062 = vmatpush1.xpose.msra.mxu0 0.0
        %1063 = vmatprep.subr.mxu0 0.0
        %1064 = vmatpush1.xpose.msra.mxu0 0.0
        %1065 = vmatprep.subr.mxu0 0.0
        %1066 = vmatpush1.xpose.msra.mxu0 0.0
        %1067 = vmatprep.subr.mxu0 0.0
        %1068 = vmatpush1.xpose.msra.mxu0 0.0
        %1069 = vmatprep.subr.mxu0 0.0
        %1070 = vmatpush1.xpose.msra.mxu0 0.0
        %1071 = vmatprep.subr.mxu0 0.0
        %1072 = vmatpush1.xpose.msra.mxu0 0.0
        %1073 = vmatprep.subr.mxu0 0.0
        %1074 = vmatpush1.xpose.msra.mxu0 0.0
        %1075 = vmatprep.subr.mxu0 0.0
        %1076 = vmatpush1.xpose.msra.mxu0 0.0
        %1077 = vmatprep.subr.mxu0 0.0
        %1078 = vmatpush1.xpose.msra.mxu0 0.0
        %1079 = vmatprep.subr.mxu0 0.0
        %1080 = vmatpush1.xpose.msra.mxu0 0.0
        %1081 = vmatprep.subr.mxu0 0.0
        %1082 = vmatpush1.xpose.msra.mxu0 0.0
        %1083 = vmatprep.subr.mxu0 0.0
        %1084 = vmatpush1.xpose.msra.mxu0 0.0
        %1085 = vmatprep.subr.mxu0 0.0
        %1086 = vmatpush1.xpose.msra.mxu0 0.0
        %1087 = vmatprep.subr.mxu0 0.0
        %1088 = vmatpush1.xpose.msra.mxu0 0.0
        %1089 = vmatprep.subr.mxu0 0.0
        %1090 = vmatpush1.xpose.msra.mxu0 0.0
        %1091 = vmatprep.subr.mxu0 0.0
        %1092 = vmatpush1.xpose.msra.mxu0 0.0
        %1093 = vmatprep.subr.mxu0 0.0
        %1094 = vmatpush1.xpose.msra.mxu0 0.0
        %1095 = vmatprep.mubr.f32.mxu0 0.0
        %1096 = vmatmul.mubr.f32.gmra.mrb[0].mxu0 %v1029
        %v1097 = vpop.f32.mrb[0].mxu0
        %v1098 = vadd.f32 0.0, %v1097
        %v1099 = vpop.f32.mrb[0].mxu0
        %1100 = vdwg.mxu0
        %v1102 = vsel %vm595, %v1027, 0
        %1104 = vmatprep.subr.mxu0 0.0
        %1105 = vmatpush1.xpose.msra.mxu0 %v924
        %1106 = vmatprep.subr.mxu0 0.0
        %1107 = vmatpush1.xpose.msra.mxu0 0.0
        %1108 = vmatprep.subr.mxu0 0.0
        %1109 = vmatpush1.xpose.msra.mxu0 0.0
        %1110 = vmatprep.subr.mxu0 0.0
        %1111 = vmatpush1.xpose.msra.mxu0 0.0
        %1112 = vmatprep.subr.mxu0 0.0
        %1113 = vmatpush1.xpose.msra.mxu0 0.0
        %1114 = vmatprep.subr.mxu0 0.0
        %1115 = vmatpush1.xpose.msra.mxu0 0.0
        %1116 = vmatprep.subr.mxu0 0.0
        %1117 = vmatpush1.xpose.msra.mxu0 0.0
        %1118 = vmatprep.subr.mxu0 0.0
        %1119 = vmatpush1.xpose.msra.mxu0 0.0
        %1120 = vmatprep.subr.mxu0 0.0
        %1121 = vmatpush1.xpose.msra.mxu0 0.0
        %1122 = vmatprep.subr.mxu0 0.0
        %1123 = vmatpush1.xpose.msra.mxu0 0.0
        %1124 = vmatprep.subr.mxu0 0.0
        %1125 = vmatpush1.xpose.msra.mxu0 0.0
        %1126 = vmatprep.subr.mxu0 0.0
        %1127 = vmatpush1.xpose.msra.mxu0 0.0
        %1128 = vmatprep.subr.mxu0 0.0
        %1129 = vmatpush1.xpose.msra.mxu0 0.0
        %1130 = vmatprep.subr.mxu0 0.0
        %1131 = vmatpush1.xpose.msra.mxu0 0.0
        %1132 = vmatprep.subr.mxu0 0.0
        %1133 = vmatpush1.xpose.msra.mxu0 0.0
        %1134 = vmatprep.subr.mxu0 0.0
        %1135 = vmatpush1.xpose.msra.mxu0 0.0
        %1136 = vmatprep.subr.mxu0 0.0
        %1137 = vmatpush1.xpose.msra.mxu0 0.0
        %1138 = vmatprep.subr.mxu0 0.0
        %1139 = vmatpush1.xpose.msra.mxu0 0.0
        %1140 = vmatprep.subr.mxu0 0.0
        %1141 = vmatpush1.xpose.msra.mxu0 0.0
        %1142 = vmatprep.subr.mxu0 0.0
        %1143 = vmatpush1.xpose.msra.mxu0 0.0
        %1144 = vmatprep.subr.mxu0 0.0
        %1145 = vmatpush1.xpose.msra.mxu0 0.0
        %1146 = vmatprep.subr.mxu0 0.0
        %1147 = vmatpush1.xpose.msra.mxu0 0.0
        %1148 = vmatprep.subr.mxu0 0.0
        %1149 = vmatpush1.xpose.msra.mxu0 0.0
        %1150 = vmatprep.subr.mxu0 0.0
        %1151 = vmatpush1.xpose.msra.mxu0 0.0
        %1152 = vmatprep.subr.mxu0 0.0
        %1153 = vmatpush1.xpose.msra.mxu0 0.0
        %1154 = vmatprep.subr.mxu0 0.0
        %1155 = vmatpush1.xpose.msra.mxu0 0.0
        %1156 = vmatprep.subr.mxu0 0.0
        %1157 = vmatpush1.xpose.msra.mxu0 0.0
        %1158 = vmatprep.subr.mxu0 0.0
        %1159 = vmatpush1.xpose.msra.mxu0 0.0
        %1160 = vmatprep.subr.mxu0 0.0
        %1161 = vmatpush1.xpose.msra.mxu0 0.0
        %1162 = vmatprep.subr.mxu0 0.0
        %1163 = vmatpush1.xpose.msra.mxu0 0.0
        %1164 = vmatprep.subr.mxu0 0.0
        %1165 = vmatpush1.xpose.msra.mxu0 0.0
        %1166 = vmatprep.subr.mxu0 0.0
        %1167 = vmatpush1.xpose.msra.mxu0 0.0
        %1168 = vmatprep.mubr.f32.mxu0 0.0
        %1169 = vmatmul.mubr.f32.gmra.mrb[0].mxu0 %v1102
        %v1170 = vpop.f32.mrb[0].mxu0
        %v1171 = vadd.f32 0.0, %v1170
        %v1172 = vpop.f32.mrb[0].mxu0
        %1173 = vdwg.mxu0
        %v1174 = vsel %vm996, %v1098, -inf
        %1175 = vmax.xlane.f32.xlu0 %v1174
        %v1176 = vpop.xlane.xlu0 %1175
        %v1177 = vsel %vm996, %v1171, -inf
        %1178 = vmax.xlane.f32.xlu0 %v1177
        %v1179 = vpop.xlane.xlu0 %1178
        %v1180 = vsub.f32 %v1098, %v1176
        %v1181 = vsub.f32 %v1171, %v1179
        %v1182 = vmul.f32 %v1180, 1.442695
        %v1183 = vpow.pop %v1182
        %v1184 = vmul.f32 %v1181, 1.442695
        %v1185 = vpow.pop %v1184
        %v1186 = vsel %vm996, %v1183, 0.0
        %1187 = vadd.xlane.f32.xlu0 %v1186
        %v1188 = vpop.xlane.xlu0 %1187
        %v1189 = vsel %vm996, %v1185, 0.0
        %1190 = vadd.xlane.f32.xlu0 %v1189
        %v1191 = vpop.xlane.xlu0 %1190
        %v1192 = vrcp.pop %v1188
        %v1193 = vrcp.pop %v1191
        %v1194 = vmul.f32 %v1183, %v1192
        %v1195 = vmul.f32 %v1185, %v1193
        %v1196 = vmul.f32 %v827, %v1025
        %v1197 = vmul.f32 %v832, %v1025
        %v1199 = vsel %vm996, %v1194, 0
        %1201 = vmatprep.subr.mxu0 0.0
        %1202 = vmatpush1.msra.mxu0 %v1196
        %1203 = vmatprep.subr.mxu0 0.0
        %1204 = vmatpush1.msra.mxu0 0.0
        %1205 = vmatprep.subr.mxu0 0.0
        %1206 = vmatpush1.msra.mxu0 0.0
        %1207 = vmatprep.subr.mxu0 0.0
        %1208 = vmatpush1.msra.mxu0 0.0
        %1209 = vmatprep.subr.mxu0 0.0
        %1210 = vmatpush1.msra.mxu0 0.0
        %1211 = vmatprep.subr.mxu0 0.0
        %1212 = vmatpush1.msra.mxu0 0.0
        %1213 = vmatprep.subr.mxu0 0.0
        %1214 = vmatpush1.msra.mxu0 0.0
        %1215 = vmatprep.subr.mxu0 0.0
        %1216 = vmatpush1.msra.mxu0 0.0
        %1217 = vmatprep.subr.mxu0 0.0
        %1218 = vmatpush1.msra.mxu0 0.0
        %1219 = vmatprep.subr.mxu0 0.0
        %1220 = vmatpush1.msra.mxu0 0.0
        %1221 = vmatprep.subr.mxu0 0.0
        %1222 = vmatpush1.msra.mxu0 0.0
        %1223 = vmatprep.subr.mxu0 0.0
        %1224 = vmatpush1.msra.mxu0 0.0
        %1225 = vmatprep.subr.mxu0 0.0
        %1226 = vmatpush1.msra.mxu0 0.0
        %1227 = vmatprep.subr.mxu0 0.0
        %1228 = vmatpush1.msra.mxu0 0.0
        %1229 = vmatprep.subr.mxu0 0.0
        %1230 = vmatpush1.msra.mxu0 0.0
        %1231 = vmatprep.subr.mxu0 0.0
        %1232 = vmatpush1.msra.mxu0 0.0
        %1233 = vmatprep.subr.mxu0 0.0
        %1234 = vmatpush1.msra.mxu0 0.0
        %1235 = vmatprep.subr.mxu0 0.0
        %1236 = vmatpush1.msra.mxu0 0.0
        %1237 = vmatprep.subr.mxu0 0.0
        %1238 = vmatpush1.msra.mxu0 0.0
        %1239 = vmatprep.subr.mxu0 0.0
        %1240 = vmatpush1.msra.mxu0 0.0
        %1241 = vmatprep.subr.mxu0 0.0
        %1242 = vmatpush1.msra.mxu0 0.0
        %1243 = vmatprep.subr.mxu0 0.0
        %1244 = vmatpush1.msra.mxu0 0.0
        %1245 = vmatprep.subr.mxu0 0.0
        %1246 = vmatpush1.msra.mxu0 0.0
        %1247 = vmatprep.subr.mxu0 0.0
        %1248 = vmatpush1.msra.mxu0 0.0
        %1249 = vmatprep.subr.mxu0 0.0
        %1250 = vmatpush1.msra.mxu0 0.0
        %1251 = vmatprep.subr.mxu0 0.0
        %1252 = vmatpush1.msra.mxu0 0.0
        %1253 = vmatprep.subr.mxu0 0.0
        %1254 = vmatpush1.msra.mxu0 0.0
        %1255 = vmatprep.subr.mxu0 0.0
        %1256 = vmatpush1.msra.mxu0 0.0
        %1257 = vmatprep.subr.mxu0 0.0
        %1258 = vmatpush1.msra.mxu0 0.0
        %1259 = vmatprep.subr.mxu0 0.0
        %1260 = vmatpush1.msra.mxu0 0.0
        %1261 = vmatprep.subr.mxu0 0.0
        %1262 = vmatpush1.msra.mxu0 0.0
        %1263 = vmatprep.subr.mxu0 0.0
        %1264 = vmatpush1.msra.mxu0 0.0
        %1265 = vmatprep.mubr.f32.mxu0 0.0
        %1266 = vmatmul.mubr.f32.gmra.mrb[0].mxu0 %v1199
        %v1267 = vpop.f32.mrb[0].mxu0
        %v1268 = vadd.f32 0.0, %v1267
        %v1269 = vpop.f32.mrb[0].mxu0
        %1270 = vdwg.mxu0
        %v1272 = vsel %vm996, %v1195, 0
        %1274 = vmatprep.subr.mxu0 0.0
        %1275 = vmatpush1.msra.mxu0 %v1197
        %1276 = vmatprep.subr.mxu0 0.0
        %1277 = vmatpush1.msra.mxu0 0.0
        %1278 = vmatprep.subr.mxu0 0.0
        %1279 = vmatpush1.msra.mxu0 0.0
        %1280 = vmatprep.subr.mxu0 0.0
        %1281 = vmatpush1.msra.mxu0 0.0
        %1282 = vmatprep.subr.mxu0 0.0
        %1283 = vmatpush1.msra.mxu0 0.0
        %1284 = vmatprep.subr.mxu0 0.0
        %1285 = vmatpush1.msra.mxu0 0.0
        %1286 = vmatprep.subr.mxu0 0.0
        %1287 = vmatpush1.msra.mxu0 0.0
        %1288 = vmatprep.subr.mxu0 0.0
        %1289 = vmatpush1.msra.mxu0 0.0
        %1290 = vmatprep.subr.mxu0 0.0
        %1291 = vmatpush1.msra.mxu0 0.0
        %1292 = vmatprep.subr.mxu0 0.0
        %1293 = vmatpush1.msra.mxu0 0.0
        %1294 = vmatprep.subr.mxu0 0.0
        %1295 = vmatpush1.msra.mxu0 0.0
        %1296 = vmatprep.subr.mxu0 0.0
        %1297 = vmatpush1.msra.mxu0 0.0
        %1298 = vmatprep.subr.mxu0 0.0
        %1299 = vmatpush1.msra.mxu0 0.0
        %1300 = vmatprep.subr.mxu0 0.0
        %1301 = vmatpush1.msra.mxu0 0.0
        %1302 = vmatprep.subr.mxu0 0.0
        %1303 = vmatpush1.msra.mxu0 0.0
        %1304 = vmatprep.subr.mxu0 0.0
        %1305 = vmatpush1.msra.mxu0 0.0
        %1306 = vmatprep.subr.mxu0 0.0
        %1307 = vmatpush1.msra.mxu0 0.0
        %1308 = vmatprep.subr.mxu0 0.0
        %1309 = vmatpush1.msra.mxu0 0.0
        %1310 = vmatprep.subr.mxu0 0.0
        %1311 = vmatpush1.msra.mxu0 0.0
        %1312 = vmatprep.subr.mxu0 0.0
        %1313 = vmatpush1.msra.mxu0 0.0
        %1314 = vmatprep.subr.mxu0 0.0
        %1315 = vmatpush1.msra.mxu0 0.0
        %1316 = vmatprep.subr.mxu0 0.0
        %1317 = vmatpush1.msra.mxu0 0.0
        %1318 = vmatprep.subr.mxu0 0.0
        %1319 = vmatpush1.msra.mxu0 0.0
        %1320 = vmatprep.subr.mxu0 0.0
        %1321 = vmatpush1.msra.mxu0 0.0
        %1322 = vmatprep.subr.mxu0 0.0
        %1323 = vmatpush1.msra.mxu0 0.0
        %1324 = vmatprep.subr.mxu0 0.0
        %1325 = vmatpush1.msra.mxu0 0.0
        %1326 = vmatprep.subr.mxu0 0.0
        %1327 = vmatpush1.msra.mxu0 0.0
        %1328 = vmatprep.subr.mxu0 0.0
        %1329 = vmatpush1.msra.mxu0 0.0
        %1330 = vmatprep.subr.mxu0 0.0
        %1331 = vmatpush1.msra.mxu0 0.0
        %1332 = vmatprep.subr.mxu0 0.0
        %1333 = vmatpush1.msra.mxu0 0.0
        %1334 = vmatprep.subr.mxu0 0.0
        %1335 = vmatpush1.msra.mxu0 0.0
        %1336 = vmatprep.subr.mxu0 0.0
        %1337 = vmatpush1.msra.mxu0 0.0
        %1338 = vmatprep.mubr.f32.mxu0 0.0
        %1339 = vmatmul.mubr.f32.gmra.mrb[0].mxu0 %v1272
        %v1340 = vpop.f32.mrb[0].mxu0
        %v1341 = vadd.f32 0.0, %v1340
        %v1342 = vpop.f32.mrb[0].mxu0
        %1343 = vdwg.mxu0
        %v1345 = vsel %vm996, %v1017, 0
        %1347 = vmatprep.subr.mxu0 0.0
        %1348 = vmatpush1.msra.mxu0 %v1019
        %1349 = vmatprep.subr.mxu0 0.0
        %1350 = vmatpush1.msra.mxu0 0.0
        %1351 = vmatprep.subr.mxu0 0.0
        %1352 = vmatpush1.msra.mxu0 0.0
        %1353 = vmatprep.subr.mxu0 0.0
        %1354 = vmatpush1.msra.mxu0 0.0
        %1355 = vmatprep.subr.mxu0 0.0
        %1356 = vmatpush1.msra.mxu0 0.0
        %1357 = vmatprep.subr.mxu0 0.0
        %1358 = vmatpush1.msra.mxu0 0.0
        %1359 = vmatprep.subr.mxu0 0.0
        %1360 = vmatpush1.msra.mxu0 0.0
        %1361 = vmatprep.subr.mxu0 0.0
        %1362 = vmatpush1.msra.mxu0 0.0
        %1363 = vmatprep.subr.mxu0 0.0
        %1364 = vmatpush1.msra.mxu0 0.0
        %1365 = vmatprep.subr.mxu0 0.0
        %1366 = vmatpush1.msra.mxu0 0.0
        %1367 = vmatprep.subr.mxu0 0.0
        %1368 = vmatpush1.msra.mxu0 0.0
        %1369 = vmatprep.subr.mxu0 0.0
        %1370 = vmatpush1.msra.mxu0 0.0
        %1371 = vmatprep.subr.mxu0 0.0
        %1372 = vmatpush1.msra.mxu0 0.0
        %1373 = vmatprep.subr.mxu0 0.0
        %1374 = vmatpush1.msra.mxu0 0.0
        %1375 = vmatprep.subr.mxu0 0.0
        %1376 = vmatpush1.msra.mxu0 0.0
        %1377 = vmatprep.subr.mxu0 0.0
        %1378 = vmatpush1.msra.mxu0 0.0
        %1379 = vmatprep.subr.mxu0 0.0
        %1380 = vmatpush1.msra.mxu0 0.0
        %1381 = vmatprep.subr.mxu0 0.0
        %1382 = vmatpush1.msra.mxu0 0.0
        %1383 = vmatprep.subr.mxu0 0.0
        %1384 = vmatpush1.msra.mxu0 0.0
        %1385 = vmatprep.subr.mxu0 0.0
        %1386 = vmatpush1.msra.mxu0 0.0
        %1387 = vmatprep.subr.mxu0 0.0
        %1388 = vmatpush1.msra.mxu0 0.0
        %1389 = vmatprep.subr.mxu0 0.0
        %1390 = vmatpush1.msra.mxu0 0.0
        %1391 = vmatprep.subr.mxu0 0.0
        %1392 = vmatpush1.msra.mxu0 0.0
        %1393 = vmatprep.subr.mxu0 0.0
        %1394 = vmatpush1.msra.mxu0 0.0
        %1395 = vmatprep.subr.mxu0 0.0
        %1396 = vmatpush1.msra.mxu0 0.0
        %1397 = vmatprep.subr.mxu0 0.0
        %1398 = vmatpush1.msra.mxu0 0.0
        %1399 = vmatprep.subr.mxu0 0.0
        %1400 = vmatpush1.msra.mxu0 0.0
        %1401 = vmatprep.subr.mxu0 0.0
        %1402 = vmatpush1.msra.mxu0 0.0
        %1403 = vmatprep.subr.mxu0 0.0
        %1404 = vmatpush1.msra.mxu0 0.0
        %1405 = vmatprep.subr.mxu0 0.0
        %1406 = vmatpush1.msra.mxu0 0.0
        %1407 = vmatprep.subr.mxu0 0.0
        %1408 = vmatpush1.msra.mxu0 0.0
        %1409 = vmatprep.subr.mxu0 0.0
        %1410 = vmatpush1.msra.mxu0 0.0
        %1411 = vmatprep.mubr.f32.mxu0 0.0
        %1412 = vmatmul.mubr.f32.gmra.mrb[0].mxu0 %v1345
        %v1413 = vpop.f32.mrb[0].mxu0
        %v1414 = vadd.f32 %v1268, %v1413
        %v1415 = vpop.f32.mrb[0].mxu0
        %1416 = vdwg.mxu0
        %v1418 = vsel %vm996, %v1018, 0
        %1420 = vmatprep.subr.mxu0 0.0
        %1421 = vmatpush1.msra.mxu0 %v1020
        %1422 = vmatprep.subr.mxu0 0.0
        %1423 = vmatpush1.msra.mxu0 0.0
        %1424 = vmatprep.subr.mxu0 0.0
        %1425 = vmatpush1.msra.mxu0 0.0
        %1426 = vmatprep.subr.mxu0 0.0
        %1427 = vmatpush1.msra.mxu0 0.0
        %1428 = vmatprep.subr.mxu0 0.0
        %1429 = vmatpush1.msra.mxu0 0.0
        %1430 = vmatprep.subr.mxu0 0.0
        %1431 = vmatpush1.msra.mxu0 0.0
        %1432 = vmatprep.subr.mxu0 0.0
        %1433 = vmatpush1.msra.mxu0 0.0
        %1434 = vmatprep.subr.mxu0 0.0
        %1435 = vmatpush1.msra.mxu0 0.0
        %1436 = vmatprep.subr.mxu0 0.0
        %1437 = vmatpush1.msra.mxu0 0.0
        %1438 = vmatprep.subr.mxu0 0.0
        %1439 = vmatpush1.msra.mxu0 0.0
        %1440 = vmatprep.subr.mxu0 0.0
        %1441 = vmatpush1.msra.mxu0 0.0
        %1442 = vmatprep.subr.mxu0 0.0
        %1443 = vmatpush1.msra.mxu0 0.0
        %1444 = vmatprep.subr.mxu0 0.0
        %1445 = vmatpush1.msra.mxu0 0.0
        %1446 = vmatprep.subr.mxu0 0.0
        %1447 = vmatpush1.msra.mxu0 0.0
        %1448 = vmatprep.subr.mxu0 0.0
        %1449 = vmatpush1.msra.mxu0 0.0
        %1450 = vmatprep.subr.mxu0 0.0
        %1451 = vmatpush1.msra.mxu0 0.0
        %1452 = vmatprep.subr.mxu0 0.0
        %1453 = vmatpush1.msra.mxu0 0.0
        %1454 = vmatprep.subr.mxu0 0.0
        %1455 = vmatpush1.msra.mxu0 0.0
        %1456 = vmatprep.subr.mxu0 0.0
        %1457 = vmatpush1.msra.mxu0 0.0
        %1458 = vmatprep.subr.mxu0 0.0
        %1459 = vmatpush1.msra.mxu0 0.0
        %1460 = vmatprep.subr.mxu0 0.0
        %1461 = vmatpush1.msra.mxu0 0.0
        %1462 = vmatprep.subr.mxu0 0.0
        %1463 = vmatpush1.msra.mxu0 0.0
        %1464 = vmatprep.subr.mxu0 0.0
        %1465 = vmatpush1.msra.mxu0 0.0
        %1466 = vmatprep.subr.mxu0 0.0
        %1467 = vmatpush1.msra.mxu0 0.0
        %1468 = vmatprep.subr.mxu0 0.0
        %1469 = vmatpush1.msra.mxu0 0.0
        %1470 = vmatprep.subr.mxu0 0.0
        %1471 = vmatpush1.msra.mxu0 0.0
        %1472 = vmatprep.subr.mxu0 0.0
        %1473 = vmatpush1.msra.mxu0 0.0
        %1474 = vmatprep.subr.mxu0 0.0
        %1475 = vmatpush1.msra.mxu0 0.0
        %1476 = vmatprep.subr.mxu0 0.0
        %1477 = vmatpush1.msra.mxu0 0.0
        %1478 = vmatprep.subr.mxu0 0.0
        %1479 = vmatpush1.msra.mxu0 0.0
        %1480 = vmatprep.subr.mxu0 0.0
        %1481 = vmatpush1.msra.mxu0 0.0
        %1482 = vmatprep.subr.mxu0 0.0
        %1483 = vmatpush1.msra.mxu0 0.0
        %1484 = vmatprep.mubr.f32.mxu0 0.0
        %1485 = vmatmul.mubr.f32.gmra.mrb[0].mxu0 %v1418
        %v1486 = vpop.f32.mrb[0].mxu0
        %v1487 = vadd.f32 %v1341, %v1486
        %v1488 = vpop.f32.mrb[0].mxu0
        %1489 = vdwg.mxu0
        %vm1490 = vcmp.ge.s32.totalorder %v836, 16
        %vm1491 = vcmp.lt.s32.totalorder %v836, 24
        %vm1492 = vmand %vm1490, %vm1491
        %v1493 = vsel %vm1492, 1, 0
        %v1494 = vcvt.s32.f32 %v1493
        %v1495 = vmul.f32 %v669, %v1494
        %v1496 = vmul.f32 %v674, %v1494
        %v1498 = vsel %vm595, %v1495, 0
        %1500 = vmatprep.subr.mxu0 0.0
        %1501 = vmatpush1.xpose.msra.mxu0 %v848
        %1502 = vmatprep.subr.mxu0 0.0
        %1503 = vmatpush1.xpose.msra.mxu0 0.0
        %1504 = vmatprep.subr.mxu0 0.0
        %1505 = vmatpush1.xpose.msra.mxu0 0.0
        %1506 = vmatprep.subr.mxu0 0.0
        %1507 = vmatpush1.xpose.msra.mxu0 0.0
        %1508 = vmatprep.subr.mxu0 0.0
        %1509 = vmatpush1.xpose.msra.mxu0 0.0
        %1510 = vmatprep.subr.mxu0 0.0
        %1511 = vmatpush1.xpose.msra.mxu0 0.0
        %1512 = vmatprep.subr.mxu0 0.0
        %1513 = vmatpush1.xpose.msra.mxu0 0.0
        %1514 = vmatprep.subr.mxu0 0.0
        %1515 = vmatpush1.xpose.msra.mxu0 0.0
        %1516 = vmatprep.subr.mxu0 0.0
        %1517 = vmatpush1.xpose.msra.mxu0 0.0
        %1518 = vmatprep.subr.mxu0 0.0
        %1519 = vmatpush1.xpose.msra.mxu0 0.0
        %1520 = vmatprep.subr.mxu0 0.0
        %1521 = vmatpush1.xpose.msra.mxu0 0.0
        %1522 = vmatprep.subr.mxu0 0.0
        %1523 = vmatpush1.xpose.msra.mxu0 0.0
        %1524 = vmatprep.subr.mxu0 0.0
        %1525 = vmatpush1.xpose.msra.mxu0 0.0
        %1526 = vmatprep.subr.mxu0 0.0
        %1527 = vmatpush1.xpose.msra.mxu0 0.0
        %1528 = vmatprep.subr.mxu0 0.0
        %1529 = vmatpush1.xpose.msra.mxu0 0.0
        %1530 = vmatprep.subr.mxu0 0.0
        %1531 = vmatpush1.xpose.msra.mxu0 0.0
        %1532 = vmatprep.subr.mxu0 0.0
        %1533 = vmatpush1.xpose.msra.mxu0 0.0
        %1534 = vmatprep.subr.mxu0 0.0
        %1535 = vmatpush1.xpose.msra.mxu0 0.0
        %1536 = vmatprep.subr.mxu0 0.0
        %1537 = vmatpush1.xpose.msra.mxu0 0.0
        %1538 = vmatprep.subr.mxu0 0.0
        %1539 = vmatpush1.xpose.msra.mxu0 0.0
        %1540 = vmatprep.subr.mxu0 0.0
        %1541 = vmatpush1.xpose.msra.mxu0 0.0
        %1542 = vmatprep.subr.mxu0 0.0
        %1543 = vmatpush1.xpose.msra.mxu0 0.0
        %1544 = vmatprep.subr.mxu0 0.0
        %1545 = vmatpush1.xpose.msra.mxu0 0.0
        %1546 = vmatprep.subr.mxu0 0.0
        %1547 = vmatpush1.xpose.msra.mxu0 0.0
        %1548 = vmatprep.subr.mxu0 0.0
        %1549 = vmatpush1.xpose.msra.mxu0 0.0
        %1550 = vmatprep.subr.mxu0 0.0
        %1551 = vmatpush1.xpose.msra.mxu0 0.0
        %1552 = vmatprep.subr.mxu0 0.0
        %1553 = vmatpush1.xpose.msra.mxu0 0.0
        %1554 = vmatprep.subr.mxu0 0.0
        %1555 = vmatpush1.xpose.msra.mxu0 0.0
        %1556 = vmatprep.subr.mxu0 0.0
        %1557 = vmatpush1.xpose.msra.mxu0 0.0
        %1558 = vmatprep.subr.mxu0 0.0
        %1559 = vmatpush1.xpose.msra.mxu0 0.0
        %1560 = vmatprep.subr.mxu0 0.0
        %1561 = vmatpush1.xpose.msra.mxu0 0.0
        %1562 = vmatprep.subr.mxu0 0.0
        %1563 = vmatpush1.xpose.msra.mxu0 0.0
        %1564 = vmatprep.mubr.f32.mxu0 0.0
        %1565 = vmatmul.mubr.f32.gmra.mrb[0].mxu0 %v1498
        %v1566 = vpop.f32.mrb[0].mxu0
        %v1567 = vadd.f32 0.0, %v1566
        %v1568 = vpop.f32.mrb[0].mxu0
        %1569 = vdwg.mxu0
        %v1571 = vsel %vm595, %v1496, 0
        %1573 = vmatprep.subr.mxu0 0.0
        %1574 = vmatpush1.xpose.msra.mxu0 %v924
        %1575 = vmatprep.subr.mxu0 0.0
        %1576 = vmatpush1.xpose.msra.mxu0 0.0
        %1577 = vmatprep.subr.mxu0 0.0
        %1578 = vmatpush1.xpose.msra.mxu0 0.0
        %1579 = vmatprep.subr.mxu0 0.0
        %1580 = vmatpush1.xpose.msra.mxu0 0.0
        %1581 = vmatprep.subr.mxu0 0.0
        %1582 = vmatpush1.xpose.msra.mxu0 0.0
        %1583 = vmatprep.subr.mxu0 0.0
        %1584 = vmatpush1.xpose.msra.mxu0 0.0
        %1585 = vmatprep.subr.mxu0 0.0
        %1586 = vmatpush1.xpose.msra.mxu0 0.0
        %1587 = vmatprep.subr.mxu0 0.0
        %1588 = vmatpush1.xpose.msra.mxu0 0.0
        %1589 = vmatprep.subr.mxu0 0.0
        %1590 = vmatpush1.xpose.msra.mxu0 0.0
        %1591 = vmatprep.subr.mxu0 0.0
        %1592 = vmatpush1.xpose.msra.mxu0 0.0
        %1593 = vmatprep.subr.mxu0 0.0
        %1594 = vmatpush1.xpose.msra.mxu0 0.0
        %1595 = vmatprep.subr.mxu0 0.0
        %1596 = vmatpush1.xpose.msra.mxu0 0.0
        %1597 = vmatprep.subr.mxu0 0.0
        %1598 = vmatpush1.xpose.msra.mxu0 0.0
        %1599 = vmatprep.subr.mxu0 0.0
        %1600 = vmatpush1.xpose.msra.mxu0 0.0
        %1601 = vmatprep.subr.mxu0 0.0
        %1602 = vmatpush1.xpose.msra.mxu0 0.0
        %1603 = vmatprep.subr.mxu0 0.0
        %1604 = vmatpush1.xpose.msra.mxu0 0.0
        %1605 = vmatprep.subr.mxu0 0.0
        %1606 = vmatpush1.xpose.msra.mxu0 0.0
        %1607 = vmatprep.subr.mxu0 0.0
        %1608 = vmatpush1.xpose.msra.mxu0 0.0
        %1609 = vmatprep.subr.mxu0 0.0
        %1610 = vmatpush1.xpose.msra.mxu0 0.0
        %1611 = vmatprep.subr.mxu0 0.0
        %1612 = vmatpush1.xpose.msra.mxu0 0.0
        %1613 = vmatprep.subr.mxu0 0.0
        %1614 = vmatpush1.xpose.msra.mxu0 0.0
        %1615 = vmatprep.subr.mxu0 0.0
        %1616 = vmatpush1.xpose.msra.mxu0 0.0
        %1617 = vmatprep.subr.mxu0 0.0
        %1618 = vmatpush1.xpose.msra.mxu0 0.0
        %1619 = vmatprep.subr.mxu0 0.0
        %1620 = vmatpush1.xpose.msra.mxu0 0.0
        %1621 = vmatprep.subr.mxu0 0.0
        %1622 = vmatpush1.xpose.msra.mxu0 0.0
        %1623 = vmatprep.subr.mxu0 0.0
        %1624 = vmatpush1.xpose.msra.mxu0 0.0
        %1625 = vmatprep.subr.mxu0 0.0
        %1626 = vmatpush1.xpose.msra.mxu0 0.0
        %1627 = vmatprep.subr.mxu0 0.0
        %1628 = vmatpush1.xpose.msra.mxu0 0.0
        %1629 = vmatprep.subr.mxu0 0.0
        %1630 = vmatpush1.xpose.msra.mxu0 0.0
        %1631 = vmatprep.subr.mxu0 0.0
        %1632 = vmatpush1.xpose.msra.mxu0 0.0
        %1633 = vmatprep.subr.mxu0 0.0
        %1634 = vmatpush1.xpose.msra.mxu0 0.0
        %1635 = vmatprep.subr.mxu0 0.0
        %1636 = vmatpush1.xpose.msra.mxu0 0.0
        %1637 = vmatprep.mubr.f32.mxu0 0.0
        %1638 = vmatmul.mubr.f32.gmra.mrb[0].mxu0 %v1571
        %v1639 = vpop.f32.mrb[0].mxu0
        %v1640 = vadd.f32 0.0, %v1639
        %v1641 = vpop.f32.mrb[0].mxu0
        %1642 = vdwg.mxu0
        %v1643 = vsel %vm996, %v1567, -inf
        %1644 = vmax.xlane.f32.xlu0 %v1643
        %v1645 = vpop.xlane.xlu0 %1644
        %v1646 = vsel %vm996, %v1640, -inf
        %1647 = vmax.xlane.f32.xlu0 %v1646
        %v1648 = vpop.xlane.xlu0 %1647
        %v1649 = vsub.f32 %v1567, %v1645
        %v1650 = vsub.f32 %v1640, %v1648
        %v1651 = vmul.f32 %v1649, 1.442695
        %v1652 = vpow.pop %v1651
        %v1653 = vmul.f32 %v1650, 1.442695
        %v1654 = vpow.pop %v1653
        %v1655 = vsel %vm996, %v1652, 0.0
        %1656 = vadd.xlane.f32.xlu0 %v1655
        %v1657 = vpop.xlane.xlu0 %1656
        %v1658 = vsel %vm996, %v1654, 0.0
        %1659 = vadd.xlane.f32.xlu0 %v1658
        %v1660 = vpop.xlane.xlu0 %1659
        %v1661 = vrcp.pop %v1657
        %v1662 = vrcp.pop %v1660
        %v1663 = vmul.f32 %v1652, %v1661
        %v1664 = vmul.f32 %v1654, %v1662
        %v1665 = vmul.f32 %v827, %v1494
        %v1666 = vmul.f32 %v832, %v1494
        %v1668 = vsel %vm996, %v1663, 0
        %1670 = vmatprep.subr.mxu0 0.0
        %1671 = vmatpush1.msra.mxu0 %v1665
        %1672 = vmatprep.subr.mxu0 0.0
        %1673 = vmatpush1.msra.mxu0 0.0
        %1674 = vmatprep.subr.mxu0 0.0
        %1675 = vmatpush1.msra.mxu0 0.0
        %1676 = vmatprep.subr.mxu0 0.0
        %1677 = vmatpush1.msra.mxu0 0.0
        %1678 = vmatprep.subr.mxu0 0.0
        %1679 = vmatpush1.msra.mxu0 0.0
        %1680 = vmatprep.subr.mxu0 0.0
        %1681 = vmatpush1.msra.mxu0 0.0
        %1682 = vmatprep.subr.mxu0 0.0
        %1683 = vmatpush1.msra.mxu0 0.0
        %1684 = vmatprep.subr.mxu0 0.0
        %1685 = vmatpush1.msra.mxu0 0.0
        %1686 = vmatprep.subr.mxu0 0.0
        %1687 = vmatpush1.msra.mxu0 0.0
        %1688 = vmatprep.subr.mxu0 0.0
        %1689 = vmatpush1.msra.mxu0 0.0
        %1690 = vmatprep.subr.mxu0 0.0
        %1691 = vmatpush1.msra.mxu0 0.0
        %1692 = vmatprep.subr.mxu0 0.0
        %1693 = vmatpush1.msra.mxu0 0.0
        %1694 = vmatprep.subr.mxu0 0.0
        %1695 = vmatpush1.msra.mxu0 0.0
        %1696 = vmatprep.subr.mxu0 0.0
        %1697 = vmatpush1.msra.mxu0 0.0
        %1698 = vmatprep.subr.mxu0 0.0
        %1699 = vmatpush1.msra.mxu0 0.0
        %1700 = vmatprep.subr.mxu0 0.0
        %1701 = vmatpush1.msra.mxu0 0.0
        %1702 = vmatprep.subr.mxu0 0.0
        %1703 = vmatpush1.msra.mxu0 0.0
        %1704 = vmatprep.subr.mxu0 0.0
        %1705 = vmatpush1.msra.mxu0 0.0
        %1706 = vmatprep.subr.mxu0 0.0
        %1707 = vmatpush1.msra.mxu0 0.0
        %1708 = vmatprep.subr.mxu0 0.0
        %1709 = vmatpush1.msra.mxu0 0.0
        %1710 = vmatprep.subr.mxu0 0.0
        %1711 = vmatpush1.msra.mxu0 0.0
        %1712 = vmatprep.subr.mxu0 0.0
        %1713 = vmatpush1.msra.mxu0 0.0
        %1714 = vmatprep.subr.mxu0 0.0
        %1715 = vmatpush1.msra.mxu0 0.0
        %1716 = vmatprep.subr.mxu0 0.0
        %1717 = vmatpush1.msra.mxu0 0.0
        %1718 = vmatprep.subr.mxu0 0.0
        %1719 = vmatpush1.msra.mxu0 0.0
        %1720 = vmatprep.subr.mxu0 0.0
        %1721 = vmatpush1.msra.mxu0 0.0
        %1722 = vmatprep.subr.mxu0 0.0
        %1723 = vmatpush1.msra.mxu0 0.0
        %1724 = vmatprep.subr.mxu0 0.0
        %1725 = vmatpush1.msra.mxu0 0.0
        %1726 = vmatprep.subr.mxu0 0.0
        %1727 = vmatpush1.msra.mxu0 0.0
        %1728 = vmatprep.subr.mxu0 0.0
        %1729 = vmatpush1.msra.mxu0 0.0
        %1730 = vmatprep.subr.mxu0 0.0
        %1731 = vmatpush1.msra.mxu0 0.0
        %1732 = vmatprep.subr.mxu0 0.0
        %1733 = vmatpush1.msra.mxu0 0.0
        %1734 = vmatprep.mubr.f32.mxu0 0.0
        %1735 = vmatmul.mubr.f32.gmra.mrb[0].mxu0 %v1668
        %v1736 = vpop.f32.mrb[0].mxu0
        %v1737 = vadd.f32 0.0, %v1736
        %v1738 = vpop.f32.mrb[0].mxu0
        %1739 = vdwg.mxu0
        %v1741 = vsel %vm996, %v1664, 0
        %1743 = vmatprep.subr.mxu0 0.0
        %1744 = vmatpush1.msra.mxu0 %v1666
        %1745 = vmatprep.subr.mxu0 0.0
        %1746 = vmatpush1.msra.mxu0 0.0
        %1747 = vmatprep.subr.mxu0 0.0
        %1748 = vmatpush1.msra.mxu0 0.0
        %1749 = vmatprep.subr.mxu0 0.0
        %1750 = vmatpush1.msra.mxu0 0.0
        %1751 = vmatprep.subr.mxu0 0.0
        %1752 = vmatpush1.msra.mxu0 0.0
        %1753 = vmatprep.subr.mxu0 0.0
        %1754 = vmatpush1.msra.mxu0 0.0
        %1755 = vmatprep.subr.mxu0 0.0
        %1756 = vmatpush1.msra.mxu0 0.0
        %1757 = vmatprep.subr.mxu0 0.0
        %1758 = vmatpush1.msra.mxu0 0.0
        %1759 = vmatprep.subr.mxu0 0.0
        %1760 = vmatpush1.msra.mxu0 0.0
        %1761 = vmatprep.subr.mxu0 0.0
        %1762 = vmatpush1.msra.mxu0 0.0
        %1763 = vmatprep.subr.mxu0 0.0
        %1764 = vmatpush1.msra.mxu0 0.0
        %1765 = vmatprep.subr.mxu0 0.0
        %1766 = vmatpush1.msra.mxu0 0.0
        %1767 = vmatprep.subr.mxu0 0.0
        %1768 = vmatpush1.msra.mxu0 0.0
        %1769 = vmatprep.subr.mxu0 0.0
        %1770 = vmatpush1.msra.mxu0 0.0
        %1771 = vmatprep.subr.mxu0 0.0
        %1772 = vmatpush1.msra.mxu0 0.0
        %1773 = vmatprep.subr.mxu0 0.0
        %1774 = vmatpush1.msra.mxu0 0.0
        %1775 = vmatprep.subr.mxu0 0.0
        %1776 = vmatpush1.msra.mxu0 0.0
        %1777 = vmatprep.subr.mxu0 0.0
        %1778 = vmatpush1.msra.mxu0 0.0
        %1779 = vmatprep.subr.mxu0 0.0
        %1780 = vmatpush1.msra.mxu0 0.0
        %1781 = vmatprep.subr.mxu0 0.0
        %1782 = vmatpush1.msra.mxu0 0.0
        %1783 = vmatprep.subr.mxu0 0.0
        %1784 = vmatpush1.msra.mxu0 0.0
        %1785 = vmatprep.subr.mxu0 0.0
        %1786 = vmatpush1.msra.mxu0 0.0
        %1787 = vmatprep.subr.mxu0 0.0
        %1788 = vmatpush1.msra.mxu0 0.0
        %1789 = vmatprep.subr.mxu0 0.0
        %1790 = vmatpush1.msra.mxu0 0.0
        %1791 = vmatprep.subr.mxu0 0.0
        %1792 = vmatpush1.msra.mxu0 0.0
        %1793 = vmatprep.subr.mxu0 0.0
        %1794 = vmatpush1.msra.mxu0 0.0
        %1795 = vmatprep.subr.mxu0 0.0
        %1796 = vmatpush1.msra.mxu0 0.0
        %1797 = vmatprep.subr.mxu0 0.0
        %1798 = vmatpush1.msra.mxu0 0.0
        %1799 = vmatprep.subr.mxu0 0.0
        %1800 = vmatpush1.msra.mxu0 0.0
        %1801 = vmatprep.subr.mxu0 0.0
        %1802 = vmatpush1.msra.mxu0 0.0
        %1803 = vmatprep.subr.mxu0 0.0
        %1804 = vmatpush1.msra.mxu0 0.0
        %1805 = vmatprep.subr.mxu0 0.0
        %1806 = vmatpush1.msra.mxu0 0.0
        %1807 = vmatprep.mubr.f32.mxu0 0.0
        %1808 = vmatmul.mubr.f32.gmra.mrb[0].mxu0 %v1741
        %v1809 = vpop.f32.mrb[0].mxu0
        %v1810 = vadd.f32 0.0, %v1809
        %v1811 = vpop.f32.mrb[0].mxu0
        %1812 = vdwg.mxu0
        %v1813 = vadd.f32 %v1414, %v1737
        %v1814 = vadd.f32 %v1487, %v1810
        %vm1815 = vcmp.ge.s32.totalorder %v836, 24
        %vm1816 = vcmp.lt.s32.totalorder %v836, 32
        %vm1817 = vmand %vm1815, %vm1816
        %v1818 = vsel %vm1817, 1, 0
        %v1819 = vcvt.s32.f32 %v1818
        %v1820 = vmul.f32 %v669, %v1819
        %v1821 = vmul.f32 %v674, %v1819
        %v1823 = vsel %vm595, %v1820, 0
        %1825 = vmatprep.subr.mxu0 0.0
        %1826 = vmatpush1.xpose.msra.mxu0 %v848
        %1827 = vmatprep.subr.mxu0 0.0
        %1828 = vmatpush1.xpose.msra.mxu0 0.0
        %1829 = vmatprep.subr.mxu0 0.0
        %1830 = vmatpush1.xpose.msra.mxu0 0.0
        %1831 = vmatprep.subr.mxu0 0.0
        %1832 = vmatpush1.xpose.msra.mxu0 0.0
        %1833 = vmatprep.subr.mxu0 0.0
        %1834 = vmatpush1.xpose.msra.mxu0 0.0
        %1835 = vmatprep.subr.mxu0 0.0
        %1836 = vmatpush1.xpose.msra.mxu0 0.0
        %1837 = vmatprep.subr.mxu0 0.0
        %1838 = vmatpush1.xpose.msra.mxu0 0.0
        %1839 = vmatprep.subr.mxu0 0.0
        %1840 = vmatpush1.xpose.msra.mxu0 0.0
        %1841 = vmatprep.subr.mxu0 0.0
        %1842 = vmatpush1.xpose.msra.mxu0 0.0
        %1843 = vmatprep.subr.mxu0 0.0
        %1844 = vmatpush1.xpose.msra.mxu0 0.0
        %1845 = vmatprep.subr.mxu0 0.0
        %1846 = vmatpush1.xpose.msra.mxu0 0.0
        %1847 = vmatprep.subr.mxu0 0.0
        %1848 = vmatpush1.xpose.msra.mxu0 0.0
        %1849 = vmatprep.subr.mxu0 0.0
        %1850 = vmatpush1.xpose.msra.mxu0 0.0
        %1851 = vmatprep.subr.mxu0 0.0
        %1852 = vmatpush1.xpose.msra.mxu0 0.0
        %1853 = vmatprep.subr.mxu0 0.0
        %1854 = vmatpush1.xpose.msra.mxu0 0.0
        %1855 = vmatprep.subr.mxu0 0.0
        %1856 = vmatpush1.xpose.msra.mxu0 0.0
        %1857 = vmatprep.subr.mxu0 0.0
        %1858 = vmatpush1.xpose.msra.mxu0 0.0
        %1859 = vmatprep.subr.mxu0 0.0
        %1860 = vmatpush1.xpose.msra.mxu0 0.0
        %1861 = vmatprep.subr.mxu0 0.0
        %1862 = vmatpush1.xpose.msra.mxu0 0.0
        %1863 = vmatprep.subr.mxu0 0.0
        %1864 = vmatpush1.xpose.msra.mxu0 0.0
        %1865 = vmatprep.subr.mxu0 0.0
        %1866 = vmatpush1.xpose.msra.mxu0 0.0
        %1867 = vmatprep.subr.mxu0 0.0
        %1868 = vmatpush1.xpose.msra.mxu0 0.0
        %1869 = vmatprep.subr.mxu0 0.0
        %1870 = vmatpush1.xpose.msra.mxu0 0.0
        %1871 = vmatprep.subr.mxu0 0.0
        %1872 = vmatpush1.xpose.msra.mxu0 0.0
        %1873 = vmatprep.subr.mxu0 0.0
        %1874 = vmatpush1.xpose.msra.mxu0 0.0
        %1875 = vmatprep.subr.mxu0 0.0
        %1876 = vmatpush1.xpose.msra.mxu0 0.0
        %1877 = vmatprep.subr.mxu0 0.0
        %1878 = vmatpush1.xpose.msra.mxu0 0.0
        %1879 = vmatprep.subr.mxu0 0.0
        %1880 = vmatpush1.xpose.msra.mxu0 0.0
        %1881 = vmatprep.subr.mxu0 0.0
        %1882 = vmatpush1.xpose.msra.mxu0 0.0
        %1883 = vmatprep.subr.mxu0 0.0
        %1884 = vmatpush1.xpose.msra.mxu0 0.0
        %1885 = vmatprep.subr.mxu0 0.0
        %1886 = vmatpush1.xpose.msra.mxu0 0.0
        %1887 = vmatprep.subr.mxu0 0.0
        %1888 = vmatpush1.xpose.msra.mxu0 0.0
        %1889 = vmatprep.mubr.f32.mxu0 0.0
        %1890 = vmatmul.mubr.f32.gmra.mrb[0].mxu0 %v1823
        %v1891 = vpop.f32.mrb[0].mxu0
        %v1892 = vadd.f32 0.0, %v1891
        %v1893 = vpop.f32.mrb[0].mxu0
        %1894 = vdwg.mxu0
        %v1896 = vsel %vm595, %v1821, 0
        %1898 = vmatprep.subr.mxu0 0.0
        %1899 = vmatpush1.xpose.msra.mxu0 %v924
        %1900 = vmatprep.subr.mxu0 0.0
        %1901 = vmatpush1.xpose.msra.mxu0 0.0
        %1902 = vmatprep.subr.mxu0 0.0
        %1903 = vmatpush1.xpose.msra.mxu0 0.0
        %1904 = vmatprep.subr.mxu0 0.0
        %1905 = vmatpush1.xpose.msra.mxu0 0.0
        %1906 = vmatprep.subr.mxu0 0.0
        %1907 = vmatpush1.xpose.msra.mxu0 0.0
        %1908 = vmatprep.subr.mxu0 0.0
        %1909 = vmatpush1.xpose.msra.mxu0 0.0
        %1910 = vmatprep.subr.mxu0 0.0
        %1911 = vmatpush1.xpose.msra.mxu0 0.0
        %1912 = vmatprep.subr.mxu0 0.0
        %1913 = vmatpush1.xpose.msra.mxu0 0.0
        %1914 = vmatprep.subr.mxu0 0.0
        %1915 = vmatpush1.xpose.msra.mxu0 0.0
        %1916 = vmatprep.subr.mxu0 0.0
        %1917 = vmatpush1.xpose.msra.mxu0 0.0
        %1918 = vmatprep.subr.mxu0 0.0
        %1919 = vmatpush1.xpose.msra.mxu0 0.0
        %1920 = vmatprep.subr.mxu0 0.0
        %1921 = vmatpush1.xpose.msra.mxu0 0.0
        %1922 = vmatprep.subr.mxu0 0.0
        %1923 = vmatpush1.xpose.msra.mxu0 0.0
        %1924 = vmatprep.subr.mxu0 0.0
        %1925 = vmatpush1.xpose.msra.mxu0 0.0
        %1926 = vmatprep.subr.mxu0 0.0
        %1927 = vmatpush1.xpose.msra.mxu0 0.0
        %1928 = vmatprep.subr.mxu0 0.0
        %1929 = vmatpush1.xpose.msra.mxu0 0.0
        %1930 = vmatprep.subr.mxu0 0.0
        %1931 = vmatpush1.xpose.msra.mxu0 0.0
        %1932 = vmatprep.subr.mxu0 0.0
        %1933 = vmatpush1.xpose.msra.mxu0 0.0
        %1934 = vmatprep.subr.mxu0 0.0
        %1935 = vmatpush1.xpose.msra.mxu0 0.0
        %1936 = vmatprep.subr.mxu0 0.0
        %1937 = vmatpush1.xpose.msra.mxu0 0.0
        %1938 = vmatprep.subr.mxu0 0.0
        %1939 = vmatpush1.xpose.msra.mxu0 0.0
        %1940 = vmatprep.subr.mxu0 0.0
        %1941 = vmatpush1.xpose.msra.mxu0 0.0
        %1942 = vmatprep.subr.mxu0 0.0
        %1943 = vmatpush1.xpose.msra.mxu0 0.0
        %1944 = vmatprep.subr.mxu0 0.0
        %1945 = vmatpush1.xpose.msra.mxu0 0.0
        %1946 = vmatprep.subr.mxu0 0.0
        %1947 = vmatpush1.xpose.msra.mxu0 0.0
        %1948 = vmatprep.subr.mxu0 0.0
        %1949 = vmatpush1.xpose.msra.mxu0 0.0
        %1950 = vmatprep.subr.mxu0 0.0
        %1951 = vmatpush1.xpose.msra.mxu0 0.0
        %1952 = vmatprep.subr.mxu0 0.0
        %1953 = vmatpush1.xpose.msra.mxu0 0.0
        %1954 = vmatprep.subr.mxu0 0.0
        %1955 = vmatpush1.xpose.msra.mxu0 0.0
        %1956 = vmatprep.subr.mxu0 0.0
        %1957 = vmatpush1.xpose.msra.mxu0 0.0
        %1958 = vmatprep.subr.mxu0 0.0
        %1959 = vmatpush1.xpose.msra.mxu0 0.0
        %1960 = vmatprep.subr.mxu0 0.0
        %1961 = vmatpush1.xpose.msra.mxu0 0.0
        %1962 = vmatprep.mubr.f32.mxu0 0.0
        %1963 = vmatmul.mubr.f32.gmra.mrb[0].mxu0 %v1896
        %v1964 = vpop.f32.mrb[0].mxu0
        %v1965 = vadd.f32 0.0, %v1964
        %v1966 = vpop.f32.mrb[0].mxu0
        %1967 = vdwg.mxu0
        %v1968 = vsel %vm996, %v1892, -inf
        %1969 = vmax.xlane.f32.xlu0 %v1968
        %v1970 = vpop.xlane.xlu0 %1969
        %v1971 = vsel %vm996, %v1965, -inf
        %1972 = vmax.xlane.f32.xlu0 %v1971
        %v1973 = vpop.xlane.xlu0 %1972
        %v1974 = vsub.f32 %v1892, %v1970
        %v1975 = vsub.f32 %v1965, %v1973
        %v1976 = vmul.f32 %v1974, 1.442695
        %v1977 = vpow.pop %v1976
        %v1978 = vmul.f32 %v1975, 1.442695
        %v1979 = vpow.pop %v1978
        %v1980 = vsel %vm996, %v1977, 0.0
        %1981 = vadd.xlane.f32.xlu0 %v1980
        %v1982 = vpop.xlane.xlu0 %1981
        %v1983 = vsel %vm996, %v1979, 0.0
        %1984 = vadd.xlane.f32.xlu0 %v1983
        %v1985 = vpop.xlane.xlu0 %1984
        %v1986 = vrcp.pop %v1982
        %v1987 = vrcp.pop %v1985
        %v1988 = vmul.f32 %v1977, %v1986
        %v1989 = vmul.f32 %v1979, %v1987
        %v1990 = vmul.f32 %v827, %v1819
        %v1991 = vmul.f32 %v832, %v1819
        %v1993 = vsel %vm996, %v1988, 0
        %1995 = vmatprep.subr.mxu0 0.0
        %1996 = vmatpush1.msra.mxu0 %v1990
        %1997 = vmatprep.subr.mxu0 0.0
        %1998 = vmatpush1.msra.mxu0 0.0
        %1999 = vmatprep.subr.mxu0 0.0
        %2000 = vmatpush1.msra.mxu0 0.0
        %2001 = vmatprep.subr.mxu0 0.0
        %2002 = vmatpush1.msra.mxu0 0.0
        %2003 = vmatprep.subr.mxu0 0.0
        %2004 = vmatpush1.msra.mxu0 0.0
        %2005 = vmatprep.subr.mxu0 0.0
        %2006 = vmatpush1.msra.mxu0 0.0
        %2007 = vmatprep.subr.mxu0 0.0
        %2008 = vmatpush1.msra.mxu0 0.0
        %2009 = vmatprep.subr.mxu0 0.0
        %2010 = vmatpush1.msra.mxu0 0.0
        %2011 = vmatprep.subr.mxu0 0.0
        %2012 = vmatpush1.msra.mxu0 0.0
        %2013 = vmatprep.subr.mxu0 0.0
        %2014 = vmatpush1.msra.mxu0 0.0
        %2015 = vmatprep.subr.mxu0 0.0
        %2016 = vmatpush1.msra.mxu0 0.0
        %2017 = vmatprep.subr.mxu0 0.0
        %2018 = vmatpush1.msra.mxu0 0.0
        %2019 = vmatprep.subr.mxu0 0.0
        %2020 = vmatpush1.msra.mxu0 0.0
        %2021 = vmatprep.subr.mxu0 0.0
        %2022 = vmatpush1.msra.mxu0 0.0
        %2023 = vmatprep.subr.mxu0 0.0
        %2024 = vmatpush1.msra.mxu0 0.0
        %2025 = vmatprep.subr.mxu0 0.0
        %2026 = vmatpush1.msra.mxu0 0.0
        %2027 = vmatprep.subr.mxu0 0.0
        %2028 = vmatpush1.msra.mxu0 0.0
        %2029 = vmatprep.subr.mxu0 0.0
        %2030 = vmatpush1.msra.mxu0 0.0
        %2031 = vmatprep.subr.mxu0 0.0
        %2032 = vmatpush1.msra.mxu0 0.0
        %2033 = vmatprep.subr.mxu0 0.0
        %2034 = vmatpush1.msra.mxu0 0.0
        %2035 = vmatprep.subr.mxu0 0.0
        %2036 = vmatpush1.msra.mxu0 0.0
        %2037 = vmatprep.subr.mxu0 0.0
        %2038 = vmatpush1.msra.mxu0 0.0
        %2039 = vmatprep.subr.mxu0 0.0
        %2040 = vmatpush1.msra.mxu0 0.0
        %2041 = vmatprep.subr.mxu0 0.0
        %2042 = vmatpush1.msra.mxu0 0.0
        %2043 = vmatprep.subr.mxu0 0.0
        %2044 = vmatpush1.msra.mxu0 0.0
        %2045 = vmatprep.subr.mxu0 0.0
        %2046 = vmatpush1.msra.mxu0 0.0
        %2047 = vmatprep.subr.mxu0 0.0
        %2048 = vmatpush1.msra.mxu0 0.0
        %2049 = vmatprep.subr.mxu0 0.0
        %2050 = vmatpush1.msra.mxu0 0.0
        %2051 = vmatprep.subr.mxu0 0.0
        %2052 = vmatpush1.msra.mxu0 0.0
        %2053 = vmatprep.subr.mxu0 0.0
        %2054 = vmatpush1.msra.mxu0 0.0
        %2055 = vmatprep.subr.mxu0 0.0
        %2056 = vmatpush1.msra.mxu0 0.0
        %2057 = vmatprep.subr.mxu0 0.0
        %2058 = vmatpush1.msra.mxu0 0.0
        %2059 = vmatprep.mubr.f32.mxu0 0.0
        %2060 = vmatmul.mubr.f32.gmra.mrb[0].mxu0 %v1993
        %v2061 = vpop.f32.mrb[0].mxu0
        %v2062 = vadd.f32 0.0, %v2061
        %v2063 = vpop.f32.mrb[0].mxu0
        %2064 = vdwg.mxu0
        %v2066 = vsel %vm996, %v1989, 0
        %2068 = vmatprep.subr.mxu0 0.0
        %2069 = vmatpush1.msra.mxu0 %v1991
        %2070 = vmatprep.subr.mxu0 0.0
        %2071 = vmatpush1.msra.mxu0 0.0
        %2072 = vmatprep.subr.mxu0 0.0
        %2073 = vmatpush1.msra.mxu0 0.0
        %2074 = vmatprep.subr.mxu0 0.0
        %2075 = vmatpush1.msra.mxu0 0.0
        %2076 = vmatprep.subr.mxu0 0.0
        %2077 = vmatpush1.msra.mxu0 0.0
        %2078 = vmatprep.subr.mxu0 0.0
        %2079 = vmatpush1.msra.mxu0 0.0
        %2080 = vmatprep.subr.mxu0 0.0
        %2081 = vmatpush1.msra.mxu0 0.0
        %2082 = vmatprep.subr.mxu0 0.0
        %2083 = vmatpush1.msra.mxu0 0.0
        %2084 = vmatprep.subr.mxu0 0.0
        %2085 = vmatpush1.msra.mxu0 0.0
        %2086 = vmatprep.subr.mxu0 0.0
        %2087 = vmatpush1.msra.mxu0 0.0
        %2088 = vmatprep.subr.mxu0 0.0
        %2089 = vmatpush1.msra.mxu0 0.0
        %2090 = vmatprep.subr.mxu0 0.0
        %2091 = vmatpush1.msra.mxu0 0.0
        %2092 = vmatprep.subr.mxu0 0.0
        %2093 = vmatpush1.msra.mxu0 0.0
        %2094 = vmatprep.subr.mxu0 0.0
        %2095 = vmatpush1.msra.mxu0 0.0
        %2096 = vmatprep.subr.mxu0 0.0
        %2097 = vmatpush1.msra.mxu0 0.0
        %2098 = vmatprep.subr.mxu0 0.0
        %2099 = vmatpush1.msra.mxu0 0.0
        %2100 = vmatprep.subr.mxu0 0.0
        %2101 = vmatpush1.msra.mxu0 0.0
        %2102 = vmatprep.subr.mxu0 0.0
        %2103 = vmatpush1.msra.mxu0 0.0
        %2104 = vmatprep.subr.mxu0 0.0
        %2105 = vmatpush1.msra.mxu0 0.0
        %2106 = vmatprep.subr.mxu0 0.0
        %2107 = vmatpush1.msra.mxu0 0.0
        %2108 = vmatprep.subr.mxu0 0.0
        %2109 = vmatpush1.msra.mxu0 0.0
        %2110 = vmatprep.subr.mxu0 0.0
        %2111 = vmatpush1.msra.mxu0 0.0
        %2112 = vmatprep.subr.mxu0 0.0
        %2113 = vmatpush1.msra.mxu0 0.0
        %2114 = vmatprep.subr.mxu0 0.0
        %2115 = vmatpush1.msra.mxu0 0.0
        %2116 = vmatprep.subr.mxu0 0.0
        %2117 = vmatpush1.msra.mxu0 0.0
        %2118 = vmatprep.subr.mxu0 0.0
        %2119 = vmatpush1.msra.mxu0 0.0
        %2120 = vmatprep.subr.mxu0 0.0
        %2121 = vmatpush1.msra.mxu0 0.0
        %2122 = vmatprep.subr.mxu0 0.0
        %2123 = vmatpush1.msra.mxu0 0.0
        %2124 = vmatprep.subr.mxu0 0.0
        %2125 = vmatpush1.msra.mxu0 0.0
        %2126 = vmatprep.subr.mxu0 0.0
        %2127 = vmatpush1.msra.mxu0 0.0
        %2128 = vmatprep.subr.mxu0 0.0
        %2129 = vmatpush1.msra.mxu0 0.0
        %2130 = vmatprep.subr.mxu0 0.0
        %2131 = vmatpush1.msra.mxu0 0.0
        %2132 = vmatprep.mubr.f32.mxu0 0.0
        %2133 = vmatmul.mubr.f32.gmra.mrb[0].mxu0 %v2066
        %v2134 = vpop.f32.mrb[0].mxu0
        %v2135 = vadd.f32 0.0, %v2134
        %v2136 = vpop.f32.mrb[0].mxu0
        %2137 = vdwg.mxu0
        %v2138 = vadd.f32 %v1813, %v2062
        %v2139 = vadd.f32 %v1814, %v2135
        %v2140 = vlaneseq
        %v2141 = vshrl.u32 %v2140, 7
        %v2142 = vsub.s32 0, %v2141
        %v2143 = vrot.slane %v584, %v2142
        %v2145 = vsel %vm595, %v2138, 0
        %v2148 = vsel %vm595, %v2139, 0
        %2150 = vmatprep.subr.mxu0 0.0
        %2151 = vmatpush1.msra.mxu0 %v577
        %2152 = vmatprep.subr.mxu0 0.0
        %2153 = vmatpush1.msra.mxu0 %v578
        %2154 = vmatprep.subr.mxu0 0.0
        %2155 = vmatpush1.msra.mxu0 %v579
        %2156 = vmatprep.subr.mxu0 0.0
        %2157 = vmatpush1.msra.mxu0 %v580
        %2158 = vmatprep.subr.mxu0 0.0
        %2159 = vmatpush1.msra.mxu0 0.0
        %2160 = vmatprep.subr.mxu0 0.0
        %2161 = vmatpush1.msra.mxu0 0.0
        %2162 = vmatprep.subr.mxu0 0.0
        %2163 = vmatpush1.msra.mxu0 0.0
        %2164 = vmatprep.subr.mxu0 0.0
        %2165 = vmatpush1.msra.mxu0 0.0
        %2166 = vmatprep.subr.mxu0 0.0
        %2167 = vmatpush1.msra.mxu0 0.0
        %2168 = vmatprep.subr.mxu0 0.0
        %2169 = vmatpush1.msra.mxu0 0.0
        %2170 = vmatprep.subr.mxu0 0.0
        %2171 = vmatpush1.msra.mxu0 0.0
        %2172 = vmatprep.subr.mxu0 0.0
        %2173 = vmatpush1.msra.mxu0 0.0
        %2174 = vmatprep.subr.mxu0 0.0
        %2175 = vmatpush1.msra.mxu0 0.0
        %2176 = vmatprep.subr.mxu0 0.0
        %2177 = vmatpush1.msra.mxu0 0.0
        %2178 = vmatprep.subr.mxu0 0.0
        %2179 = vmatpush1.msra.mxu0 0.0
        %2180 = vmatprep.subr.mxu0 0.0
        %2181 = vmatpush1.msra.mxu0 0.0
        %2182 = vmatprep.subr.mxu0 0.0
        %2183 = vmatpush1.msra.mxu0 0.0
        %2184 = vmatprep.subr.mxu0 0.0
        %2185 = vmatpush1.msra.mxu0 0.0
        %2186 = vmatprep.subr.mxu0 0.0
        %2187 = vmatpush1.msra.mxu0 0.0
        %2188 = vmatprep.subr.mxu0 0.0
        %2189 = vmatpush1.msra.mxu0 0.0
        %2190 = vmatprep.subr.mxu0 0.0
        %2191 = vmatpush1.msra.mxu0 0.0
        %2192 = vmatprep.subr.mxu0 0.0
        %2193 = vmatpush1.msra.mxu0 0.0
        %2194 = vmatprep.subr.mxu0 0.0
        %2195 = vmatpush1.msra.mxu0 0.0
        %2196 = vmatprep.subr.mxu0 0.0
        %2197 = vmatpush1.msra.mxu0 0.0
        %2198 = vmatprep.subr.mxu0 0.0
        %2199 = vmatpush1.msra.mxu0 0.0
        %2200 = vmatprep.subr.mxu0 0.0
        %2201 = vmatpush1.msra.mxu0 0.0
        %2202 = vmatprep.subr.mxu0 0.0
        %2203 = vmatpush1.msra.mxu0 0.0
        %2204 = vmatprep.subr.mxu0 0.0
        %2205 = vmatpush1.msra.mxu0 0.0
        %2206 = vmatprep.subr.mxu0 0.0
        %2207 = vmatpush1.msra.mxu0 0.0
        %2208 = vmatprep.subr.mxu0 0.0
        %2209 = vmatpush1.msra.mxu0 0.0
        %2210 = vmatprep.subr.mxu0 0.0
        %2211 = vmatpush1.msra.mxu0 0.0
        %2212 = vmatprep.subr.mxu0 0.0
        %2213 = vmatpush1.msra.mxu0 0.0
        %2214 = vmatprep.mubr.f32.mxu0 0.0
        %2215 = vmatmul.mubr.f32.gmra.mrb[0].mxu0 %v2145
        %v2216 = vpop.f32.mrb[0].mxu0
        %v2217 = vadd.f32 %v2143, %v2216
        %v2218 = vpop.f32.mrb[0].mxu0
        %2219 = vmatprep.mubr.f32.mxu0 0.0
        %2220 = vmatmul.mubr.f32.gmra.mrb[0].mxu0 %v2148
        %v2221 = vpop.f32.mrb[0].mxu0
        %v2222 = vadd.f32 %v2143, %v2221
        %v2223 = vpop.f32.mrb[0].mxu0
        %2224 = vdwg.mxu0
        %v2225 = vadd.f32 %v560, %v2217
        %v2226 = vadd.f32 %v561, %v2222
        %v2227 = vsel %vm595, %v2225, 0.0
        %2228 = vadd.xlane.f32.xlu0 %v2227
        %v2229 = vpop.xlane.xlu0 %2228
        %v2230 = vsel %vm595, %v2226, 0.0
        %2231 = vadd.xlane.f32.xlu0 %v2230
        %v2232 = vpop.xlane.xlu0 %2231
        %v2233 = vrcp.pop 32.0
        %v2234 = vmul.f32 %v2229, %v2233
        %v2235 = vmul.f32 %v2232, %v2233
        %v2236 = vsub.f32 %v2225, %v2234
        %v2237 = vsub.f32 %v2226, %v2235
        %v2238 = vmul.f32 %v2236, %v2236
        %v2239 = vmul.f32 %v2237, %v2237
        %v2240 = vsel %vm595, %v2238, 0.0
        %2241 = vadd.xlane.f32.xlu0 %v2240
        %v2242 = vpop.xlane.xlu0 %2241
        %v2243 = vsel %vm595, %v2239, 0.0
        %2244 = vadd.xlane.f32.xlu0 %v2243
        %v2245 = vpop.xlane.xlu0 %2244
        %v2246 = vmul.f32 %v2242, %v2233
        %v2247 = vmul.f32 %v2245, %v2233
        %v2248 = vadd.f32 %v2246, 1e-05
        %v2249 = vadd.f32 %v2247, 1e-05
        %v2250 = vrsqrt.pop %v2248
        %v2251 = vrsqrt.pop %v2249
        %v2252 = vmul.f32 %v2236, %v2250
        %v2253 = vmul.f32 %v2237, %v2251
        %v2254 = vlaneseq
        %v2255 = vshrl.u32 %v2254, 7
        %v2256 = vsub.s32 0, %v2255
        %v2257 = vrot.slane %v585, %v2256
        %v2258 = vmul.f32 %v2252, %v2257
        %v2259 = vmul.f32 %v2253, %v2257
        %v2260 = vlaneseq
        %v2261 = vshrl.u32 %v2260, 7
        %v2262 = vsub.s32 0, %v2261
        %v2263 = vrot.slane %v586, %v2262
        %v2264 = vadd.f32 %v2258, %v2263
        %v2265 = vadd.f32 %v2259, %v2263
        %v2266 = vld [vmem:[%s374] sm:$0xff]
        %v2267 = vld [vmem:[%s374 + $0x8] sm:$0xff]
        %v2268 = vld [vmem:[%s374 + $0x10] sm:$0xff]
        %v2269 = vld [vmem:[%s374 + $0x18] sm:$0xff]
        %v2271 = vlaneseq
        %v2272 = vshrl.u32 %v2271, 7
        %v2273 = vsub.s32 0, %v2272
        %v2274 = vrot.slane %v590, %v2273
        %v2277 = vsel %vm595, %v2264, 0
        %v2280 = vsel %vm595, %v2265, 0
        %2282 = vmatprep.subr.mxu0 0.0
        %2283 = vmatpush1.msra.mxu0 %v2266
        %2284 = vmatprep.subr.mxu0 0.0
        %2285 = vmatpush1.msra.mxu0 %v2267
        %2286 = vmatprep.subr.mxu0 0.0
        %2287 = vmatpush1.msra.mxu0 %v2268
        %2288 = vmatprep.subr.mxu0 0.0
        %2289 = vmatpush1.msra.mxu0 %v2269
        %2290 = vmatprep.subr.mxu0 0.0
        %2291 = vmatpush1.msra.mxu0 0.0
        %2292 = vmatprep.subr.mxu0 0.0
        %2293 = vmatpush1.msra.mxu0 0.0
        %2294 = vmatprep.subr.mxu0 0.0
        %2295 = vmatpush1.msra.mxu0 0.0
        %2296 = vmatprep.subr.mxu0 0.0
        %2297 = vmatpush1.msra.mxu0 0.0
        %2298 = vmatprep.subr.mxu0 0.0
        %2299 = vmatpush1.msra.mxu0 0.0
        %2300 = vmatprep.subr.mxu0 0.0
        %2301 = vmatpush1.msra.mxu0 0.0
        %2302 = vmatprep.subr.mxu0 0.0
        %2303 = vmatpush1.msra.mxu0 0.0
        %2304 = vmatprep.subr.mxu0 0.0
        %2305 = vmatpush1.msra.mxu0 0.0
        %2306 = vmatprep.subr.mxu0 0.0
        %2307 = vmatpush1.msra.mxu0 0.0
        %2308 = vmatprep.subr.mxu0 0.0
        %2309 = vmatpush1.msra.mxu0 0.0
        %2310 = vmatprep.subr.mxu0 0.0
        %2311 = vmatpush1.msra.mxu0 0.0
        %2312 = vmatprep.subr.mxu0 0.0
        %2313 = vmatpush1.msra.mxu0 0.0
        %2314 = vmatprep.subr.mxu0 0.0
        %2315 = vmatpush1.msra.mxu0 0.0
        %2316 = vmatprep.subr.mxu0 0.0
        %2317 = vmatpush1.msra.mxu0 0.0
        %2318 = vmatprep.subr.mxu0 0.0
        %2319 = vmatpush1.msra.mxu0 0.0
        %2320 = vmatprep.subr.mxu0 0.0
        %2321 = vmatpush1.msra.mxu0 0.0
        %2322 = vmatprep.subr.mxu0 0.0
        %2323 = vmatpush1.msra.mxu0 0.0
        %2324 = vmatprep.subr.mxu0 0.0
        %2325 = vmatpush1.msra.mxu0 0.0
        %2326 = vmatprep.subr.mxu0 0.0
        %2327 = vmatpush1.msra.mxu0 0.0
        %2328 = vmatprep.subr.mxu0 0.0
        %2329 = vmatpush1.msra.mxu0 0.0
        %2330 = vmatprep.subr.mxu0 0.0
        %2331 = vmatpush1.msra.mxu0 0.0
        %2332 = vmatprep.subr.mxu0 0.0
        %2333 = vmatpush1.msra.mxu0 0.0
        %2334 = vmatprep.subr.mxu0 0.0
        %2335 = vmatpush1.msra.mxu0 0.0
        %2336 = vmatprep.subr.mxu0 0.0
        %2337 = vmatpush1.msra.mxu0 0.0
        %2338 = vmatprep.subr.mxu0 0.0
        %2339 = vmatpush1.msra.mxu0 0.0
        %2340 = vmatprep.subr.mxu0 0.0
        %2341 = vmatpush1.msra.mxu0 0.0
        %2342 = vmatprep.subr.mxu0 0.0
        %2343 = vmatpush1.msra.mxu0 0.0
        %2344 = vmatprep.subr.mxu0 0.0
        %2345 = vmatpush1.msra.mxu0 0.0
        %2346 = vmatprep.mubr.f32.mxu0 0.0
        %2347 = vmatmul.mubr.f32.gmra.mrb[0].mxu0 %v2277
        %v2348 = vpop.f32.mrb[0].mxu0
        %v2349 = vadd.f32 %v2274, %v2348
        %v2350 = vpop.f32.mrb[0].mxu0
        %2351 = vmatprep.mubr.f32.mxu0 0.0
        %2352 = vmatmul.mubr.f32.gmra.mrb[0].mxu0 %v2280
        %v2353 = vpop.f32.mrb[0].mxu0
        %v2354 = vadd.f32 %v2274, %v2353
        %v2355 = vpop.f32.mrb[0].mxu0
        %2356 = vdwg.mxu0
        %v2357 = vmax.f32 %v2349, 0.0
        %v2358 = vmax.f32 %v2354, 0.0
        %v2359 = vld [vmem:[%s447] sm:$0xff]
        %v2360 = vld [vmem:[%s447 + $0x8] sm:$0xff]
        %v2361 = vld [vmem:[%s447 + $0x10] sm:$0xff]
        %v2362 = vld [vmem:[%s447 + $0x18] sm:$0xff]
        %v2363 = vld [vmem:[%s447 + $0x20] sm:$0xff]
        %v2364 = vld [vmem:[%s447 + $0x28] sm:$0xff]
        %v2365 = vld [vmem:[%s447 + $0x30] sm:$0xff]
        %v2366 = vld [vmem:[%s447 + $0x38] sm:$0xff]
        %v2367 = vlaneseq
        %v2368 = vshrl.u32 %v2367, 7
        %v2369 = vsub.s32 0, %v2368
        %v2370 = vrot.slane %v587, %v2369
        %vm2371 = vcmask 523264
        %v2373 = vsel %vm2371, %v2357, 0
        %v2376 = vsel %vm2371, %v2358, 0
        %2378 = vmatprep.subr.mxu0 0.0
        %2379 = vmatpush1.msra.mxu0 %v2359
        %2380 = vmatprep.subr.mxu0 0.0
        %2381 = vmatpush1.msra.mxu0 %v2360
        %2382 = vmatprep.subr.mxu0 0.0
        %2383 = vmatpush1.msra.mxu0 %v2361
        %2384 = vmatprep.subr.mxu0 0.0
        %2385 = vmatpush1.msra.mxu0 %v2362
        %2386 = vmatprep.subr.mxu0 0.0
        %2387 = vmatpush1.msra.mxu0 %v2363
        %2388 = vmatprep.subr.mxu0 0.0
        %2389 = vmatpush1.msra.mxu0 %v2364
        %2390 = vmatprep.subr.mxu0 0.0
        %2391 = vmatpush1.msra.mxu0 %v2365
        %2392 = vmatprep.subr.mxu0 0.0
        %2393 = vmatpush1.msra.mxu0 %v2366
        %2394 = vmatprep.subr.mxu0 0.0
        %2395 = vmatpush1.msra.mxu0 0.0
        %2396 = vmatprep.subr.mxu0 0.0
        %2397 = vmatpush1.msra.mxu0 0.0
        %2398 = vmatprep.subr.mxu0 0.0
        %2399 = vmatpush1.msra.mxu0 0.0
        %2400 = vmatprep.subr.mxu0 0.0
        %2401 = vmatpush1.msra.mxu0 0.0
        %2402 = vmatprep.subr.mxu0 0.0
        %2403 = vmatpush1.msra.mxu0 0.0
        %2404 = vmatprep.subr.mxu0 0.0
        %2405 = vmatpush1.msra.mxu0 0.0
        %2406 = vmatprep.subr.mxu0 0.0
        %2407 = vmatpush1.msra.mxu0 0.0
        %2408 = vmatprep.subr.mxu0 0.0
        %2409 = vmatpush1.msra.mxu0 0.0
        %2410 = vmatprep.subr.mxu0 0.0
        %2411 = vmatpush1.msra.mxu0 0.0
        %2412 = vmatprep.subr.mxu0 0.0
        %2413 = vmatpush1.msra.mxu0 0.0
        %2414 = vmatprep.subr.mxu0 0.0
        %2415 = vmatpush1.msra.mxu0 0.0
        %2416 = vmatprep.subr.mxu0 0.0
        %2417 = vmatpush1.msra.mxu0 0.0
        %2418 = vmatprep.subr.mxu0 0.0
        %2419 = vmatpush1.msra.mxu0 0.0
        %2420 = vmatprep.subr.mxu0 0.0
        %2421 = vmatpush1.msra.mxu0 0.0
        %2422 = vmatprep.subr.mxu0 0.0
        %2423 = vmatpush1.msra.mxu0 0.0
        %2424 = vmatprep.subr.mxu0 0.0
        %2425 = vmatpush1.msra.mxu0 0.0
        %2426 = vmatprep.subr.mxu0 0.0
        %2427 = vmatpush1.msra.mxu0 0.0
        %2428 = vmatprep.subr.mxu0 0.0
        %2429 = vmatpush1.msra.mxu0 0.0
        %2430 = vmatprep.subr.mxu0 0.0
        %2431 = vmatpush1.msra.mxu0 0.0
        %2432 = vmatprep.subr.mxu0 0.0
        %2433 = vmatpush1.msra.mxu0 0.0
        %2434 = vmatprep.subr.mxu0 0.0
        %2435 = vmatpush1.msra.mxu0 0.0
        %2436 = vmatprep.subr.mxu0 0.0
        %2437 = vmatpush1.msra.mxu0 0.0
        %2438 = vmatprep.subr.mxu0 0.0
        %2439 = vmatpush1.msra.mxu0 0.0
        %2440 = vmatprep.subr.mxu0 0.0
        %2441 = vmatpush1.msra.mxu0 0.0
        %2442 = vmatprep.mubr.f32.mxu0 0.0
        %2443 = vmatmul.mubr.f32.gmra.mrb[0].mxu0 %v2373
        %v2444 = vpop.f32.mrb[0].mxu0
        %v2445 = vadd.f32 %v2370, %v2444
        %v2446 = vpop.f32.mrb[0].mxu0
        %2447 = vmatprep.mubr.f32.mxu0 0.0
        %2448 = vmatmul.mubr.f32.gmra.mrb[0].mxu0 %v2376
        %v2449 = vpop.f32.mrb[0].mxu0
        %v2450 = vadd.f32 %v2370, %v2449
        %v2451 = vpop.f32.mrb[0].mxu0
        %2452 = vdwg.mxu0
        %v2453 = vadd.f32 %v2264, %v2445
        %v2454 = vadd.f32 %v2265, %v2450
        %v2455 = vsel %vm595, %v2453, 0.0
        %2456 = vadd.xlane.f32.xlu0 %v2455
        %v2457 = vpop.xlane.xlu0 %2456
        %v2458 = vsel %vm595, %v2454, 0.0
        %2459 = vadd.xlane.f32.xlu0 %v2458
        %v2460 = vpop.xlane.xlu0 %2459
        %v2461 = vmul.f32 %v2457, %v2233
        %v2462 = vmul.f32 %v2460, %v2233
        %v2463 = vsub.f32 %v2453, %v2461
        %v2464 = vsub.f32 %v2454, %v2462
        %v2465 = vmul.f32 %v2463, %v2463
        %v2466 = vmul.f32 %v2464, %v2464
        %v2467 = vsel %vm595, %v2465, 0.0
        %2468 = vadd.xlane.f32.xlu0 %v2467
        %v2469 = vpop.xlane.xlu0 %2468
        %v2470 = vsel %vm595, %v2466, 0.0
        %2471 = vadd.xlane.f32.xlu0 %v2470
        %v2472 = vpop.xlane.xlu0 %2471
        %v2473 = vmul.f32 %v2469, %v2233
        %v2474 = vmul.f32 %v2472, %v2233
        %v2475 = vadd.f32 %v2473, 1e-05
        %v2476 = vadd.f32 %v2474, 1e-05
        %v2477 = vrsqrt.pop %v2475
        %v2478 = vrsqrt.pop %v2476
        %v2479 = vmul.f32 %v2463, %v2477
        %v2480 = vmul.f32 %v2464, %v2478
        %v2481 = vlaneseq
        %v2482 = vshrl.u32 %v2481, 7
        %v2483 = vsub.s32 0, %v2482
        %v2484 = vrot.slane %v588, %v2483
        %v2485 = vmul.f32 %v2479, %v2484
        %v2486 = vmul.f32 %v2480, %v2484
        %v2487 = vlaneseq
        %v2488 = vshrl.u32 %v2487, 7
        %v2489 = vsub.s32 0, %v2488
        %v2490 = vrot.slane %v589, %v2489
        %v2491 = vadd.f32 %v2485, %v2490
        %v2492 = vadd.f32 %v2486, %v2490
        %2493 = vst.msk [vmem:[#allocation2] sm:$0xff] %vm595, %v2491
        %2494 = vst.msk [vmem:[#allocation2 + $0x8] sm:$0xff] %vm595, %v2492
        %p2495 = scmp.eq.s32.totalorder %s28, 1
        // Predicated region
        $region65: #{tpu_custom_call.1} parent=55 // pred_check
          %p2496 = pneg %p2495
        $region66: #{tpu_custom_call.1} parent=55 // pred_check_branch
          %2498 = sbr.rel (%p2496) target = $region68
        $region67: #{tpu_custom_call.1} parent=55 // pred_region
          %v2499 = vld [vmem:[%s2 + $0x1] sm:$0x1]
          %v2500 = vld [vmem:[%s2 + $0x2] sm:$0x1]
          %v2501 = vsel %vm595, %v2491, 0.0
          %2502 = vadd.xlane.f32.xlu0 %v2501
          %v2503 = vpop.xlane.xlu0 %2502
          %v2504 = vsel %vm595, %v2492, 0.0
          %2505 = vadd.xlane.f32.xlu0 %v2504
          %v2506 = vpop.xlane.xlu0 %2505
          %v2507 = vmul.f32 %v2503, %v2233
          %v2508 = vmul.f32 %v2506, %v2233
          %v2509 = vsub.f32 %v2491, %v2507
          %v2510 = vsub.f32 %v2492, %v2508
          %v2511 = vmul.f32 %v2509, %v2509
          %v2512 = vmul.f32 %v2510, %v2510
          %v2513 = vsel %vm595, %v2511, 0.0
          %2514 = vadd.xlane.f32.xlu0 %v2513
          %v2515 = vpop.xlane.xlu0 %2514
          %v2516 = vsel %vm595, %v2512, 0.0
          %2517 = vadd.xlane.f32.xlu0 %v2516
          %v2518 = vpop.xlane.xlu0 %2517
          %v2519 = vmul.f32 %v2515, %v2233
          %v2520 = vmul.f32 %v2518, %v2233
          %v2521 = vadd.f32 %v2519, 1e-05
          %v2522 = vadd.f32 %v2520, 1e-05
          %v2523 = vrsqrt.pop %v2521
          %v2524 = vrsqrt.pop %v2522
          %v2525 = vmul.f32 %v2509, %v2523
          %v2526 = vmul.f32 %v2510, %v2524
          %v2527 = vlaneseq
          %v2528 = vshrl.u32 %v2527, 7
          %v2529 = vsub.s32 0, %v2528
          %v2530 = vrot.slane %v2499, %v2529
          %v2531 = vmul.f32 %v2525, %v2530
          %v2532 = vmul.f32 %v2526, %v2530
          %v2533 = vlaneseq
          %v2534 = vshrl.u32 %v2533, 7
          %v2535 = vsub.s32 0, %v2534
          %v2536 = vrot.slane %v2500, %v2535
          %v2537 = vadd.f32 %v2531, %v2536
          %v2538 = vadd.f32 %v2532, %v2536
          %v2539 = vld [vmem:[%s3] sm:$0xff]
          %v2540 = vld [vmem:[%s3 + $0x8] sm:$0xff]
          %v2541 = vld [vmem:[%s3 + $0x10] sm:$0xff]
          %v2542 = vld [vmem:[%s3 + $0x18] sm:$0xff]
          %v2543 = vld [vmem:[%s3 + $0x20] sm:$0x1]
          %v2544 = vlaneseq
          %v2545 = vshrl.u32 %v2544, 7
          %v2546 = vsub.s32 0, %v2545
          %v2547 = vrot.slane %v2543, %v2546
          %v2549 = vsel %vm595, %v2537, 0
          %v2552 = vsel %vm595, %v2538, 0
          %2554 = vmatprep.subr.mxu0 0.0
          %2555 = vmatpush1.msra.mxu0 %v2539
          %2556 = vmatprep.subr.mxu0 0.0
          %2557 = vmatpush1.msra.mxu0 %v2540
          %2558 = vmatprep.subr.mxu0 0.0
          %2559 = vmatpush1.msra.mxu0 %v2541
          %2560 = vmatprep.subr.mxu0 0.0
          %2561 = vmatpush1.msra.mxu0 %v2542
          %2562 = vmatprep.subr.mxu0 0.0
          %2563 = vmatpush1.msra.mxu0 0.0
          %2564 = vmatprep.subr.mxu0 0.0
          %2565 = vmatpush1.msra.mxu0 0.0
          %2566 = vmatprep.subr.mxu0 0.0
          %2567 = vmatpush1.msra.mxu0 0.0
          %2568 = vmatprep.subr.mxu0 0.0
          %2569 = vmatpush1.msra.mxu0 0.0
          %2570 = vmatprep.subr.mxu0 0.0
          %2571 = vmatpush1.msra.mxu0 0.0
          %2572 = vmatprep.subr.mxu0 0.0
          %2573 = vmatpush1.msra.mxu0 0.0
          %2574 = vmatprep.subr.mxu0 0.0
          %2575 = vmatpush1.msra.mxu0 0.0
          %2576 = vmatprep.subr.mxu0 0.0
          %2577 = vmatpush1.msra.mxu0 0.0
          %2578 = vmatprep.subr.mxu0 0.0
          %2579 = vmatpush1.msra.mxu0 0.0
          %2580 = vmatprep.subr.mxu0 0.0
          %2581 = vmatpush1.msra.mxu0 0.0
          %2582 = vmatprep.subr.mxu0 0.0
          %2583 = vmatpush1.msra.mxu0 0.0
          %2584 = vmatprep.subr.mxu0 0.0
          %2585 = vmatpush1.msra.mxu0 0.0
          %2586 = vmatprep.subr.mxu0 0.0
          %2587 = vmatpush1.msra.mxu0 0.0
          %2588 = vmatprep.subr.mxu0 0.0
          %2589 = vmatpush1.msra.mxu0 0.0
          %2590 = vmatprep.subr.mxu0 0.0
          %2591 = vmatpush1.msra.mxu0 0.0
          %2592 = vmatprep.subr.mxu0 0.0
          %2593 = vmatpush1.msra.mxu0 0.0
          %2594 = vmatprep.subr.mxu0 0.0
          %2595 = vmatpush1.msra.mxu0 0.0
          %2596 = vmatprep.subr.mxu0 0.0
          %2597 = vmatpush1.msra.mxu0 0.0
          %2598 = vmatprep.subr.mxu0 0.0
          %2599 = vmatpush1.msra.mxu0 0.0
          %2600 = vmatprep.subr.mxu0 0.0
          %2601 = vmatpush1.msra.mxu0 0.0
          %2602 = vmatprep.subr.mxu0 0.0
          %2603 = vmatpush1.msra.mxu0 0.0
          %2604 = vmatprep.subr.mxu0 0.0
          %2605 = vmatpush1.msra.mxu0 0.0
          %2606 = vmatprep.subr.mxu0 0.0
          %2607 = vmatpush1.msra.mxu0 0.0
          %2608 = vmatprep.subr.mxu0 0.0
          %2609 = vmatpush1.msra.mxu0 0.0
          %2610 = vmatprep.subr.mxu0 0.0
          %2611 = vmatpush1.msra.mxu0 0.0
          %2612 = vmatprep.subr.mxu0 0.0
          %2613 = vmatpush1.msra.mxu0 0.0
          %2614 = vmatprep.subr.mxu0 0.0
          %2615 = vmatpush1.msra.mxu0 0.0
          %2616 = vmatprep.subr.mxu0 0.0
          %2617 = vmatpush1.msra.mxu0 0.0
          %2618 = vmatprep.mubr.f32.mxu0 0.0
          %2619 = vmatmul.mubr.f32.gmra.mrb[0].mxu0 %v2549
          %v2620 = vpop.f32.mrb[0].mxu0
          %v2621 = vadd.f32 %v2547, %v2620
          %v2622 = vpop.f32.mrb[0].mxu0
          %2623 = vmatprep.mubr.f32.mxu0 0.0
          %2624 = vmatmul.mubr.f32.gmra.mrb[0].mxu0 %v2552
          %v2625 = vpop.f32.mrb[0].mxu0
          %v2626 = vadd.f32 %v2547, %v2625
          %v2627 = vpop.f32.mrb[0].mxu0
          %2628 = vdwg.mxu0
          %2629 = vst.msk [vmem:[%s460] sm:$0xff] %vm996, %v2621
          %2630 = vst.msk [vmem:[%s460 + $0x8] sm:$0xff] %vm996, %v2626
        $region68: #{tpu_custom_call.1} parent=55 // pred_fallthru
          _
        %s2631 = smul.u32 2, %s27
        %p2632 = scmp.lt.s32.totalorder %s2631, 1
        %s2633 = scalar_select %p2632, %s2631, 1
        %s2634 = smul.addr %s2633, 8
        %s2635 = scalar_lea.vmem %s9, %s2634
        // Predicated region
        $region69: #{tpu_custom_call.1} parent=55 // pred_check
          %p2636 = pneg %p272
        $region70: #{tpu_custom_call.1} parent=55 // pred_check_branch
          %2638 = sbr.rel (%p2636) target = $region72
        $region71: #{tpu_custom_call.1} parent=55 // pred_region
          %s2639 = smul.u32 2, %s27
        $region72: #{tpu_custom_call.1} parent=55 // pred_fallthru
          _
        // Predicated region
        $region73: #{tpu_custom_call.1} parent=55 // pred_check
          %p2640 = pneg %p272
        $region74: #{tpu_custom_call.1} parent=55 // pred_check_branch
          %2642 = sbr.rel (%p2640) target = $region76
        $region75: #{tpu_custom_call.1} parent=55 // pred_region
          %s2643 = smul.u32 2, %s27
          %p2644 = scmp.lt.s32.totalorder %s2643, 1
          %s2645 = scalar_select %p2644, %s2643, 1
          %s2646 = smul.addr %s2645, 8
          %s2647 = scalar_lea.vmem %s9, %s2646
        $region76: #{tpu_custom_call.1} parent=55 // pred_fallthru
          _
      $region56: #{tpu_custom_call.1} parent=5 // pred_fallthru
        _
      %p2648 = scmp.le.s32.totalorder 2, %s18
      // Predicated region
      $region77: #{tpu_custom_call.1} parent=5 // pred_check
        %p2649 = pneg %p2648
      $region78: #{tpu_custom_call.1} parent=5 // pred_check_branch
        %2651 = sbr.rel (%p2649) target = $region80
      $region79: #{tpu_custom_call.1} parent=5 // pred_region
        %s2652 = ssub.s32 %s18, 2
      $region80: #{tpu_custom_call.1} parent=5 // pred_fallthru
        _
    $region6: #{tpu_custom_call.1} parent=1 // loop_footer
      %s22 = sadd.s32 1, %s18
    $region7: #{tpu_custom_call.1} parent=1 // loop_footer_branch
      %17 = sbr.rel target = $region3
    $region8: #{tpu_custom_call.1} parent=1 // loop_exit
      _
    %2653 = vsyncpa [#allocation4], 1
    %s2654 = scalar_lea.sflag [#allocation4], 1
    %2655 = vsyncpa %s2654, 1

</llo_original>
